<compile_context>
chip_gen: v7x
topology: tpu7x:2x2x1
jax: 0.10.0
libtpu: 0.0.40
codegen_flags: <defaults>
</compile_context>

<pallas_src>
import functools

import jax
import jax.numpy as jnp
import numpy as np
from jax.experimental import pallas as pl
from jax.experimental.pallas import tpu as pltpu


def _round_up(v, m):
    return (v + m - 1) // m * m


_VMEM_LIMIT = 48 * 1024 * 1024   # <= v7x's 64 MiB physical VMEM per TensorCore


# ---------------------------------------------------------------------------
# Shared kernel helpers
# ---------------------------------------------------------------------------
def _fill_padded_flat(x_ref, xpad, *, H, W, Wp):
    """Zero the flat padded scratch and copy the (H, W, Cin) tile into it.

    Layout: conceptual rows of width Wp (multiple of 8, >= W+1); input row h is
    stored at flat sublane offset (h+2)*Wp (8-aligned).  The two leading zero
    rows and the zero right-hand columns provide the 'same'-padding halo; the
    trailing rows keep every shifted tap slice in bounds.
    """
    xpad[...] = jnp.zeros_like(xpad)
    for h in range(H):
        xpad[pl.ds((h + 2) * Wp, W), :] = x_ref[0, h, :, :]


def _conv3x3_taps(xpad, w_ref, acc, *, H, Wp):
    """acc <- sum_{i,j} shift(x, i, j) @ w[i, j]  (9 MXU matmuls, f32 acc in VMEM)."""
    first = True
    for i in range(3):
        for j in range(3):
            off = (i + 1) * Wp + (j - 1)            # static sublane offset
            patch = xpad[pl.ds(off, H * Wp), :]     # (H*Wp, Cin) bf16
            part = jnp.dot(patch, w_ref[i, j],
                           preferred_element_type=jnp.float32)
            if first:
                acc[...] = part
                first = False
            else:
                acc[...] += part


def _store_valid(y, o_ref, *, H, W, Wp):
    """Drop the Wp-W garbage columns and store the lane-dense output block."""
    c = o_ref.shape[-1]
    y = y.reshape(H, Wp, c)[:, :W, :].reshape(1, H, W, c)
    o_ref[...] = y.astype(o_ref.dtype)


# ---------------------------------------------------------------------------
# Generic 'same' 3x3 conv (+bias, optional ReLU), grid = (batch, Cout tiles)
# ---------------------------------------------------------------------------
def _conv3x3_kernel(x_ref, w_ref, b_ref, o_ref, xpad, acc, *, H, W, Wp, relu):
    # The flattened/padded input only depends on the batch index; rebuild it on
    # the first Cout tile only (the Cout axis is 'arbitrary' => sequential).
    @pl.when(pl.program_id(1) == 0)
    def _():
        _fill_padded_flat(x_ref, xpad, H=H, W=W, Wp=Wp)

    _conv3x3_taps(xpad, w_ref, acc, H=H, Wp=Wp)
    y = acc[...] + b_ref[...]
    if relu:
        y = jnp.maximum(y, 0.0)
    _store_valid(y, o_ref, H=H, W=W, Wp=Wp)


def conv3x3_same(x_nhwc, w, b, *, relu, cout_tile=256):
    """'same' 3x3 conv, stride 1, NHWC.  bf16 in/out, f32 accumulation."""
    N, H, W, Cin = x_nhwc.shape
    Cout = w.shape[-1]
    tc = min(cout_tile, Cout)
    assert Cout % tc == 0 and tc % 128 == 0
    Wp = _round_up(W + 1, 8)
    kernel = functools.partial(_conv3x3_kernel, H=H, W=W, Wp=Wp, relu=relu)
    return pl.pallas_call(
        kernel,
        out_shape=jax.ShapeDtypeStruct((N, H, W, Cout), jnp.bfloat16),
        grid=(N, Cout // tc),
        in_specs=[
            pl.BlockSpec((1, H, W, Cin), lambda n, c: (n, 0, 0, 0)),
            # block index constant in n -> the weight tile is only re-DMA'd
            # when the Cout tile changes
            pl.BlockSpec((3, 3, Cin, tc), lambda n, c: (0, 0, 0, c)),
            pl.BlockSpec((1, tc), lambda n, c: (0, c)),
        ],
        out_specs=pl.BlockSpec((1, H, W, tc), lambda n, c: (n, 0, 0, c)),
        scratch_shapes=[
            pltpu.VMEM(((H + 4) * Wp, Cin), jnp.bfloat16),   # padded flat input
            pltpu.VMEM((H * Wp, tc), jnp.float32),           # f32 accumulator
        ],
        compiler_params=pltpu.CompilerParams(
            dimension_semantics=("parallel", "arbitrary"),
            vmem_limit_bytes=_VMEM_LIMIT,
        ),
    )(x_nhwc.astype(jnp.bfloat16), w, b.reshape(1, Cout))


# ---------------------------------------------------------------------------
# Fused RPN head: 3x3 conv 512->512 + ReLU + fused (loc|score) 1x1, one call.
# ---------------------------------------------------------------------------
def _rpn_head_kernel(x_ref, w3_ref, b3_ref, w1_ref, b1_ref, o_ref, xpad, acc,
                     *, H, W, Wp):
    _fill_padded_flat(x_ref, xpad, H=H, W=W, Wp=Wp)
    _conv3x3_taps(xpad, w3_ref, acc, H=H, Wp=Wp)
    mid = jnp.maximum(acc[...] + b3_ref[...], 0.0).astype(jnp.bfloat16)  # (H*Wp, 512)
    # fused loc+score 1x1 conv; output channels zero-padded to 128 (lane dense)
    out = jnp.dot(mid, w1_ref[...], preferred_element_type=jnp.float32) + b1_ref[...]
    _store_valid(out, o_ref, H=H, W=W, Wp=Wp)


def rpn_head(f_nhwc, w3, b3, w1, b1):
    N, H, W, Cin = f_nhwc.shape
    Cmid = w3.shape[-1]
    Cout = w1.shape[-1]
    Wp = _round_up(W + 1, 8)
    kernel = functools.partial(_rpn_head_kernel, H=H, W=W, Wp=Wp)
    return pl.pallas_call(
        kernel,
        out_shape=jax.ShapeDtypeStruct((N, H, W, Cout), jnp.float32),
        grid=(N,),
        in_specs=[
            pl.BlockSpec((1, H, W, Cin), lambda n: (n, 0, 0, 0)),
            pl.BlockSpec((3, 3, Cin, Cmid), lambda n: (0, 0, 0, 0)),
            pl.BlockSpec((1, Cmid), lambda n: (0, 0)),
            pl.BlockSpec((Cmid, Cout), lambda n: (0, 0)),
            pl.BlockSpec((1, Cout), lambda n: (0, 0)),
        ],
        out_specs=pl.BlockSpec((1, H, W, Cout), lambda n: (n, 0, 0, 0)),
        scratch_shapes=[
            pltpu.VMEM(((H + 4) * Wp, Cin), jnp.bfloat16),   # padded flat features
            pltpu.VMEM((H * Wp, Cmid), jnp.float32),         # f32 accumulator (mid)
        ],
        compiler_params=pltpu.CompilerParams(
            dimension_semantics=("parallel",),
            vmem_limit_bytes=_VMEM_LIMIT,
        ),
    )(f_nhwc.astype(jnp.bfloat16), w3, b3.reshape(1, Cmid), w1, b1.reshape(1, Cout))


# ---------------------------------------------------------------------------
# RPN module (parameters initialized deterministically in-script, bf16 weights)
# ---------------------------------------------------------------------------
class RPNPallas:
    N_ANCHOR = 9       # standard Faster R-CNN anchor count
    MID = 512          # region_propsal_Network.rpn(512, 512)
    C_FEAT = 512
    C_BB = 128         # synthetic backbone hidden width (lane-dense)

    def __init__(self, key):
        k = jax.random.split(key, 10)
        s = 0.05
        bf16 = jnp.bfloat16
        # synthetic backbone -> 512-channel features, HWIO weights (bf16)
        self.w_bb1 = (s * jax.random.normal(k[0], (3, 3, 3, self.C_BB))).astype(bf16)
        self.b_bb1 = 0.1 * jax.random.normal(k[1], (self.C_BB,), jnp.float32)
        self.w_bb2 = (s * jax.random.normal(k[2], (3, 3, self.C_BB, self.C_FEAT))).astype(bf16)
        self.b_bb2 = 0.1 * jax.random.normal(k[3], (self.C_FEAT,), jnp.float32)
        # rpn head
        self.w_rpn = (s * jax.random.normal(k[4], (3, 3, self.C_FEAT, self.MID))).astype(bf16)
        self.b_rpn = 0.1 * jax.random.normal(k[5], (self.MID,), jnp.float32)
        nloc, nscr = 4 * self.N_ANCHOR, 2 * self.N_ANCHOR
        self.w_loc = (s * jax.random.normal(k[6], (self.MID, nloc))).astype(bf16)
        self.w_score = (s * jax.random.normal(k[7], (self.MID, nscr))).astype(bf16)
        self.b_loc = 0.1 * jax.random.normal(k[8], (nloc,), jnp.float32)
        self.b_score = 0.1 * jax.random.normal(k[9], (nscr,), jnp.float32)
        # fused loc|score 1x1 weight/bias, output channels zero-padded to 128
        self.head_cout = 128
        w_head = jnp.zeros((self.MID, self.head_cout), bf16)
        w_head = w_head.at[:, :nloc].set(self.w_loc)
        w_head = w_head.at[:, nloc:nloc + nscr].set(self.w_score)
        self.w_head = w_head
        b_head = jnp.zeros((self.head_cout,), jnp.float32)
        b_head = b_head.at[:nloc].set(self.b_loc)
        b_head = b_head.at[nloc:nloc + nscr].set(self.b_score)
        self.b_head = b_head

    # RPN.forward: features = generate_model(data_image)
    def forward(self, data_image_nchw):
        x = jnp.transpose(data_image_nchw, (0, 2, 3, 1))            # NCHW -> NHWC
        h = conv3x3_same(x, self.w_bb1, self.b_bb1, relu=True)
        h = conv3x3_same(h, self.w_bb2, self.b_bb2, relu=True)
        return jnp.transpose(h, (0, 3, 1, 2)).astype(jnp.float32)   # NHWC -> NCHW

    # RPN.run_rpn: delta = rpn_net.forward(features, image_size)
    def run_rpn(self, features_nchw):
        f = jnp.transpose(features_nchw, (0, 2, 3, 1))
        out = rpn_head(f, self.w_rpn, self.b_rpn, self.w_head, self.b_head)
        nloc, nscr = 4 * self.N_ANCHOR, 2 * self.N_ANCHOR
        loc = out[..., :nloc]
        score = out[..., nloc:nloc + nscr]
        return (jnp.transpose(loc, (0, 3, 1, 2)),
                jnp.transpose(score, (0, 3, 1, 2)))


# Pure-JAX reference (for correctness check of the Pallas conv path).
def _conv_ref(x, w, b, relu):
    y = jax.lax.conv_general_dilated(
        x, w.astype(jnp.float32), window_strides=(1, 1), padding="SAME",
        dimension_numbers=("NHWC", "HWIO", "NHWC"))
    y = y + b
    return jnp.maximum(y, 0.0) if relu else y


if __name__ == "__main__":
    key = jax.random.PRNGKey(0)
    # data_image in PyTorch NCHW convention, small shape: (2, 3, 16, 16)
    data_image = jax.random.normal(key, (2, 3, 16, 16), jnp.float32)

    model = RPNPallas(jax.random.PRNGKey(1))

    features = model.forward(data_image)          # (2, 512, 16, 16)
    loc, score = model.run_rpn(features)          # (2, 36, 16, 16), (2, 18, 16, 16)
    jax.block_until_ready((features, loc, score))

    # ---- correctness check against a pure-JAX (lax.conv) reference ----
    x_nhwc = jnp.transpose(data_image, (0, 2, 3, 1))
    h_ref = _conv_ref(x_nhwc, model.w_bb1, model.b_bb1, True)
    h_ref = _conv_ref(h_ref, model.w_bb2, model.b_bb2, True)
    feat_ref = jnp.transpose(h_ref, (0, 3, 1, 2))
    np.testing.assert_allclose(np.asarray(features), np.asarray(feat_ref),
                               rtol=5e-2, atol=5e-2)

    f_nhwc = jnp.transpose(features, (0, 2, 3, 1))
    mid_ref = _conv_ref(f_nhwc, model.w_rpn, model.b_rpn, True)
    loc_ref = mid_ref @ model.w_loc.astype(jnp.float32) + model.b_loc
    score_ref = mid_ref @ model.w_score.astype(jnp.float32) + model.b_score
    np.testing.assert_allclose(np.asarray(loc),
                               np.asarray(jnp.transpose(loc_ref, (0, 3, 1, 2))),
                               rtol=5e-2, atol=5e-2)
    np.testing.assert_allclose(np.asarray(score),
                               np.asarray(jnp.transpose(score_ref, (0, 3, 1, 2))),
                               rtol=5e-2, atol=5e-2)

    assert features.shape == (2, 512, 16, 16)
    assert loc.shape == (2, 4 * RPNPallas.N_ANCHOR, 16, 16)
    assert score.shape == (2, 2 * RPNPallas.N_ANCHOR, 16, 16)
    print("KERNEL_OK")
</pallas_src>

<mosaic_0001>
module attributes {stable_mosaic.version = 11 : i64} {
  func.func @_conv3x3_kernel(%arg0: i32, %arg1: i32, %arg2: memref<1x16x16x3xbf16, #tpu.memory_space<vmem>>, %arg3: memref<3x3x3x128xbf16, #tpu.memory_space<vmem>>, %arg4: memref<1x128xf32, #tpu.memory_space<vmem>>, %arg5: memref<1x16x16x128xbf16, #tpu.memory_space<vmem>>, %arg6: memref<480x3xbf16, #tpu.memory_space<vmem>>, %arg7: memref<384x128xf32, #tpu.memory_space<vmem>>) attributes {dimension_semantics = [#tpu.dimension_semantics<parallel>, #tpu.dimension_semantics<arbitrary>], iteration_bounds = array<i64: 2, 1>, scalar_prefetch = 0 : i64, scratch_operands = 2 : i64, tpu.core_type = #tpu.core_type<tc>, window_params = [{transform_indices = @transform_0, window_bounds = array<i64: 1, 16, 16, 3>}, {transform_indices = @transform_1, window_bounds = array<i64: 3, 3, 3, 128>}, {transform_indices = @transform_2, window_bounds = array<i64: 1, 128>}, {transform_indices = @transform_3, window_bounds = array<i64: 1, 16, 16, 128>}]} {
    %c0_i32 = arith.constant 0 : i32
    %0 = arith.cmpi eq, %arg1, %c0_i32 : i32
    %1 = arith.extui %0 : i1 to i32
    %c0_i32_0 = arith.constant 0 : i32
    %2 = arith.cmpi ne, %1, %c0_i32_0 : i32
    scf.if %2 {
      %cst_94 = arith.constant 0.000000e+00 : bf16
      %75 = vector.broadcast %cst_94 : bf16 to vector<480x3xbf16>
      %c0_95 = arith.constant 0 : index
      %c0_96 = arith.constant 0 : index
      %76 = vector.load %arg6[%c0_95, %c0_96] : memref<480x3xbf16, #tpu.memory_space<vmem>>, vector<480x3xbf16>
      tpu.vector_store %arg6[%c0_95, %c0_96], %75 {strides = array<i32>} : memref<480x3xbf16, #tpu.memory_space<vmem>>, vector<480x3xbf16>,
      %c0_97 = arith.constant 0 : index
      %c0_98 = arith.constant 0 : index
      %c0_99 = arith.constant 0 : index
      %c0_100 = arith.constant 0 : index
      %77 = vector.load %arg2[%c0_97, %c0_98, %c0_99, %c0_100] : memref<1x16x16x3xbf16, #tpu.memory_space<vmem>>, vector<1x1x16x3xbf16>
      %78 = vector.shape_cast %77 : vector<1x1x16x3xbf16> to vector<16x3xbf16>
      %c48_101 = arith.constant 48 : index
      %c0_102 = arith.constant 0 : index
      %79 = vector.load %arg6[%c48_101, %c0_102] : memref<480x3xbf16, #tpu.memory_space<vmem>>, vector<16x3xbf16>
      tpu.vector_store %arg6[%c48_101, %c0_102], %78 {strides = array<i32>} : memref<480x3xbf16, #tpu.memory_space<vmem>>, vector<16x3xbf16>,
      %c0_103 = arith.constant 0 : index
      %c1_104 = arith.constant 1 : index
      %c0_105 = arith.constant 0 : index
      %c0_106 = arith.constant 0 : index
      %80 = vector.load %arg2[%c0_103, %c1_104, %c0_105, %c0_106] : memref<1x16x16x3xbf16, #tpu.memory_space<vmem>>, vector<1x1x16x3xbf16>
      %81 = vector.shape_cast %80 : vector<1x1x16x3xbf16> to vector<16x3xbf16>
      %c72_107 = arith.constant 72 : index
      %c0_108 = arith.constant 0 : index
      %82 = vector.load %arg6[%c72_107, %c0_108] : memref<480x3xbf16, #tpu.memory_space<vmem>>, vector<16x3xbf16>
      tpu.vector_store %arg6[%c72_107, %c0_108], %81 {strides = array<i32>} : memref<480x3xbf16, #tpu.memory_space<vmem>>, vector<16x3xbf16>,
      %c0_109 = arith.constant 0 : index
      %c2_110 = arith.constant 2 : index
      %c0_111 = arith.constant 0 : index
      %c0_112 = arith.constant 0 : index
      %83 = vector.load %arg2[%c0_109, %c2_110, %c0_111, %c0_112] : memref<1x16x16x3xbf16, #tpu.memory_space<vmem>>, vector<1x1x16x3xbf16>
      %84 = vector.shape_cast %83 : vector<1x1x16x3xbf16> to vector<16x3xbf16>
      %c96 = arith.constant 96 : index
      %c0_113 = arith.constant 0 : index
      %85 = vector.load %arg6[%c96, %c0_113] : memref<480x3xbf16, #tpu.memory_space<vmem>>, vector<16x3xbf16>
      tpu.vector_store %arg6[%c96, %c0_113], %84 {strides = array<i32>} : memref<480x3xbf16, #tpu.memory_space<vmem>>, vector<16x3xbf16>,
      %c0_114 = arith.constant 0 : index
      %c3 = arith.constant 3 : index
      %c0_115 = arith.constant 0 : index
      %c0_116 = arith.constant 0 : index
      %86 = vector.load %arg2[%c0_114, %c3, %c0_115, %c0_116] : memref<1x16x16x3xbf16, #tpu.memory_space<vmem>>, vector<1x1x16x3xbf16>
      %87 = vector.shape_cast %86 : vector<1x1x16x3xbf16> to vector<16x3xbf16>
      %c120 = arith.constant 120 : index
      %c0_117 = arith.constant 0 : index
      %88 = vector.load %arg6[%c120, %c0_117] : memref<480x3xbf16, #tpu.memory_space<vmem>>, vector<16x3xbf16>
      tpu.vector_store %arg6[%c120, %c0_117], %87 {strides = array<i32>} : memref<480x3xbf16, #tpu.memory_space<vmem>>, vector<16x3xbf16>,
      %c0_118 = arith.constant 0 : index
      %c4 = arith.constant 4 : index
      %c0_119 = arith.constant 0 : index
      %c0_120 = arith.constant 0 : index
      %89 = vector.load %arg2[%c0_118, %c4, %c0_119, %c0_120] : memref<1x16x16x3xbf16, #tpu.memory_space<vmem>>, vector<1x1x16x3xbf16>
      %90 = vector.shape_cast %89 : vector<1x1x16x3xbf16> to vector<16x3xbf16>
      %c144 = arith.constant 144 : index
      %c0_121 = arith.constant 0 : index
      %91 = vector.load %arg6[%c144, %c0_121] : memref<480x3xbf16, #tpu.memory_space<vmem>>, vector<16x3xbf16>
      tpu.vector_store %arg6[%c144, %c0_121], %90 {strides = array<i32>} : memref<480x3xbf16, #tpu.memory_space<vmem>>, vector<16x3xbf16>,
      %c0_122 = arith.constant 0 : index
      %c5 = arith.constant 5 : index
      %c0_123 = arith.constant 0 : index
      %c0_124 = arith.constant 0 : index
      %92 = vector.load %arg2[%c0_122, %c5, %c0_123, %c0_124] : memref<1x16x16x3xbf16, #tpu.memory_space<vmem>>, vector<1x1x16x3xbf16>
      %93 = vector.shape_cast %92 : vector<1x1x16x3xbf16> to vector<16x3xbf16>
      %c168 = arith.constant 168 : index
      %c0_125 = arith.constant 0 : index
      %94 = vector.load %arg6[%c168, %c0_125] : memref<480x3xbf16, #tpu.memory_space<vmem>>, vector<16x3xbf16>
      tpu.vector_store %arg6[%c168, %c0_125], %93 {strides = array<i32>} : memref<480x3xbf16, #tpu.memory_space<vmem>>, vector<16x3xbf16>,
      %c0_126 = arith.constant 0 : index
      %c6 = arith.constant 6 : index
      %c0_127 = arith.constant 0 : index
      %c0_128 = arith.constant 0 : index
      %95 = vector.load %arg2[%c0_126, %c6, %c0_127, %c0_128] : memref<1x16x16x3xbf16, #tpu.memory_space<vmem>>, vector<1x1x16x3xbf16>
      %96 = vector.shape_cast %95 : vector<1x1x16x3xbf16> to vector<16x3xbf16>
      %c192 = arith.constant 192 : index
      %c0_129 = arith.constant 0 : index
      %97 = vector.load %arg6[%c192, %c0_129] : memref<480x3xbf16, #tpu.memory_space<vmem>>, vector<16x3xbf16>
      tpu.vector_store %arg6[%c192, %c0_129], %96 {strides = array<i32>} : memref<480x3xbf16, #tpu.memory_space<vmem>>, vector<16x3xbf16>,
      %c0_130 = arith.constant 0 : index
      %c7 = arith.constant 7 : index
      %c0_131 = arith.constant 0 : index
      %c0_132 = arith.constant 0 : index
      %98 = vector.load %arg2[%c0_130, %c7, %c0_131, %c0_132] : memref<1x16x16x3xbf16, #tpu.memory_space<vmem>>, vector<1x1x16x3xbf16>
      %99 = vector.shape_cast %98 : vector<1x1x16x3xbf16> to vector<16x3xbf16>
      %c216 = arith.constant 216 : index
      %c0_133 = arith.constant 0 : index
      %100 = vector.load %arg6[%c216, %c0_133] : memref<480x3xbf16, #tpu.memory_space<vmem>>, vector<16x3xbf16>
      tpu.vector_store %arg6[%c216, %c0_133], %99 {strides = array<i32>} : memref<480x3xbf16, #tpu.memory_space<vmem>>, vector<16x3xbf16>,
      %c0_134 = arith.constant 0 : index
      %c8 = arith.constant 8 : index
      %c0_135 = arith.constant 0 : index
      %c0_136 = arith.constant 0 : index
      %101 = vector.load %arg2[%c0_134, %c8, %c0_135, %c0_136] : memref<1x16x16x3xbf16, #tpu.memory_space<vmem>>, vector<1x1x16x3xbf16>
      %102 = vector.shape_cast %101 : vector<1x1x16x3xbf16> to vector<16x3xbf16>
      %c240 = arith.constant 240 : index
      %c0_137 = arith.constant 0 : index
      %103 = vector.load %arg6[%c240, %c0_137] : memref<480x3xbf16, #tpu.memory_space<vmem>>, vector<16x3xbf16>
      tpu.vector_store %arg6[%c240, %c0_137], %102 {strides = array<i32>} : memref<480x3xbf16, #tpu.memory_space<vmem>>, vector<16x3xbf16>,
      %c0_138 = arith.constant 0 : index
      %c9 = arith.constant 9 : index
      %c0_139 = arith.constant 0 : index
      %c0_140 = arith.constant 0 : index
      %104 = vector.load %arg2[%c0_138, %c9, %c0_139, %c0_140] : memref<1x16x16x3xbf16, #tpu.memory_space<vmem>>, vector<1x1x16x3xbf16>
      %105 = vector.shape_cast %104 : vector<1x1x16x3xbf16> to vector<16x3xbf16>
      %c264 = arith.constant 264 : index
      %c0_141 = arith.constant 0 : index
      %106 = vector.load %arg6[%c264, %c0_141] : memref<480x3xbf16, #tpu.memory_space<vmem>>, vector<16x3xbf16>
      tpu.vector_store %arg6[%c264, %c0_141], %105 {strides = array<i32>} : memref<480x3xbf16, #tpu.memory_space<vmem>>, vector<16x3xbf16>,
      %c0_142 = arith.constant 0 : index
      %c10 = arith.constant 10 : index
      %c0_143 = arith.constant 0 : index
      %c0_144 = arith.constant 0 : index
      %107 = vector.load %arg2[%c0_142, %c10, %c0_143, %c0_144] : memref<1x16x16x3xbf16, #tpu.memory_space<vmem>>, vector<1x1x16x3xbf16>
      %108 = vector.shape_cast %107 : vector<1x1x16x3xbf16> to vector<16x3xbf16>
      %c288 = arith.constant 288 : index
      %c0_145 = arith.constant 0 : index
      %109 = vector.load %arg6[%c288, %c0_145] : memref<480x3xbf16, #tpu.memory_space<vmem>>, vector<16x3xbf16>
      tpu.vector_store %arg6[%c288, %c0_145], %108 {strides = array<i32>} : memref<480x3xbf16, #tpu.memory_space<vmem>>, vector<16x3xbf16>,
      %c0_146 = arith.constant 0 : index
      %c11 = arith.constant 11 : index
      %c0_147 = arith.constant 0 : index
      %c0_148 = arith.constant 0 : index
      %110 = vector.load %arg2[%c0_146, %c11, %c0_147, %c0_148] : memref<1x16x16x3xbf16, #tpu.memory_space<vmem>>, vector<1x1x16x3xbf16>
      %111 = vector.shape_cast %110 : vector<1x1x16x3xbf16> to vector<16x3xbf16>
      %c312 = arith.constant 312 : index
      %c0_149 = arith.constant 0 : index
      %112 = vector.load %arg6[%c312, %c0_149] : memref<480x3xbf16, #tpu.memory_space<vmem>>, vector<16x3xbf16>
      tpu.vector_store %arg6[%c312, %c0_149], %111 {strides = array<i32>} : memref<480x3xbf16, #tpu.memory_space<vmem>>, vector<16x3xbf16>,
      %c0_150 = arith.constant 0 : index
      %c12 = arith.constant 12 : index
      %c0_151 = arith.constant 0 : index
      %c0_152 = arith.constant 0 : index
      %113 = vector.load %arg2[%c0_150, %c12, %c0_151, %c0_152] : memref<1x16x16x3xbf16, #tpu.memory_space<vmem>>, vector<1x1x16x3xbf16>
      %114 = vector.shape_cast %113 : vector<1x1x16x3xbf16> to vector<16x3xbf16>
      %c336 = arith.constant 336 : index
      %c0_153 = arith.constant 0 : index
      %115 = vector.load %arg6[%c336, %c0_153] : memref<480x3xbf16, #tpu.memory_space<vmem>>, vector<16x3xbf16>
      tpu.vector_store %arg6[%c336, %c0_153], %114 {strides = array<i32>} : memref<480x3xbf16, #tpu.memory_space<vmem>>, vector<16x3xbf16>,
      %c0_154 = arith.constant 0 : index
      %c13 = arith.constant 13 : index
      %c0_155 = arith.constant 0 : index
      %c0_156 = arith.constant 0 : index
      %116 = vector.load %arg2[%c0_154, %c13, %c0_155, %c0_156] : memref<1x16x16x3xbf16, #tpu.memory_space<vmem>>, vector<1x1x16x3xbf16>
      %117 = vector.shape_cast %116 : vector<1x1x16x3xbf16> to vector<16x3xbf16>
      %c360 = arith.constant 360 : index
      %c0_157 = arith.constant 0 : index
      %118 = vector.load %arg6[%c360, %c0_157] : memref<480x3xbf16, #tpu.memory_space<vmem>>, vector<16x3xbf16>
      tpu.vector_store %arg6[%c360, %c0_157], %117 {strides = array<i32>} : memref<480x3xbf16, #tpu.memory_space<vmem>>, vector<16x3xbf16>,
      %c0_158 = arith.constant 0 : index
      %c14 = arith.constant 14 : index
      %c0_159 = arith.constant 0 : index
      %c0_160 = arith.constant 0 : index
      %119 = vector.load %arg2[%c0_158, %c14, %c0_159, %c0_160] : memref<1x16x16x3xbf16, #tpu.memory_space<vmem>>, vector<1x1x16x3xbf16>
      %120 = vector.shape_cast %119 : vector<1x1x16x3xbf16> to vector<16x3xbf16>
      %c384 = arith.constant 384 : index
      %c0_161 = arith.constant 0 : index
      %121 = vector.load %arg6[%c384, %c0_161] : memref<480x3xbf16, #tpu.memory_space<vmem>>, vector<16x3xbf16>
      tpu.vector_store %arg6[%c384, %c0_161], %120 {strides = array<i32>} : memref<480x3xbf16, #tpu.memory_space<vmem>>, vector<16x3xbf16>,
      %c0_162 = arith.constant 0 : index
      %c15 = arith.constant 15 : index
      %c0_163 = arith.constant 0 : index
      %c0_164 = arith.constant 0 : index
      %122 = vector.load %arg2[%c0_162, %c15, %c0_163, %c0_164] : memref<1x16x16x3xbf16, #tpu.memory_space<vmem>>, vector<1x1x16x3xbf16>
      %123 = vector.shape_cast %122 : vector<1x1x16x3xbf16> to vector<16x3xbf16>
      %c408 = arith.constant 408 : index
      %c0_165 = arith.constant 0 : index
      %124 = vector.load %arg6[%c408, %c0_165] : memref<480x3xbf16, #tpu.memory_space<vmem>>, vector<16x3xbf16>
      tpu.vector_store %arg6[%c408, %c0_165], %123 {strides = array<i32>} : memref<480x3xbf16, #tpu.memory_space<vmem>>, vector<16x3xbf16>,
    } else {
    }
    %c23 = arith.constant 23 : index
    %c0 = arith.constant 0 : index
    %3 = vector.load %arg6[%c23, %c0] : memref<480x3xbf16, #tpu.memory_space<vmem>>, vector<384x3xbf16>
    %c0_1 = arith.constant 0 : index
    %c0_2 = arith.constant 0 : index
    %c0_3 = arith.constant 0 : index
    %c0_4 = arith.constant 0 : index
    %4 = vector.load %arg3[%c0_1, %c0_2, %c0_3, %c0_4] : memref<3x3x3x128xbf16, #tpu.memory_space<vmem>>, vector<1x1x3x128xbf16>
    %5 = vector.shape_cast %4 : vector<1x1x3x128xbf16> to vector<3x128xbf16>
    %cst = arith.constant dense<0.000000e+00> : vector<384x128xf32>
    %6 = tpu.matmul %3, %5, %cst {dimension_numbers = #tpu.dot_dimension_numbers<[1], [0], [0], [1], [0, 0, 1, 1], [], []>} : vector<384x3xbf16>, vector<3x128xbf16>, vector<384x128xf32> -> vector<384x128xf32>
    %c0_5 = arith.constant 0 : index
    %c0_6 = arith.constant 0 : index
    %7 = vector.load %arg7[%c0_5, %c0_6] : memref<384x128xf32, #tpu.memory_space<vmem>>, vector<384x128xf32>
    tpu.vector_store %arg7[%c0_5, %c0_6], %6 {strides = array<i32>} : memref<384x128xf32, #tpu.memory_space<vmem>>, vector<384x128xf32>,
    %c24 = arith.constant 24 : index
    %c0_7 = arith.constant 0 : index
    %8 = vector.load %arg6[%c24, %c0_7] : memref<480x3xbf16, #tpu.memory_space<vmem>>, vector<384x3xbf16>
    %c0_8 = arith.constant 0 : index
    %c1 = arith.constant 1 : index
    %c0_9 = arith.constant 0 : index
    %c0_10 = arith.constant 0 : index
    %9 = vector.load %arg3[%c0_8, %c1, %c0_9, %c0_10] : memref<3x3x3x128xbf16, #tpu.memory_space<vmem>>, vector<1x1x3x128xbf16>
    %10 = vector.shape_cast %9 : vector<1x1x3x128xbf16> to vector<3x128xbf16>
    %cst_11 = arith.constant dense<0.000000e+00> : vector<384x128xf32>
    %11 = tpu.matmul %8, %10, %cst_11 {dimension_numbers = #tpu.dot_dimension_numbers<[1], [0], [0], [1], [0, 0, 1, 1], [], []>} : vector<384x3xbf16>, vector<3x128xbf16>, vector<384x128xf32> -> vector<384x128xf32>
    %c0_12 = arith.constant 0 : index
    %c0_13 = arith.constant 0 : index
    %12 = vector.load %arg7[%c0_12, %c0_13] : memref<384x128xf32, #tpu.memory_space<vmem>>, vector<384x128xf32>
    %13 = arith.addf %12, %11 : vector<384x128xf32>
    %c0_14 = arith.constant 0 : index
    %c0_15 = arith.constant 0 : index
    %14 = vector.load %arg7[%c0_14, %c0_15] : memref<384x128xf32, #tpu.memory_space<vmem>>, vector<384x128xf32>
    tpu.vector_store %arg7[%c0_14, %c0_15], %13 {strides = array<i32>} : memref<384x128xf32, #tpu.memory_space<vmem>>, vector<384x128xf32>,
    %c25 = arith.constant 25 : index
    %c0_16 = arith.constant 0 : index
    %15 = vector.load %arg6[%c25, %c0_16] : memref<480x3xbf16, #tpu.memory_space<vmem>>, vector<384x3xbf16>
    %c0_17 = arith.constant 0 : index
    %c2 = arith.constant 2 : index
    %c0_18 = arith.constant 0 : index
    %c0_19 = arith.constant 0 : index
    %16 = vector.load %arg3[%c0_17, %c2, %c0_18, %c0_19] : memref<3x3x3x128xbf16, #tpu.memory_space<vmem>>, vector<1x1x3x128xbf16>
    %17 = vector.shape_cast %16 : vector<1x1x3x128xbf16> to vector<3x128xbf16>
    %cst_20 = arith.constant dense<0.000000e+00> : vector<384x128xf32>
    %18 = tpu.matmul %15, %17, %cst_20 {dimension_numbers = #tpu.dot_dimension_numbers<[1], [0], [0], [1], [0, 0, 1, 1], [], []>} : vector<384x3xbf16>, vector<3x128xbf16>, vector<384x128xf32> -> vector<384x128xf32>
    %c0_21 = arith.constant 0 : index
    %c0_22 = arith.constant 0 : index
    %19 = vector.load %arg7[%c0_21, %c0_22] : memref<384x128xf32, #tpu.memory_space<vmem>>, vector<384x128xf32>
    %20 = arith.addf %19, %18 : vector<384x128xf32>
    %c0_23 = arith.constant 0 : index
    %c0_24 = arith.constant 0 : index
    %21 = vector.load %arg7[%c0_23, %c0_24] : memref<384x128xf32, #tpu.memory_space<vmem>>, vector<384x128xf32>
    tpu.vector_store %arg7[%c0_23, %c0_24], %20 {strides = array<i32>} : memref<384x128xf32, #tpu.memory_space<vmem>>, vector<384x128xf32>,
    %c47 = arith.constant 47 : index
    %c0_25 = arith.constant 0 : index
    %22 = vector.load %arg6[%c47, %c0_25] : memref<480x3xbf16, #tpu.memory_space<vmem>>, vector<384x3xbf16>
    %c1_26 = arith.constant 1 : index
    %c0_27 = arith.constant 0 : index
    %c0_28 = arith.constant 0 : index
    %c0_29 = arith.constant 0 : index
    %23 = vector.load %arg3[%c1_26, %c0_27, %c0_28, %c0_29] : memref<3x3x3x128xbf16, #tpu.memory_space<vmem>>, vector<1x1x3x128xbf16>
    %24 = vector.shape_cast %23 : vector<1x1x3x128xbf16> to vector<3x128xbf16>
    %cst_30 = arith.constant dense<0.000000e+00> : vector<384x128xf32>
    %25 = tpu.matmul %22, %24, %cst_30 {dimension_numbers = #tpu.dot_dimension_numbers<[1], [0], [0], [1], [0, 0, 1, 1], [], []>} : vector<384x3xbf16>, vector<3x128xbf16>, vector<384x128xf32> -> vector<384x128xf32>
    %c0_31 = arith.constant 0 : index
    %c0_32 = arith.constant 0 : index
    %26 = vector.load %arg7[%c0_31, %c0_32] : memref<384x128xf32, #tpu.memory_space<vmem>>, vector<384x128xf32>
    %27 = arith.addf %26, %25 : vector<384x128xf32>
    %c0_33 = arith.constant 0 : index
    %c0_34 = arith.constant 0 : index
    %28 = vector.load %arg7[%c0_33, %c0_34] : memref<384x128xf32, #tpu.memory_space<vmem>>, vector<384x128xf32>
    tpu.vector_store %arg7[%c0_33, %c0_34], %27 {strides = array<i32>} : memref<384x128xf32, #tpu.memory_space<vmem>>, vector<384x128xf32>,
    %c48 = arith.constant 48 : index
    %c0_35 = arith.constant 0 : index
    %29 = vector.load %arg6[%c48, %c0_35] : memref<480x3xbf16, #tpu.memory_space<vmem>>, vector<384x3xbf16>
    %c1_36 = arith.constant 1 : index
    %c1_37 = arith.constant 1 : index
    %c0_38 = arith.constant 0 : index
    %c0_39 = arith.constant 0 : index
    %30 = vector.load %arg3[%c1_36, %c1_37, %c0_38, %c0_39] : memref<3x3x3x128xbf16, #tpu.memory_space<vmem>>, vector<1x1x3x128xbf16>
    %31 = vector.shape_cast %30 : vector<1x1x3x128xbf16> to vector<3x128xbf16>
    %cst_40 = arith.constant dense<0.000000e+00> : vector<384x128xf32>
    %32 = tpu.matmul %29, %31, %cst_40 {dimension_numbers = #tpu.dot_dimension_numbers<[1], [0], [0], [1], [0, 0, 1, 1], [], []>} : vector<384x3xbf16>, vector<3x128xbf16>, vector<384x128xf32> -> vector<384x128xf32>
    %c0_41 = arith.constant 0 : index
    %c0_42 = arith.constant 0 : index
    %33 = vector.load %arg7[%c0_41, %c0_42] : memref<384x128xf32, #tpu.memory_space<vmem>>, vector<384x128xf32>
    %34 = arith.addf %33, %32 : vector<384x128xf32>
    %c0_43 = arith.constant 0 : index
    %c0_44 = arith.constant 0 : index
    %35 = vector.load %arg7[%c0_43, %c0_44] : memref<384x128xf32, #tpu.memory_space<vmem>>, vector<384x128xf32>
    tpu.vector_store %arg7[%c0_43, %c0_44], %34 {strides = array<i32>} : memref<384x128xf32, #tpu.memory_space<vmem>>, vector<384x128xf32>,
    %c49 = arith.constant 49 : index
    %c0_45 = arith.constant 0 : index
    %36 = vector.load %arg6[%c49, %c0_45] : memref<480x3xbf16, #tpu.memory_space<vmem>>, vector<384x3xbf16>
    %c1_46 = arith.constant 1 : index
    %c2_47 = arith.constant 2 : index
    %c0_48 = arith.constant 0 : index
    %c0_49 = arith.constant 0 : index
    %37 = vector.load %arg3[%c1_46, %c2_47, %c0_48, %c0_49] : memref<3x3x3x128xbf16, #tpu.memory_space<vmem>>, vector<1x1x3x128xbf16>
    %38 = vector.shape_cast %37 : vector<1x1x3x128xbf16> to vector<3x128xbf16>
    %cst_50 = arith.constant dense<0.000000e+00> : vector<384x128xf32>
    %39 = tpu.matmul %36, %38, %cst_50 {dimension_numbers = #tpu.dot_dimension_numbers<[1], [0], [0], [1], [0, 0, 1, 1], [], []>} : vector<384x3xbf16>, vector<3x128xbf16>, vector<384x128xf32> -> vector<384x128xf32>
    %c0_51 = arith.constant 0 : index
    %c0_52 = arith.constant 0 : index
    %40 = vector.load %arg7[%c0_51, %c0_52] : memref<384x128xf32, #tpu.memory_space<vmem>>, vector<384x128xf32>
    %41 = arith.addf %40, %39 : vector<384x128xf32>
    %c0_53 = arith.constant 0 : index
    %c0_54 = arith.constant 0 : index
    %42 = vector.load %arg7[%c0_53, %c0_54] : memref<384x128xf32, #tpu.memory_space<vmem>>, vector<384x128xf32>
    tpu.vector_store %arg7[%c0_53, %c0_54], %41 {strides = array<i32>} : memref<384x128xf32, #tpu.memory_space<vmem>>, vector<384x128xf32>,
    %c71 = arith.constant 71 : index
    %c0_55 = arith.constant 0 : index
    %43 = vector.load %arg6[%c71, %c0_55] : memref<480x3xbf16, #tpu.memory_space<vmem>>, vector<384x3xbf16>
    %c2_56 = arith.constant 2 : index
    %c0_57 = arith.constant 0 : index
    %c0_58 = arith.constant 0 : index
    %c0_59 = arith.constant 0 : index
    %44 = vector.load %arg3[%c2_56, %c0_57, %c0_58, %c0_59] : memref<3x3x3x128xbf16, #tpu.memory_space<vmem>>, vector<1x1x3x128xbf16>
    %45 = vector.shape_cast %44 : vector<1x1x3x128xbf16> to vector<3x128xbf16>
    %cst_60 = arith.constant dense<0.000000e+00> : vector<384x128xf32>
    %46 = tpu.matmul %43, %45, %cst_60 {dimension_numbers = #tpu.dot_dimension_numbers<[1], [0], [0], [1], [0, 0, 1, 1], [], []>} : vector<384x3xbf16>, vector<3x128xbf16>, vector<384x128xf32> -> vector<384x128xf32>
    %c0_61 = arith.constant 0 : index
    %c0_62 = arith.constant 0 : index
    %47 = vector.load %arg7[%c0_61, %c0_62] : memref<384x128xf32, #tpu.memory_space<vmem>>, vector<384x128xf32>
    %48 = arith.addf %47, %46 : vector<384x128xf32>
    %c0_63 = arith.constant 0 : index
    %c0_64 = arith.constant 0 : index
    %49 = vector.load %arg7[%c0_63, %c0_64] : memref<384x128xf32, #tpu.memory_space<vmem>>, vector<384x128xf32>
    tpu.vector_store %arg7[%c0_63, %c0_64], %48 {strides = array<i32>} : memref<384x128xf32, #tpu.memory_space<vmem>>, vector<384x128xf32>,
    %c72 = arith.constant 72 : index
    %c0_65 = arith.constant 0 : index
    %50 = vector.load %arg6[%c72, %c0_65] : memref<480x3xbf16, #tpu.memory_space<vmem>>, vector<384x3xbf16>
    %c2_66 = arith.constant 2 : index
    %c1_67 = arith.constant 1 : index
    %c0_68 = arith.constant 0 : index
    %c0_69 = arith.constant 0 : index
    %51 = vector.load %arg3[%c2_66, %c1_67, %c0_68, %c0_69] : memref<3x3x3x128xbf16, #tpu.memory_space<vmem>>, vector<1x1x3x128xbf16>
    %52 = vector.shape_cast %51 : vector<1x1x3x128xbf16> to vector<3x128xbf16>
    %cst_70 = arith.constant dense<0.000000e+00> : vector<384x128xf32>
    %53 = tpu.matmul %50, %52, %cst_70 {dimension_numbers = #tpu.dot_dimension_numbers<[1], [0], [0], [1], [0, 0, 1, 1], [], []>} : vector<384x3xbf16>, vector<3x128xbf16>, vector<384x128xf32> -> vector<384x128xf32>
    %c0_71 = arith.constant 0 : index
    %c0_72 = arith.constant 0 : index
    %54 = vector.load %arg7[%c0_71, %c0_72] : memref<384x128xf32, #tpu.memory_space<vmem>>, vector<384x128xf32>
    %55 = arith.addf %54, %53 : vector<384x128xf32>
    %c0_73 = arith.constant 0 : index
    %c0_74 = arith.constant 0 : index
    %56 = vector.load %arg7[%c0_73, %c0_74] : memref<384x128xf32, #tpu.memory_space<vmem>>, vector<384x128xf32>
    tpu.vector_store %arg7[%c0_73, %c0_74], %55 {strides = array<i32>} : memref<384x128xf32, #tpu.memory_space<vmem>>, vector<384x128xf32>,
    %c73 = arith.constant 73 : index
    %c0_75 = arith.constant 0 : index
    %57 = vector.load %arg6[%c73, %c0_75] : memref<480x3xbf16, #tpu.memory_space<vmem>>, vector<384x3xbf16>
    %c2_76 = arith.constant 2 : index
    %c2_77 = arith.constant 2 : index
    %c0_78 = arith.constant 0 : index
    %c0_79 = arith.constant 0 : index
    %58 = vector.load %arg3[%c2_76, %c2_77, %c0_78, %c0_79] : memref<3x3x3x128xbf16, #tpu.memory_space<vmem>>, vector<1x1x3x128xbf16>
    %59 = vector.shape_cast %58 : vector<1x1x3x128xbf16> to vector<3x128xbf16>
    %cst_80 = arith.constant dense<0.000000e+00> : vector<384x128xf32>
    %60 = tpu.matmul %57, %59, %cst_80 {dimension_numbers = #tpu.dot_dimension_numbers<[1], [0], [0], [1], [0, 0, 1, 1], [], []>} : vector<384x3xbf16>, vector<3x128xbf16>, vector<384x128xf32> -> vector<384x128xf32>
    %c0_81 = arith.constant 0 : index
    %c0_82 = arith.constant 0 : index
    %61 = vector.load %arg7[%c0_81, %c0_82] : memref<384x128xf32, #tpu.memory_space<vmem>>, vector<384x128xf32>
    %62 = arith.addf %61, %60 : vector<384x128xf32>
    %c0_83 = arith.constant 0 : index
    %c0_84 = arith.constant 0 : index
    %63 = vector.load %arg7[%c0_83, %c0_84] : memref<384x128xf32, #tpu.memory_space<vmem>>, vector<384x128xf32>
    tpu.vector_store %arg7[%c0_83, %c0_84], %62 {strides = array<i32>} : memref<384x128xf32, #tpu.memory_space<vmem>>, vector<384x128xf32>,
    %c0_85 = arith.constant 0 : index
    %c0_86 = arith.constant 0 : index
    %64 = vector.load %arg7[%c0_85, %c0_86] : memref<384x128xf32, #tpu.memory_space<vmem>>, vector<384x128xf32>
    %c0_87 = arith.constant 0 : index
    %c0_88 = arith.constant 0 : index
    %65 = vector.load %arg4[%c0_87, %c0_88] : memref<1x128xf32, #tpu.memory_space<vmem>>, vector<1x128xf32>
    %66 = vector.broadcast %65 : vector<1x128xf32> to vector<384x128xf32>
    %67 = arith.addf %64, %66 : vector<384x128xf32>
    %cst_89 = arith.constant 0.000000e+00 : f32
    %68 = vector.broadcast %cst_89 : f32 to vector<384x128xf32>
    %69 = arith.maximumf %67, %68 : vector<384x128xf32>
    %70 = vector.shape_cast %69 : vector<384x128xf32> to vector<16x24x128xf32>
    %71 = vector.extract_strided_slice %70 {offsets = [0, 0, 0], sizes = [16, 16, 128], strides = [1, 1, 1]} : vector<16x24x128xf32> to vector<16x16x128xf32>
    %72 = vector.shape_cast %71 : vector<16x16x128xf32> to vector<1x16x16x128xf32>
    %73 = arith.truncf %72 : vector<1x16x16x128xf32> to vector<1x16x16x128xbf16>
    %c0_90 = arith.constant 0 : index
    %c0_91 = arith.constant 0 : index
    %c0_92 = arith.constant 0 : index
    %c0_93 = arith.constant 0 : index
    %74 = vector.load %arg5[%c0_90, %c0_91, %c0_92, %c0_93] : memref<1x16x16x128xbf16, #tpu.memory_space<vmem>>, vector<1x16x16x128xbf16>
    tpu.vector_store %arg5[%c0_90, %c0_91, %c0_92, %c0_93], %73 {strides = array<i32>} : memref<1x16x16x128xbf16, #tpu.memory_space<vmem>>, vector<1x16x16x128xbf16>,
    return
  }
  func.func @transform_0(%arg0: i32, %arg1: i32) -> (i32, i32, i32, i32) {
    %c0_i32 = arith.constant 0 : i32
    %c0_i32_0 = arith.constant 0 : i32
    %c0_i32_1 = arith.constant 0 : i32
    %c0_i32_2 = arith.constant 0 : i32
    return %arg0, %c0_i32, %c0_i32_0, %c0_i32_1 : i32, i32, i32, i32
  }
  func.func @transform_1(%arg0: i32, %arg1: i32) -> (i32, i32, i32, i32) {
    %c0_i32 = arith.constant 0 : i32
    %c0_i32_0 = arith.constant 0 : i32
    %c0_i32_1 = arith.constant 0 : i32
    %c0_i32_2 = arith.constant 0 : i32
    return %c0_i32, %c0_i32_0, %c0_i32_1, %arg1 : i32, i32, i32, i32
  }
  func.func @transform_2(%arg0: i32, %arg1: i32) -> (i32, i32) {
    %c0_i32 = arith.constant 0 : i32
    %c0_i32_0 = arith.constant 0 : i32
    return %c0_i32, %arg1 : i32, i32
  }
  func.func @transform_3(%arg0: i32, %arg1: i32) -> (i32, i32, i32, i32) {
    %c0_i32 = arith.constant 0 : i32
    %c0_i32_0 = arith.constant 0 : i32
    %c0_i32_1 = arith.constant 0 : i32
    return %arg0, %c0_i32, %c0_i32_0, %arg1 : i32, i32, i32, i32
  }
}

</mosaic_0001>

<llo_original>
// kernel: tpu_custom_call.1
$region0: #{tpu_custom_call.1}
  #allocation0 [shape = 'u32[]', space=smem, size = 0x4, offset = 0x4, fixed_abs, tag = 'smem constant byte address 0x4 - core index']
  #allocation1 [shape = 'u32[144,128]{1,0:T(1,128)}', space=vmem, size = 0x12000, scoped, tag = 'internal scratch']
  #allocation2 [shape = 'bf16[480,3]{1,0:T(16,128)(2,1)}', space=vmem, size = 0x1e000, scoped, tag = 'scratch operand']
  #allocation3 [shape = 'f32[384,128]{1,0:T(8,128)}', space=vmem, size = 0x30000, scoped, tag = 'scratch operand']
  %s0 = inlined_call_operand.vmem [shape: bf16[2,16,16,3], index: 0, kind: input, shape index: {}]
  %s1 = inlined_call_operand.vmem [shape: bf16[3,3,3,128], index: 1, kind: input, shape index: {}]
  %s2 = inlined_call_operand.vmem [shape: f32[1,128], index: 2, kind: input, shape index: {}]
  %s3 = inlined_call_operand.hbm [shape: bf16[2,16,16,128], index: 3, kind: output, shape index: {}]
  %s4 = sld [smem:[#allocation0]]
  $region49: #{tpu_custom_call.1} parent=0
    _
  %s6 = ssub.s32 1, %s4
  %s7 = scalar_select 0, %s6, %s4
  $region1: #{tpu_custom_call.1} parent=0
    #allocation4 [shape = 'u8[131072]{0}', space=vmem, size = 0x20000, scoped, tag = 'output window, operand 0']
    #allocation5 [shape = 's32[2]{0}', space=sflag, size = 0x8, scoped, tag = 'scoped memory for tpu_custom_call.1']
    %8 = vsyncpa [#allocation5], 0
    %s9 = scalar_lea.sflag [#allocation5], 1
    %10 = vsyncpa %s9, 0
    loop: start=0, step=1, limit=4
    $region2: #{tpu_custom_call.1} parent=1 // loop_pre_header
      _
    $region3: #{tpu_custom_call.1} parent=1 // loop_header
      %s12 = sphi 0, %s16
      %p13 = scmp.ge.s32.totalorder %s12, 4
      %s19 = sphi 0, %s31
      %s20 = sphi 0, %s27
      %s21 = sphi 0, %s19
      %s22 = sphi 0, %s20
      %s23 = sphi 0, %s21
      %s24 = sphi 0, %s22
      %s34 = sphi 0, %s36
      %s37 = sphi 0, %s34
      %s38 = sphi 0, %s37
      %s54 = sphi 0, %s38
      %s60 = sphi 0, %s62
      %s63 = sphi 0, %s60
      %s64 = sphi 0, %s63
      %s80 = sphi 0, %s64
      %s86 = sphi 0, %s88
      %s89 = sphi 0, %s86
      %s90 = sphi 0, %s89
      %s106 = sphi 0, %s90
      %s114 = sphi 0, %s116
      %s117 = sphi 0, %s114
      %s118 = sphi 0, %s117
      %s134 = sphi 0, %s118
    $region4: #{tpu_custom_call.1} parent=1 // loop_header_branch
      %15 = sbr.rel (%p13) target = $region8
    $region5: #{tpu_custom_call.1} parent=1 // loop_body
      %s17 = ssub.s32 %s12, 1
      %s18 = ssub.s32 %s12, 2
      %s25 = sadd.s32 1, %s20
      %p26 = scmp.ge.s32.totalorder %s25, 1
      %s27 = scalar_select %p26, 0, %s25
      %s28 = sadd.s32 1, %s19
      %s29 = scalar_select %p26, %s28, %s19
      %p30 = scmp.ge.s32.totalorder %s29, 2
      %s31 = scalar_select %p30, 0, %s29
      %s32 = ssub.s32 %s19, %s31
      %p33 = scmp.eq.s32.totalorder %s32, 0
      %s35 = sadd.s32 %s34, 1
      %s36 = scalar_select %p33, %s34, %s35
      %p39 = pneg %p33
      %p40 = scmp.eq.s32.totalorder %s12, 1
      %p41 = por %p39, %p40
      %p42 = scmp.ne.s32.totalorder %s34, %s37
      %p43 = scmp.eq.s32.totalorder %s12, 0
      %p44 = por %p42, %p43
      %p45 = scmp.ne.s32.totalorder %s34, %s37
      %p46 = scmp.eq.s32.totalorder %s17, 1
      %p47 = por %p45, %p46
      %p48 = scmp.ne.s32.totalorder %s37, %s38
      %p49 = scmp.eq.s32.totalorder %s17, 0
      %p50 = por %p48, %p49
      %p51 = scmp.ne.s32.totalorder %s37, %s38
      %p52 = scmp.eq.s32.totalorder %s18, 1
      %p53 = por %p51, %p52
      %p55 = scmp.ne.s32.totalorder %s38, %s54
      %p56 = scmp.eq.s32.totalorder %s18, 0
      %p57 = por %p55, %p56
      %s58 = ssub.s32 %s20, %s27
      %p59 = scmp.eq.s32.totalorder %s58, 0
      %s61 = sadd.s32 %s60, 1
      %s62 = scalar_select %p59, %s60, %s61
      %p65 = pneg %p59
      %p66 = scmp.eq.s32.totalorder %s12, 1
      %p67 = por %p65, %p66
      %p68 = scmp.ne.s32.totalorder %s60, %s63
      %p69 = scmp.eq.s32.totalorder %s12, 0
      %p70 = por %p68, %p69
      %p71 = scmp.ne.s32.totalorder %s60, %s63
      %p72 = scmp.eq.s32.totalorder %s17, 1
      %p73 = por %p71, %p72
      %p74 = scmp.ne.s32.totalorder %s63, %s64
      %p75 = scmp.eq.s32.totalorder %s17, 0
      %p76 = por %p74, %p75
      %p77 = scmp.ne.s32.totalorder %s63, %s64
      %p78 = scmp.eq.s32.totalorder %s18, 1
      %p79 = por %p77, %p78
      %p81 = scmp.ne.s32.totalorder %s64, %s80
      %p82 = scmp.eq.s32.totalorder %s18, 0
      %p83 = por %p81, %p82
      %s84 = ssub.s32 %s20, %s27
      %p85 = scmp.eq.s32.totalorder %s84, 0
      %s87 = sadd.s32 %s86, 1
      %s88 = scalar_select %p85, %s86, %s87
      %p91 = pneg %p85
      %p92 = scmp.eq.s32.totalorder %s12, 1
      %p93 = por %p91, %p92
      %p94 = scmp.ne.s32.totalorder %s86, %s89
      %p95 = scmp.eq.s32.totalorder %s12, 0
      %p96 = por %p94, %p95
      %p97 = scmp.ne.s32.totalorder %s86, %s89
      %p98 = scmp.eq.s32.totalorder %s17, 1
      %p99 = por %p97, %p98
      %p100 = scmp.ne.s32.totalorder %s89, %s90
      %p101 = scmp.eq.s32.totalorder %s17, 0
      %p102 = por %p100, %p101
      %p103 = scmp.ne.s32.totalorder %s89, %s90
      %p104 = scmp.eq.s32.totalorder %s18, 1
      %p105 = por %p103, %p104
      %p107 = scmp.ne.s32.totalorder %s90, %s106
      %p108 = scmp.eq.s32.totalorder %s18, 0
      %p109 = por %p107, %p108
      %s110 = ssub.s32 %s19, %s31
      %s111 = ssub.s32 %s20, %s27
      %s112 = sor.u32 %s110, %s111
      %p113 = scmp.eq.s32.totalorder %s112, 0
      %s115 = sadd.s32 %s114, 1
      %s116 = scalar_select %p113, %s114, %s115
      %p119 = pneg %p113
      %p120 = scmp.eq.s32.totalorder %s12, 1
      %p121 = por %p119, %p120
      %p122 = scmp.ne.s32.totalorder %s114, %s117
      %p123 = scmp.eq.s32.totalorder %s12, 0
      %p124 = por %p122, %p123
      %p125 = scmp.ne.s32.totalorder %s114, %s117
      %p126 = scmp.eq.s32.totalorder %s17, 1
      %p127 = por %p125, %p126
      %p128 = scmp.ne.s32.totalorder %s117, %s118
      %p129 = scmp.eq.s32.totalorder %s17, 0
      %p130 = por %p128, %p129
      %p131 = scmp.ne.s32.totalorder %s117, %s118
      %p132 = scmp.eq.s32.totalorder %s18, 1
      %p133 = por %p131, %p132
      %p135 = scmp.ne.s32.totalorder %s118, %s134
      %p136 = scmp.eq.s32.totalorder %s18, 0
      %p137 = por %p135, %p136
      %p138 = scmp.le.s32.totalorder 1, %s12
      %p139 = scmp.lt.s32.totalorder %s12, 3
      %p140 = pnand %p138, %p139
      %p141 = pneg %p140
      // Predicated region
      $region9: #{tpu_custom_call.1} parent=5 // pred_check
        _
      $region10: #{tpu_custom_call.1} parent=5 // pred_check_branch
        %143 = sbr.rel (%p140) target = $region12
      $region11: #{tpu_custom_call.1} parent=5 // pred_region
        %s144 = ssub.s32 %s12, 1
        // Predicated region
        $region13: #{tpu_custom_call.1} parent=11 // pred_check
          %p145 = pneg %p76
        $region14: #{tpu_custom_call.1} parent=11 // pred_check_branch
          %147 = sbr.rel (%p145) target = $region16
        $region15: #{tpu_custom_call.1} parent=11 // pred_region
          %p148 = scmp.lt.s32.totalorder %s22, 0
          %s149 = scalar_select %p148, %s22, 0
          %s150 = smul.addr %s149, 2
          %s151 = scalar_lea.vmem %s1, %s150
        $region16: #{tpu_custom_call.1} parent=11 // pred_fallthru
          _
        // Predicated region
        $region17: #{tpu_custom_call.1} parent=11 // pred_check
          %p152 = pneg %p102
        $region18: #{tpu_custom_call.1} parent=11 // pred_check_branch
          %154 = sbr.rel (%p152) target = $region20
        $region19: #{tpu_custom_call.1} parent=11 // pred_region
          %p155 = scmp.lt.s32.totalorder %s22, 0
          %s156 = scalar_select %p155, %s22, 0
          %s157 = scalar_lea.vmem %s2, %s156
        $region20: #{tpu_custom_call.1} parent=11 // pred_fallthru
          _
      $region12: #{tpu_custom_call.1} parent=5 // pred_fallthru
        _
      %p158 = scmp.lt.s32.totalorder %s12, 2
      // Predicated region
      $region21: #{tpu_custom_call.1} parent=5 // pred_check
        %p159 = pneg %p158
      $region22: #{tpu_custom_call.1} parent=5 // pred_check_branch
        %161 = sbr.rel (%p159) target = $region24
      $region23: #{tpu_custom_call.1} parent=5 // pred_region
        // Predicated region
        $region25: #{tpu_custom_call.1} parent=23 // pred_check
          %p162 = pneg %p44
        $region26: #{tpu_custom_call.1} parent=23 // pred_check_branch
          %164 = sbr.rel (%p162) target = $region28
        $region27: #{tpu_custom_call.1} parent=23 // pred_region
          %p165 = scmp.lt.s32.totalorder %s19, 1
          %s166 = scalar_select %p165, %s19, 1
          %s167 = smul.addr %s166, 32
          %s168 = smul.addr %s167, 4
          %s169 = scalar_lea.vmem %s0, %s168
        $region28: #{tpu_custom_call.1} parent=23 // pred_fallthru
          _
      $region24: #{tpu_custom_call.1} parent=5 // pred_fallthru
        _
      %p170 = scmp.le.s32.totalorder 1, %s12
      %p171 = scmp.lt.s32.totalorder %s12, 3
      %p172 = pnand %p170, %p171
      %p173 = pneg %p172
      // Predicated region
      $region29: #{tpu_custom_call.1} parent=5 // pred_check
        _
      $region30: #{tpu_custom_call.1} parent=5 // pred_check_branch
        %175 = sbr.rel (%p172) target = $region32
      $region31: #{tpu_custom_call.1} parent=5 // pred_region
        %s176 = ssub.s32 %s12, 1
        %p177 = scmp.lt.s32.totalorder %s21, 1
        %s178 = scalar_select %p177, %s21, 1
        %s179 = smul.addr %s178, 32
        %s180 = smul.addr %s179, 4
        %s181 = scalar_lea.vmem %s0, %s180
        %p182 = pneg %p50
        %p183 = pneg %p47
        %p184 = scmp.lt.s32.totalorder %s22, 0
        %s185 = scalar_select %p184, %s22, 0
        %s186 = smul.addr %s185, 2
        %s187 = scalar_lea.vmem %s1, %s186
        %p188 = pneg %p76
        %p189 = pneg %p73
        %p190 = scmp.lt.s32.totalorder %s22, 0
        %s191 = scalar_select %p190, %s22, 0
        %s192 = scalar_lea.vmem %s2, %s191
        %p193 = pneg %p102
        %p194 = pneg %p99
        %p195 = pneg %p130
        %p196 = pneg %p127
        %s197 = sand.u32 %s117, 1
        %s198 = scalar_lea.sflag [#allocation5], %s197
        %s199 = sand.u32 %s117, 1
        %s200 = smul.addr %s199, 128
        %s201 = scalar_lea.vmem [#allocation4], %s200
        %p202 = scmp.lt.s32.totalorder %s21, 1
        %s203 = scalar_select %p202, %s21, 1
        %s204 = smul.addr %s203, 32
        %s205 = smul.addr %s204, 4
        %s206 = scalar_lea.vmem %s0, %s205
        %p207 = scmp.lt.s32.totalorder %s22, 0
        %s208 = scalar_select %p207, %s22, 0
        %s209 = smul.addr %s208, 2
        %s210 = scalar_lea.vmem %s1, %s209
        %p211 = scmp.lt.s32.totalorder %s22, 0
        %s212 = scalar_select %p211, %s22, 0
        %s213 = scalar_lea.vmem %s2, %s212
        %p215 = scmp.eq.s32.totalorder %s22, 0
        // Predicated region
        $region33: #{tpu_custom_call.1} parent=31 // pred_check
          %p216 = pneg %p215
        $region34: #{tpu_custom_call.1} parent=31 // pred_check_branch
          %218 = sbr.rel (%p216) target = $region36
        $region35: #{tpu_custom_call.1} parent=31 // pred_region
          %vm219 = vcmask 23552
          %220 = vst.msk [vmem:[#allocation2] sm:$0xff] %vm219, 0
          %221 = vst.msk [vmem:[#allocation2 + $0x8] sm:$0xff] %vm219, 0
          %222 = vst.msk [vmem:[#allocation2 + $0x10] sm:$0xff] %vm219, 0
          %223 = vst.msk [vmem:[#allocation2 + $0x18] sm:$0xff] %vm219, 0
          %224 = vst.msk [vmem:[#allocation2 + $0x20] sm:$0xff] %vm219, 0
          %225 = vst.msk [vmem:[#allocation2 + $0x28] sm:$0xff] %vm219, 0
          %226 = vst.msk [vmem:[#allocation2 + $0x30] sm:$0xff] %vm219, 0
          %227 = vst.msk [vmem:[#allocation2 + $0x38] sm:$0xff] %vm219, 0
          %228 = vst.msk [vmem:[#allocation2 + $0x40] sm:$0xff] %vm219, 0
          %229 = vst.msk [vmem:[#allocation2 + $0x48] sm:$0xff] %vm219, 0
          %230 = vst.msk [vmem:[#allocation2 + $0x50] sm:$0xff] %vm219, 0
          %231 = vst.msk [vmem:[#allocation2 + $0x58] sm:$0xff] %vm219, 0
          %232 = vst.msk [vmem:[#allocation2 + $0x60] sm:$0xff] %vm219, 0
          %233 = vst.msk [vmem:[#allocation2 + $0x68] sm:$0xff] %vm219, 0
          %234 = vst.msk [vmem:[#allocation2 + $0x70] sm:$0xff] %vm219, 0
          %235 = vst.msk [vmem:[#allocation2 + $0x78] sm:$0xff] %vm219, 0
          %236 = vst.msk [vmem:[#allocation2 + $0x80] sm:$0xff] %vm219, 0
          %237 = vst.msk [vmem:[#allocation2 + $0x88] sm:$0xff] %vm219, 0
          %238 = vst.msk [vmem:[#allocation2 + $0x90] sm:$0xff] %vm219, 0
          %239 = vst.msk [vmem:[#allocation2 + $0x98] sm:$0xff] %vm219, 0
          %240 = vst.msk [vmem:[#allocation2 + $0xa0] sm:$0xff] %vm219, 0
          %241 = vst.msk [vmem:[#allocation2 + $0xa8] sm:$0xff] %vm219, 0
          %242 = vst.msk [vmem:[#allocation2 + $0xb0] sm:$0xff] %vm219, 0
          %243 = vst.msk [vmem:[#allocation2 + $0xb8] sm:$0xff] %vm219, 0
          %244 = vst.msk [vmem:[#allocation2 + $0xc0] sm:$0xff] %vm219, 0
          %245 = vst.msk [vmem:[#allocation2 + $0xc8] sm:$0xff] %vm219, 0
          %246 = vst.msk [vmem:[#allocation2 + $0xd0] sm:$0xff] %vm219, 0
          %247 = vst.msk [vmem:[#allocation2 + $0xd8] sm:$0xff] %vm219, 0
          %248 = vst.msk [vmem:[#allocation2 + $0xe0] sm:$0xff] %vm219, 0
          %249 = vst.msk [vmem:[#allocation2 + $0xe8] sm:$0xff] %vm219, 0
          %v250 = vld [vmem:[%s206] sm:$0xf]
          %v251 = vld [vmem:[%s206 + $0x4] sm:$0xf]
          %v254 = vunpack.c.l.b16 %v250
          %v255 = vunpack.c.l.b16 %v251
          %v256 = vpack.c.b16 %v255, %v254
          %258 = vst.msk [vmem:[#allocation2 + $0x18] sm:$0xff] %vm219, %v256
          %s259 = scalar_lea.vmem %s206, 8
          %v260 = vld [vmem:[%s259] sm:$0xf]
          %v261 = vld [vmem:[%s259 + $0x4] sm:$0xf]
          %v264 = vunpack.c.l.b16 %v260
          %v265 = vunpack.c.l.b16 %v261
          %v266 = vpack.c.b16 %v264, %v264
          %v267 = vpack.c.b16 %v265, %v265
          %vm270 = vcmask 23556
          %271 = vst.msk [vmem:[#allocation2 + $0x20] sm:$0xf0] %vm270, %v266
          %vm272 = vcmask 19456
          %273 = vst.msk [vmem:[#allocation2 + $0x28] sm:$0xf] %vm272, %v267
          %s274 = scalar_lea.vmem %s206, 16
          %v275 = vld [vmem:[%s274] sm:$0xf]
          %v276 = vld [vmem:[%s274 + $0x4] sm:$0xf]
          %v279 = vunpack.c.l.b16 %v275
          %v280 = vunpack.c.l.b16 %v276
          %v281 = vpack.c.b16 %v280, %v279
          %283 = vst.msk [vmem:[#allocation2 + $0x30] sm:$0xff] %vm219, %v281
          %s284 = scalar_lea.vmem %s206, 24
          %v285 = vld [vmem:[%s284] sm:$0xf]
          %v286 = vld [vmem:[%s284 + $0x4] sm:$0xf]
          %v289 = vunpack.c.l.b16 %v285
          %v290 = vunpack.c.l.b16 %v286
          %v291 = vpack.c.b16 %v289, %v289
          %v292 = vpack.c.b16 %v290, %v290
          %295 = vst.msk [vmem:[#allocation2 + $0x38] sm:$0xf0] %vm270, %v291
          %296 = vst.msk [vmem:[#allocation2 + $0x40] sm:$0xf] %vm272, %v292
          %s297 = scalar_lea.vmem %s206, 32
          %v298 = vld [vmem:[%s297] sm:$0xf]
          %v299 = vld [vmem:[%s297 + $0x4] sm:$0xf]
          %v302 = vunpack.c.l.b16 %v298
          %v303 = vunpack.c.l.b16 %v299
          %v304 = vpack.c.b16 %v303, %v302
          %306 = vst.msk [vmem:[#allocation2 + $0x48] sm:$0xff] %vm219, %v304
          %s307 = scalar_lea.vmem %s206, 40
          %v308 = vld [vmem:[%s307] sm:$0xf]
          %v309 = vld [vmem:[%s307 + $0x4] sm:$0xf]
          %v312 = vunpack.c.l.b16 %v308
          %v313 = vunpack.c.l.b16 %v309
          %v314 = vpack.c.b16 %v312, %v312
          %v315 = vpack.c.b16 %v313, %v313
          %318 = vst.msk [vmem:[#allocation2 + $0x50] sm:$0xf0] %vm270, %v314
          %319 = vst.msk [vmem:[#allocation2 + $0x58] sm:$0xf] %vm272, %v315
          %s320 = scalar_lea.vmem %s206, 48
          %v321 = vld [vmem:[%s320] sm:$0xf]
          %v322 = vld [vmem:[%s320 + $0x4] sm:$0xf]
          %v325 = vunpack.c.l.b16 %v321
          %v326 = vunpack.c.l.b16 %v322
          %v327 = vpack.c.b16 %v326, %v325
          %329 = vst.msk [vmem:[#allocation2 + $0x60] sm:$0xff] %vm219, %v327
          %s330 = scalar_lea.vmem %s206, 56
          %v331 = vld [vmem:[%s330] sm:$0xf]
          %v332 = vld [vmem:[%s330 + $0x4] sm:$0xf]
          %v335 = vunpack.c.l.b16 %v331
          %v336 = vunpack.c.l.b16 %v332
          %v337 = vpack.c.b16 %v335, %v335
          %v338 = vpack.c.b16 %v336, %v336
          %341 = vst.msk [vmem:[#allocation2 + $0x68] sm:$0xf0] %vm270, %v337
          %342 = vst.msk [vmem:[#allocation2 + $0x70] sm:$0xf] %vm272, %v338
          %s343 = scalar_lea.vmem %s206, 64
          %v344 = vld [vmem:[%s343] sm:$0xf]
          %v345 = vld [vmem:[%s343 + $0x4] sm:$0xf]
          %v348 = vunpack.c.l.b16 %v344
          %v349 = vunpack.c.l.b16 %v345
          %v350 = vpack.c.b16 %v349, %v348
          %352 = vst.msk [vmem:[#allocation2 + $0x78] sm:$0xff] %vm219, %v350
          %s353 = scalar_lea.vmem %s206, 72
          %v354 = vld [vmem:[%s353] sm:$0xf]
          %v355 = vld [vmem:[%s353 + $0x4] sm:$0xf]
          %v358 = vunpack.c.l.b16 %v354
          %v359 = vunpack.c.l.b16 %v355
          %v360 = vpack.c.b16 %v358, %v358
          %v361 = vpack.c.b16 %v359, %v359
          %364 = vst.msk [vmem:[#allocation2 + $0x80] sm:$0xf0] %vm270, %v360
          %365 = vst.msk [vmem:[#allocation2 + $0x88] sm:$0xf] %vm272, %v361
          %s366 = scalar_lea.vmem %s206, 80
          %v367 = vld [vmem:[%s366] sm:$0xf]
          %v368 = vld [vmem:[%s366 + $0x4] sm:$0xf]
          %v371 = vunpack.c.l.b16 %v367
          %v372 = vunpack.c.l.b16 %v368
          %v373 = vpack.c.b16 %v372, %v371
          %375 = vst.msk [vmem:[#allocation2 + $0x90] sm:$0xff] %vm219, %v373
          %s376 = scalar_lea.vmem %s206, 88
          %v377 = vld [vmem:[%s376] sm:$0xf]
          %v378 = vld [vmem:[%s376 + $0x4] sm:$0xf]
          %v381 = vunpack.c.l.b16 %v377
          %v382 = vunpack.c.l.b16 %v378
          %v383 = vpack.c.b16 %v381, %v381
          %v384 = vpack.c.b16 %v382, %v382
          %387 = vst.msk [vmem:[#allocation2 + $0x98] sm:$0xf0] %vm270, %v383
          %388 = vst.msk [vmem:[#allocation2 + $0xa0] sm:$0xf] %vm272, %v384
          %s389 = scalar_lea.vmem %s206, 96
          %v390 = vld [vmem:[%s389] sm:$0xf]
          %v391 = vld [vmem:[%s389 + $0x4] sm:$0xf]
          %v394 = vunpack.c.l.b16 %v390
          %v395 = vunpack.c.l.b16 %v391
          %v396 = vpack.c.b16 %v395, %v394
          %398 = vst.msk [vmem:[#allocation2 + $0xa8] sm:$0xff] %vm219, %v396
          %s399 = scalar_lea.vmem %s206, 104
          %v400 = vld [vmem:[%s399] sm:$0xf]
          %v401 = vld [vmem:[%s399 + $0x4] sm:$0xf]
          %v404 = vunpack.c.l.b16 %v400
          %v405 = vunpack.c.l.b16 %v401
          %v406 = vpack.c.b16 %v404, %v404
          %v407 = vpack.c.b16 %v405, %v405
          %410 = vst.msk [vmem:[#allocation2 + $0xb0] sm:$0xf0] %vm270, %v406
          %411 = vst.msk [vmem:[#allocation2 + $0xb8] sm:$0xf] %vm272, %v407
          %s412 = scalar_lea.vmem %s206, 112
          %v413 = vld [vmem:[%s412] sm:$0xf]
          %v414 = vld [vmem:[%s412 + $0x4] sm:$0xf]
          %v417 = vunpack.c.l.b16 %v413
          %v418 = vunpack.c.l.b16 %v414
          %v419 = vpack.c.b16 %v418, %v417
          %421 = vst.msk [vmem:[#allocation2 + $0xc0] sm:$0xff] %vm219, %v419
          %s422 = scalar_lea.vmem %s206, 120
          %v423 = vld [vmem:[%s422] sm:$0xf]
          %v424 = vld [vmem:[%s422 + $0x4] sm:$0xf]
          %v427 = vunpack.c.l.b16 %v423
          %v428 = vunpack.c.l.b16 %v424
          %v429 = vpack.c.b16 %v427, %v427
          %v430 = vpack.c.b16 %v428, %v428
          %433 = vst.msk [vmem:[#allocation2 + $0xc8] sm:$0xf0] %vm270, %v429
          %434 = vst.msk [vmem:[#allocation2 + $0xd0] sm:$0xf] %vm272, %v430
        $region36: #{tpu_custom_call.1} parent=31 // pred_fallthru
          _
        %v435 = vld [vmem:[#allocation2 + $0x8] sm:$0xf8]
        %v436 = vld [vmem:[#allocation2 + $0x10] sm:$0xff]
        %v437 = vld [vmem:[#allocation2 + $0x18] sm:$0xff]
        %v438 = vld [vmem:[#allocation2 + $0x20] sm:$0xff]
        %v439 = vld [vmem:[#allocation2 + $0x28] sm:$0xff]
        %v440 = vld [vmem:[#allocation2 + $0x30] sm:$0xff]
        %v441 = vld [vmem:[#allocation2 + $0x38] sm:$0xff]
        %v442 = vld [vmem:[#allocation2 + $0x40] sm:$0xff]
        %v443 = vld [vmem:[#allocation2 + $0x48] sm:$0xff]
        %v444 = vld [vmem:[#allocation2 + $0x50] sm:$0xff]
        %v445 = vld [vmem:[#allocation2 + $0x58] sm:$0xff]
        %v446 = vld [vmem:[#allocation2 + $0x60] sm:$0xff]
        %v447 = vld [vmem:[#allocation2 + $0x68] sm:$0xff]
        %v448 = vld [vmem:[#allocation2 + $0x70] sm:$0xff]
        %v449 = vld [vmem:[#allocation2 + $0x78] sm:$0xff]
        %v450 = vld [vmem:[#allocation2 + $0x80] sm:$0xff]
        %v451 = vld [vmem:[#allocation2 + $0x88] sm:$0xff]
        %v452 = vld [vmem:[#allocation2 + $0x90] sm:$0xff]
        %v453 = vld [vmem:[#allocation2 + $0x98] sm:$0xff]
        %v454 = vld [vmem:[#allocation2 + $0xa0] sm:$0xff]
        %v455 = vld [vmem:[#allocation2 + $0xa8] sm:$0xff]
        %v456 = vld [vmem:[#allocation2 + $0xb0] sm:$0xff]
        %v457 = vld [vmem:[#allocation2 + $0xb8] sm:$0xff]
        %v458 = vld [vmem:[#allocation2 + $0xc0] sm:$0xff]
        %v459 = vld [vmem:[#allocation2 + $0xc8] sm:$0xf]
        %v460 = vld [vmem:[%s210] sm:$0x3]
        %vm461 = vsmask.f32 4352
        %v463 = vshrl.u32 %v435, 16
        %v465 = vrot.slane %v463, 3
        %v466 = vshll.u32 %v435, 16
        %v468 = vrot.slane %v466, 4
        %v469 = vor.u32 %v465, %v468
        %v471 = vshrl.u32 %v436, 16
        %v473 = vrot.slane %v471, 3
        %v474 = vshll.u32 %v436, 16
        %v476 = vrot.slane %v474, 4
        %v477 = vor.u32 %v473, %v476
        %v478 = vsel %vm461, %v469, %v477
        %v480 = vshrl.u32 %v437, 16
        %v482 = vrot.slane %v480, 3
        %v483 = vshll.u32 %v437, 16
        %v485 = vrot.slane %v483, 4
        %v486 = vor.u32 %v482, %v485
        %v487 = vsel %vm461, %v477, %v486
        %v489 = vshrl.u32 %v438, 16
        %v491 = vrot.slane %v489, 3
        %v492 = vshll.u32 %v438, 16
        %v494 = vrot.slane %v492, 4
        %v495 = vor.u32 %v491, %v494
        %v496 = vsel %vm461, %v486, %v495
        %v498 = vshrl.u32 %v439, 16
        %v500 = vrot.slane %v498, 3
        %v501 = vshll.u32 %v439, 16
        %v503 = vrot.slane %v501, 4
        %v504 = vor.u32 %v500, %v503
        %v505 = vsel %vm461, %v495, %v504
        %v507 = vshrl.u32 %v440, 16
        %v509 = vrot.slane %v507, 3
        %v510 = vshll.u32 %v440, 16
        %v512 = vrot.slane %v510, 4
        %v513 = vor.u32 %v509, %v512
        %v514 = vsel %vm461, %v504, %v513
        %v516 = vshrl.u32 %v441, 16
        %v518 = vrot.slane %v516, 3
        %v519 = vshll.u32 %v441, 16
        %v521 = vrot.slane %v519, 4
        %v522 = vor.u32 %v518, %v521
        %v523 = vsel %vm461, %v513, %v522
        %v525 = vshrl.u32 %v442, 16
        %v527 = vrot.slane %v525, 3
        %v528 = vshll.u32 %v442, 16
        %v530 = vrot.slane %v528, 4
        %v531 = vor.u32 %v527, %v530
        %v532 = vsel %vm461, %v522, %v531
        %v534 = vshrl.u32 %v443, 16
        %v536 = vrot.slane %v534, 3
        %v537 = vshll.u32 %v443, 16
        %v539 = vrot.slane %v537, 4
        %v540 = vor.u32 %v536, %v539
        %v541 = vsel %vm461, %v531, %v540
        %v543 = vshrl.u32 %v444, 16
        %v545 = vrot.slane %v543, 3
        %v546 = vshll.u32 %v444, 16
        %v548 = vrot.slane %v546, 4
        %v549 = vor.u32 %v545, %v548
        %v550 = vsel %vm461, %v540, %v549
        %v552 = vshrl.u32 %v445, 16
        %v554 = vrot.slane %v552, 3
        %v555 = vshll.u32 %v445, 16
        %v557 = vrot.slane %v555, 4
        %v558 = vor.u32 %v554, %v557
        %v559 = vsel %vm461, %v549, %v558
        %v561 = vshrl.u32 %v446, 16
        %v563 = vrot.slane %v561, 3
        %v564 = vshll.u32 %v446, 16
        %v566 = vrot.slane %v564, 4
        %v567 = vor.u32 %v563, %v566
        %v568 = vsel %vm461, %v558, %v567
        %v570 = vshrl.u32 %v447, 16
        %v572 = vrot.slane %v570, 3
        %v573 = vshll.u32 %v447, 16
        %v575 = vrot.slane %v573, 4
        %v576 = vor.u32 %v572, %v575
        %v577 = vsel %vm461, %v567, %v576
        %v579 = vshrl.u32 %v448, 16
        %v581 = vrot.slane %v579, 3
        %v582 = vshll.u32 %v448, 16
        %v584 = vrot.slane %v582, 4
        %v585 = vor.u32 %v581, %v584
        %v586 = vsel %vm461, %v576, %v585
        %v588 = vshrl.u32 %v449, 16
        %v590 = vrot.slane %v588, 3
        %v591 = vshll.u32 %v449, 16
        %v593 = vrot.slane %v591, 4
        %v594 = vor.u32 %v590, %v593
        %v595 = vsel %vm461, %v585, %v594
        %v597 = vshrl.u32 %v450, 16
        %v599 = vrot.slane %v597, 3
        %v600 = vshll.u32 %v450, 16
        %v602 = vrot.slane %v600, 4
        %v603 = vor.u32 %v599, %v602
        %v604 = vsel %vm461, %v594, %v603
        %v606 = vshrl.u32 %v451, 16
        %v608 = vrot.slane %v606, 3
        %v609 = vshll.u32 %v451, 16
        %v611 = vrot.slane %v609, 4
        %v612 = vor.u32 %v608, %v611
        %v613 = vsel %vm461, %v603, %v612
        %v615 = vshrl.u32 %v452, 16
        %v617 = vrot.slane %v615, 3
        %v618 = vshll.u32 %v452, 16
        %v620 = vrot.slane %v618, 4
        %v621 = vor.u32 %v617, %v620
        %v622 = vsel %vm461, %v612, %v621
        %v624 = vshrl.u32 %v453, 16
        %v626 = vrot.slane %v624, 3
        %v627 = vshll.u32 %v453, 16
        %v629 = vrot.slane %v627, 4
        %v630 = vor.u32 %v626, %v629
        %v631 = vsel %vm461, %v621, %v630
        %v633 = vshrl.u32 %v454, 16
        %v635 = vrot.slane %v633, 3
        %v636 = vshll.u32 %v454, 16
        %v638 = vrot.slane %v636, 4
        %v639 = vor.u32 %v635, %v638
        %v640 = vsel %vm461, %v630, %v639
        %v642 = vshrl.u32 %v455, 16
        %v644 = vrot.slane %v642, 3
        %v645 = vshll.u32 %v455, 16
        %v647 = vrot.slane %v645, 4
        %v648 = vor.u32 %v644, %v647
        %v649 = vsel %vm461, %v639, %v648
        %v651 = vshrl.u32 %v456, 16
        %v653 = vrot.slane %v651, 3
        %v654 = vshll.u32 %v456, 16
        %v656 = vrot.slane %v654, 4
        %v657 = vor.u32 %v653, %v656
        %v658 = vsel %vm461, %v648, %v657
        %v660 = vshrl.u32 %v457, 16
        %v662 = vrot.slane %v660, 3
        %v663 = vshll.u32 %v457, 16
        %v665 = vrot.slane %v663, 4
        %v666 = vor.u32 %v662, %v665
        %v667 = vsel %vm461, %v657, %v666
        %v669 = vshrl.u32 %v458, 16
        %v671 = vrot.slane %v669, 3
        %v672 = vshll.u32 %v458, 16
        %v674 = vrot.slane %v672, 4
        %v675 = vor.u32 %v671, %v674
        %v676 = vsel %vm461, %v666, %v675
        %v678 = vshrl.u32 %v459, 16
        %v680 = vrot.slane %v678, 3
        %v681 = vshll.u32 %v459, 16
        %v683 = vrot.slane %v681, 4
        %v684 = vor.u32 %v680, %v683
        %v685 = vsel %vm461, %v675, %v684
        %vm686 = vcmask 23552
        %v688 = vsel %vm686, %v478, 0
        %v691 = vsel %vm686, %v487, 0
        %v694 = vsel %vm686, %v496, 0
        %v697 = vsel %vm686, %v505, 0
        %v700 = vsel %vm686, %v514, 0
        %v703 = vsel %vm686, %v523, 0
        %v706 = vsel %vm686, %v532, 0
        %v709 = vsel %vm686, %v541, 0
        %v712 = vsel %vm686, %v550, 0
        %v715 = vsel %vm686, %v559, 0
        %v718 = vsel %vm686, %v568, 0
        %v721 = vsel %vm686, %v577, 0
        %v724 = vsel %vm686, %v586, 0
        %v727 = vsel %vm686, %v595, 0
        %v730 = vsel %vm686, %v604, 0
        %v733 = vsel %vm686, %v613, 0
        %v736 = vsel %vm686, %v622, 0
        %v739 = vsel %vm686, %v631, 0
        %v742 = vsel %vm686, %v640, 0
        %v745 = vsel %vm686, %v649, 0
        %v748 = vsel %vm686, %v658, 0
        %v751 = vsel %vm686, %v667, 0
        %v754 = vsel %vm686, %v676, 0
        %v757 = vsel %vm686, %v685, 0
        %vm759 = vcmask 1040384
        %vm760 = vcmask 1041408
        %v761 = vsel %vm759, 4294967295, 65535
        %v762 = vsel %vm760, %v761, 0
        %v764 = vand.u32 %v460, %v762
        %766 = vmatprep.subr.bf16.mxu0 0
        %767 = vmatpush1.bf16.msra.mxu0 %v764
        %768 = vmatprep.subr.bf16.mxu0 0
        %769 = vmatpush1.bf16.msra.mxu0 0
        %770 = vmatprep.subr.bf16.mxu0 0
        %771 = vmatpush1.bf16.msra.mxu0 0
        %772 = vmatprep.subr.bf16.mxu0 0
        %773 = vmatpush1.bf16.msra.mxu0 0
        %774 = vmatprep.subr.bf16.mxu0 0
        %775 = vmatpush1.bf16.msra.mxu0 0
        %776 = vmatprep.subr.bf16.mxu0 0
        %777 = vmatpush1.bf16.msra.mxu0 0
        %778 = vmatprep.subr.bf16.mxu0 0
        %779 = vmatpush1.bf16.msra.mxu0 0
        %780 = vmatprep.subr.bf16.mxu0 0
        %781 = vmatpush1.bf16.msra.mxu0 0
        %782 = vmatprep.subr.bf16.mxu0 0
        %783 = vmatpush1.bf16.msra.mxu0 0
        %784 = vmatprep.subr.bf16.mxu0 0
        %785 = vmatpush1.bf16.msra.mxu0 0
        %786 = vmatprep.subr.bf16.mxu0 0
        %787 = vmatpush1.bf16.msra.mxu0 0
        %788 = vmatprep.subr.bf16.mxu0 0
        %789 = vmatpush1.bf16.msra.mxu0 0
        %790 = vmatprep.subr.bf16.mxu0 0
        %791 = vmatpush1.bf16.msra.mxu0 0
        %792 = vmatprep.subr.bf16.mxu0 0
        %793 = vmatpush1.bf16.msra.mxu0 0
        %794 = vmatprep.subr.bf16.mxu0 0
        %795 = vmatpush1.bf16.msra.mxu0 0
        %796 = vmatprep.subr.bf16.mxu0 0
        %797 = vmatpush1.bf16.msra.mxu0 0
        %798 = vmatprep.mubr.bf16.mxu0 0
        %799 = vmatmul.mubr.bf16.gmra.mrb[0].mxu0 %v688
        %v800 = vpop.f32.mrb[0].mxu0
        %v801 = vadd.f32 0.0, %v800
        %v802 = vpop.f32.mrb[0].mxu0
        %v803 = vpop.f32.mrb[0].mxu0
        %v804 = vadd.f32 0.0, %v803
        %v805 = vpop.f32.mrb[0].mxu0
        %806 = vmatprep.mubr.bf16.mxu0 0
        %807 = vmatmul.mubr.bf16.gmra.mrb[0].mxu0 %v691
        %v808 = vpop.f32.mrb[0].mxu0
        %v809 = vadd.f32 0.0, %v808
        %v810 = vpop.f32.mrb[0].mxu0
        %v811 = vpop.f32.mrb[0].mxu0
        %v812 = vadd.f32 0.0, %v811
        %v813 = vpop.f32.mrb[0].mxu0
        %814 = vmatprep.mubr.bf16.mxu0 0
        %815 = vmatmul.mubr.bf16.gmra.mrb[0].mxu0 %v694
        %v816 = vpop.f32.mrb[0].mxu0
        %v817 = vadd.f32 0.0, %v816
        %v818 = vpop.f32.mrb[0].mxu0
        %v819 = vpop.f32.mrb[0].mxu0
        %v820 = vadd.f32 0.0, %v819
        %v821 = vpop.f32.mrb[0].mxu0
        %822 = vmatprep.mubr.bf16.mxu0 0
        %823 = vmatmul.mubr.bf16.gmra.mrb[0].mxu0 %v697
        %v824 = vpop.f32.mrb[0].mxu0
        %v825 = vadd.f32 0.0, %v824
        %v826 = vpop.f32.mrb[0].mxu0
        %v827 = vpop.f32.mrb[0].mxu0
        %v828 = vadd.f32 0.0, %v827
        %v829 = vpop.f32.mrb[0].mxu0
        %830 = vmatprep.mubr.bf16.mxu0 0
        %831 = vmatmul.mubr.bf16.gmra.mrb[0].mxu0 %v700
        %v832 = vpop.f32.mrb[0].mxu0
        %v833 = vadd.f32 0.0, %v832
        %v834 = vpop.f32.mrb[0].mxu0
        %v835 = vpop.f32.mrb[0].mxu0
        %v836 = vadd.f32 0.0, %v835
        %v837 = vpop.f32.mrb[0].mxu0
        %838 = vmatprep.mubr.bf16.mxu0 0
        %839 = vmatmul.mubr.bf16.gmra.mrb[0].mxu0 %v703
        %v840 = vpop.f32.mrb[0].mxu0
        %v841 = vadd.f32 0.0, %v840
        %v842 = vpop.f32.mrb[0].mxu0
        %v843 = vpop.f32.mrb[0].mxu0
        %v844 = vadd.f32 0.0, %v843
        %v845 = vpop.f32.mrb[0].mxu0
        %846 = vmatprep.mubr.bf16.mxu0 0
        %847 = vmatmul.mubr.bf16.gmra.mrb[0].mxu0 %v706
        %v848 = vpop.f32.mrb[0].mxu0
        %v849 = vadd.f32 0.0, %v848
        %v850 = vpop.f32.mrb[0].mxu0
        %v851 = vpop.f32.mrb[0].mxu0
        %v852 = vadd.f32 0.0, %v851
        %v853 = vpop.f32.mrb[0].mxu0
        %854 = vmatprep.mubr.bf16.mxu0 0
        %855 = vmatmul.mubr.bf16.gmra.mrb[0].mxu0 %v709
        %v856 = vpop.f32.mrb[0].mxu0
        %v857 = vadd.f32 0.0, %v856
        %v858 = vpop.f32.mrb[0].mxu0
        %v859 = vpop.f32.mrb[0].mxu0
        %v860 = vadd.f32 0.0, %v859
        %v861 = vpop.f32.mrb[0].mxu0
        %862 = vmatprep.mubr.bf16.mxu0 0
        %863 = vmatmul.mubr.bf16.gmra.mrb[0].mxu0 %v712
        %v864 = vpop.f32.mrb[0].mxu0
        %v865 = vadd.f32 0.0, %v864
        %v866 = vpop.f32.mrb[0].mxu0
        %v867 = vpop.f32.mrb[0].mxu0
        %v868 = vadd.f32 0.0, %v867
        %v869 = vpop.f32.mrb[0].mxu0
        %870 = vmatprep.mubr.bf16.mxu0 0
        %871 = vmatmul.mubr.bf16.gmra.mrb[0].mxu0 %v715
        %v872 = vpop.f32.mrb[0].mxu0
        %v873 = vadd.f32 0.0, %v872
        %v874 = vpop.f32.mrb[0].mxu0
        %v875 = vpop.f32.mrb[0].mxu0
        %v876 = vadd.f32 0.0, %v875
        %v877 = vpop.f32.mrb[0].mxu0
        %878 = vmatprep.mubr.bf16.mxu0 0
        %879 = vmatmul.mubr.bf16.gmra.mrb[0].mxu0 %v718
        %v880 = vpop.f32.mrb[0].mxu0
        %v881 = vadd.f32 0.0, %v880
        %v882 = vpop.f32.mrb[0].mxu0
        %v883 = vpop.f32.mrb[0].mxu0
        %v884 = vadd.f32 0.0, %v883
        %v885 = vpop.f32.mrb[0].mxu0
        %886 = vmatprep.mubr.bf16.mxu0 0
        %887 = vmatmul.mubr.bf16.gmra.mrb[0].mxu0 %v721
        %v888 = vpop.f32.mrb[0].mxu0
        %v889 = vadd.f32 0.0, %v888
        %v890 = vpop.f32.mrb[0].mxu0
        %v891 = vpop.f32.mrb[0].mxu0
        %v892 = vadd.f32 0.0, %v891
        %v893 = vpop.f32.mrb[0].mxu0
        %894 = vmatprep.mubr.bf16.mxu0 0
        %895 = vmatmul.mubr.bf16.gmra.mrb[0].mxu0 %v724
        %v896 = vpop.f32.mrb[0].mxu0
        %v897 = vadd.f32 0.0, %v896
        %v898 = vpop.f32.mrb[0].mxu0
        %v899 = vpop.f32.mrb[0].mxu0
        %v900 = vadd.f32 0.0, %v899
        %v901 = vpop.f32.mrb[0].mxu0
        %902 = vmatprep.mubr.bf16.mxu0 0
        %903 = vmatmul.mubr.bf16.gmra.mrb[0].mxu0 %v727
        %v904 = vpop.f32.mrb[0].mxu0
        %v905 = vadd.f32 0.0, %v904
        %v906 = vpop.f32.mrb[0].mxu0
        %v907 = vpop.f32.mrb[0].mxu0
        %v908 = vadd.f32 0.0, %v907
        %v909 = vpop.f32.mrb[0].mxu0
        %910 = vmatprep.mubr.bf16.mxu0 0
        %911 = vmatmul.mubr.bf16.gmra.mrb[0].mxu0 %v730
        %v912 = vpop.f32.mrb[0].mxu0
        %v913 = vadd.f32 0.0, %v912
        %v914 = vpop.f32.mrb[0].mxu0
        %v915 = vpop.f32.mrb[0].mxu0
        %v916 = vadd.f32 0.0, %v915
        %v917 = vpop.f32.mrb[0].mxu0
        %918 = vmatprep.mubr.bf16.mxu0 0
        %919 = vmatmul.mubr.bf16.gmra.mrb[0].mxu0 %v733
        %v920 = vpop.f32.mrb[0].mxu0
        %v921 = vadd.f32 0.0, %v920
        %v922 = vpop.f32.mrb[0].mxu0
        %v923 = vpop.f32.mrb[0].mxu0
        %v924 = vadd.f32 0.0, %v923
        %v925 = vpop.f32.mrb[0].mxu0
        %926 = vmatprep.mubr.bf16.mxu0 0
        %927 = vmatmul.mubr.bf16.gmra.mrb[0].mxu0 %v736
        %v928 = vpop.f32.mrb[0].mxu0
        %v929 = vadd.f32 0.0, %v928
        %v930 = vpop.f32.mrb[0].mxu0
        %v931 = vpop.f32.mrb[0].mxu0
        %v932 = vadd.f32 0.0, %v931
        %v933 = vpop.f32.mrb[0].mxu0
        %934 = vmatprep.mubr.bf16.mxu0 0
        %935 = vmatmul.mubr.bf16.gmra.mrb[0].mxu0 %v739
        %v936 = vpop.f32.mrb[0].mxu0
        %v937 = vadd.f32 0.0, %v936
        %v938 = vpop.f32.mrb[0].mxu0
        %v939 = vpop.f32.mrb[0].mxu0
        %v940 = vadd.f32 0.0, %v939
        %v941 = vpop.f32.mrb[0].mxu0
        %942 = vmatprep.mubr.bf16.mxu0 0
        %943 = vmatmul.mubr.bf16.gmra.mrb[0].mxu0 %v742
        %v944 = vpop.f32.mrb[0].mxu0
        %v945 = vadd.f32 0.0, %v944
        %v946 = vpop.f32.mrb[0].mxu0
        %v947 = vpop.f32.mrb[0].mxu0
        %v948 = vadd.f32 0.0, %v947
        %v949 = vpop.f32.mrb[0].mxu0
        %950 = vmatprep.mubr.bf16.mxu0 0
        %951 = vmatmul.mubr.bf16.gmra.mrb[0].mxu0 %v745
        %v952 = vpop.f32.mrb[0].mxu0
        %v953 = vadd.f32 0.0, %v952
        %v954 = vpop.f32.mrb[0].mxu0
        %v955 = vpop.f32.mrb[0].mxu0
        %v956 = vadd.f32 0.0, %v955
        %v957 = vpop.f32.mrb[0].mxu0
        %958 = vmatprep.mubr.bf16.mxu0 0
        %959 = vmatmul.mubr.bf16.gmra.mrb[0].mxu0 %v748
        %v960 = vpop.f32.mrb[0].mxu0
        %v961 = vadd.f32 0.0, %v960
        %v962 = vpop.f32.mrb[0].mxu0
        %v963 = vpop.f32.mrb[0].mxu0
        %v964 = vadd.f32 0.0, %v963
        %v965 = vpop.f32.mrb[0].mxu0
        %966 = vmatprep.mubr.bf16.mxu0 0
        %967 = vmatmul.mubr.bf16.gmra.mrb[0].mxu0 %v751
        %v968 = vpop.f32.mrb[0].mxu0
        %v969 = vadd.f32 0.0, %v968
        %v970 = vpop.f32.mrb[0].mxu0
        %v971 = vpop.f32.mrb[0].mxu0
        %v972 = vadd.f32 0.0, %v971
        %v973 = vpop.f32.mrb[0].mxu0
        %974 = vmatprep.mubr.bf16.mxu0 0
        %975 = vmatmul.mubr.bf16.gmra.mrb[0].mxu0 %v754
        %v976 = vpop.f32.mrb[0].mxu0
        %v977 = vadd.f32 0.0, %v976
        %v978 = vpop.f32.mrb[0].mxu0
        %v979 = vpop.f32.mrb[0].mxu0
        %v980 = vadd.f32 0.0, %v979
        %v981 = vpop.f32.mrb[0].mxu0
        %982 = vmatprep.mubr.bf16.mxu0 0
        %983 = vmatmul.mubr.bf16.gmra.mrb[0].mxu0 %v757
        %v984 = vpop.f32.mrb[0].mxu0
        %v985 = vadd.f32 0.0, %v984
        %v986 = vpop.f32.mrb[0].mxu0
        %v987 = vpop.f32.mrb[0].mxu0
        %v988 = vadd.f32 0.0, %v987
        %v989 = vpop.f32.mrb[0].mxu0
        %990 = vdwg.mxu0
        %991 = vst [vmem:[#allocation3] sm:$0xff] %v801
        %992 = vst [vmem:[#allocation3 + $0x8] sm:$0xff] %v804
        %993 = vst [vmem:[#allocation3 + $0x10] sm:$0xff] %v809
        %994 = vst [vmem:[#allocation3 + $0x18] sm:$0xff] %v812
        %995 = vst [vmem:[#allocation3 + $0x20] sm:$0xff] %v817
        %996 = vst [vmem:[#allocation3 + $0x28] sm:$0xff] %v820
        %997 = vst [vmem:[#allocation3 + $0x30] sm:$0xff] %v825
        %998 = vst [vmem:[#allocation3 + $0x38] sm:$0xff] %v828
        %999 = vst [vmem:[#allocation3 + $0x40] sm:$0xff] %v833
        %1000 = vst [vmem:[#allocation3 + $0x48] sm:$0xff] %v836
        %1001 = vst [vmem:[#allocation3 + $0x50] sm:$0xff] %v841
        %1002 = vst [vmem:[#allocation3 + $0x58] sm:$0xff] %v844
        %1003 = vst [vmem:[#allocation3 + $0x60] sm:$0xff] %v849
        %1004 = vst [vmem:[#allocation3 + $0x68] sm:$0xff] %v852
        %1005 = vst [vmem:[#allocation3 + $0x70] sm:$0xff] %v857
        %1006 = vst [vmem:[#allocation3 + $0x78] sm:$0xff] %v860
        %1007 = vst [vmem:[#allocation3 + $0x80] sm:$0xff] %v865
        %1008 = vst [vmem:[#allocation3 + $0x88] sm:$0xff] %v868
        %1009 = vst [vmem:[#allocation3 + $0x90] sm:$0xff] %v873
        %1010 = vst [vmem:[#allocation3 + $0x98] sm:$0xff] %v876
        %1011 = vst [vmem:[#allocation3 + $0xa0] sm:$0xff] %v881
        %1012 = vst [vmem:[#allocation3 + $0xa8] sm:$0xff] %v884
        %1013 = vst [vmem:[#allocation3 + $0xb0] sm:$0xff] %v889
        %1014 = vst [vmem:[#allocation3 + $0xb8] sm:$0xff] %v892
        %1015 = vst [vmem:[#allocation3 + $0xc0] sm:$0xff] %v897
        %1016 = vst [vmem:[#allocation3 + $0xc8] sm:$0xff] %v900
        %1017 = vst [vmem:[#allocation3 + $0xd0] sm:$0xff] %v905
        %1018 = vst [vmem:[#allocation3 + $0xd8] sm:$0xff] %v908
        %1019 = vst [vmem:[#allocation3 + $0xe0] sm:$0xff] %v913
        %1020 = vst [vmem:[#allocation3 + $0xe8] sm:$0xff] %v916
        %1021 = vst [vmem:[#allocation3 + $0xf0] sm:$0xff] %v921
        %1022 = vst [vmem:[#allocation3 + $0xf8] sm:$0xff] %v924
        %1023 = vst [vmem:[#allocation3 + $0x100] sm:$0xff] %v929
        %1024 = vst [vmem:[#allocation3 + $0x108] sm:$0xff] %v932
        %1025 = vst [vmem:[#allocation3 + $0x110] sm:$0xff] %v937
        %1026 = vst [vmem:[#allocation3 + $0x118] sm:$0xff] %v940
        %1027 = vst [vmem:[#allocation3 + $0x120] sm:$0xff] %v945
        %1028 = vst [vmem:[#allocation3 + $0x128] sm:$0xff] %v948
        %1029 = vst [vmem:[#allocation3 + $0x130] sm:$0xff] %v953
        %1030 = vst [vmem:[#allocation3 + $0x138] sm:$0xff] %v956
        %1031 = vst [vmem:[#allocation3 + $0x140] sm:$0xff] %v961
        %1032 = vst [vmem:[#allocation3 + $0x148] sm:$0xff] %v964
        %1033 = vst [vmem:[#allocation3 + $0x150] sm:$0xff] %v969
        %1034 = vst [vmem:[#allocation3 + $0x158] sm:$0xff] %v972
        %1035 = vst [vmem:[#allocation3 + $0x160] sm:$0xff] %v977
        %1036 = vst [vmem:[#allocation3 + $0x168] sm:$0xff] %v980
        %1037 = vst [vmem:[#allocation3 + $0x170] sm:$0xff] %v985
        %1038 = vst [vmem:[#allocation3 + $0x178] sm:$0xff] %v988
        %v1039 = vld [vmem:[#allocation2 + $0x8] sm:$0xf0]
        %v1040 = vld [vmem:[#allocation2 + $0x10] sm:$0xff]
        %v1041 = vld [vmem:[#allocation2 + $0x18] sm:$0xff]
        %v1042 = vld [vmem:[#allocation2 + $0x20] sm:$0xff]
        %v1043 = vld [vmem:[#allocation2 + $0x28] sm:$0xff]
        %v1044 = vld [vmem:[#allocation2 + $0x30] sm:$0xff]
        %v1045 = vld [vmem:[#allocation2 + $0x38] sm:$0xff]
        %v1046 = vld [vmem:[#allocation2 + $0x40] sm:$0xff]
        %v1047 = vld [vmem:[#allocation2 + $0x48] sm:$0xff]
        %v1048 = vld [vmem:[#allocation2 + $0x50] sm:$0xff]
        %v1049 = vld [vmem:[#allocation2 + $0x58] sm:$0xff]
        %v1050 = vld [vmem:[#allocation2 + $0x60] sm:$0xff]
        %v1051 = vld [vmem:[#allocation2 + $0x68] sm:$0xff]
        %v1052 = vld [vmem:[#allocation2 + $0x70] sm:$0xff]
        %v1053 = vld [vmem:[#allocation2 + $0x78] sm:$0xff]
        %v1054 = vld [vmem:[#allocation2 + $0x80] sm:$0xff]
        %v1055 = vld [vmem:[#allocation2 + $0x88] sm:$0xff]
        %v1056 = vld [vmem:[#allocation2 + $0x90] sm:$0xff]
        %v1057 = vld [vmem:[#allocation2 + $0x98] sm:$0xff]
        %v1058 = vld [vmem:[#allocation2 + $0xa0] sm:$0xff]
        %v1059 = vld [vmem:[#allocation2 + $0xa8] sm:$0xff]
        %v1060 = vld [vmem:[#allocation2 + $0xb0] sm:$0xff]
        %v1061 = vld [vmem:[#allocation2 + $0xb8] sm:$0xff]
        %v1062 = vld [vmem:[#allocation2 + $0xc0] sm:$0xff]
        %v1063 = vld [vmem:[#allocation2 + $0xc8] sm:$0xf]
        %s1064 = scalar_lea.vmem %s210, 2
        %v1065 = vld [vmem:[%s1064] sm:$0x3]
        %vm1091 = vcmask 1043456
        %v1092 = vrot.slane %v1039, 4
        %v1093 = vrot.slane %v1040, 4
        %v1094 = vsel %vm1091, %v1092, %v1093
        %v1095 = vrot.slane %v1041, 4
        %v1096 = vsel %vm1091, %v1093, %v1095
        %v1097 = vrot.slane %v1042, 4
        %v1098 = vsel %vm1091, %v1095, %v1097
        %v1099 = vrot.slane %v1043, 4
        %v1100 = vsel %vm1091, %v1097, %v1099
        %v1101 = vrot.slane %v1044, 4
        %v1102 = vsel %vm1091, %v1099, %v1101
        %v1103 = vrot.slane %v1045, 4
        %v1104 = vsel %vm1091, %v1101, %v1103
        %v1105 = vrot.slane %v1046, 4
        %v1106 = vsel %vm1091, %v1103, %v1105
        %v1107 = vrot.slane %v1047, 4
        %v1108 = vsel %vm1091, %v1105, %v1107
        %v1109 = vrot.slane %v1048, 4
        %v1110 = vsel %vm1091, %v1107, %v1109
        %v1111 = vrot.slane %v1049, 4
        %v1112 = vsel %vm1091, %v1109, %v1111
        %v1113 = vrot.slane %v1050, 4
        %v1114 = vsel %vm1091, %v1111, %v1113
        %v1115 = vrot.slane %v1051, 4
        %v1116 = vsel %vm1091, %v1113, %v1115
        %v1117 = vrot.slane %v1052, 4
        %v1118 = vsel %vm1091, %v1115, %v1117
        %v1119 = vrot.slane %v1053, 4
        %v1120 = vsel %vm1091, %v1117, %v1119
        %v1121 = vrot.slane %v1054, 4
        %v1122 = vsel %vm1091, %v1119, %v1121
        %v1123 = vrot.slane %v1055, 4
        %v1124 = vsel %vm1091, %v1121, %v1123
        %v1125 = vrot.slane %v1056, 4
        %v1126 = vsel %vm1091, %v1123, %v1125
        %v1127 = vrot.slane %v1057, 4
        %v1128 = vsel %vm1091, %v1125, %v1127
        %v1129 = vrot.slane %v1058, 4
        %v1130 = vsel %vm1091, %v1127, %v1129
        %v1131 = vrot.slane %v1059, 4
        %v1132 = vsel %vm1091, %v1129, %v1131
        %v1133 = vrot.slane %v1060, 4
        %v1134 = vsel %vm1091, %v1131, %v1133
        %v1135 = vrot.slane %v1061, 4
        %v1136 = vsel %vm1091, %v1133, %v1135
        %v1137 = vrot.slane %v1062, 4
        %v1138 = vsel %vm1091, %v1135, %v1137
        %v1139 = vrot.slane %v1063, 4
        %v1140 = vsel %vm1091, %v1137, %v1139
        %v1142 = vsel %vm686, %v1094, 0
        %v1145 = vsel %vm686, %v1096, 0
        %v1148 = vsel %vm686, %v1098, 0
        %v1151 = vsel %vm686, %v1100, 0
        %v1154 = vsel %vm686, %v1102, 0
        %v1157 = vsel %vm686, %v1104, 0
        %v1160 = vsel %vm686, %v1106, 0
        %v1163 = vsel %vm686, %v1108, 0
        %v1166 = vsel %vm686, %v1110, 0
        %v1169 = vsel %vm686, %v1112, 0
        %v1172 = vsel %vm686, %v1114, 0
        %v1175 = vsel %vm686, %v1116, 0
        %v1178 = vsel %vm686, %v1118, 0
        %v1181 = vsel %vm686, %v1120, 0
        %v1184 = vsel %vm686, %v1122, 0
        %v1187 = vsel %vm686, %v1124, 0
        %v1190 = vsel %vm686, %v1126, 0
        %v1193 = vsel %vm686, %v1128, 0
        %v1196 = vsel %vm686, %v1130, 0
        %v1199 = vsel %vm686, %v1132, 0
        %v1202 = vsel %vm686, %v1134, 0
        %v1205 = vsel %vm686, %v1136, 0
        %v1208 = vsel %vm686, %v1138, 0
        %v1211 = vsel %vm686, %v1140, 0
        %v1214 = vand.u32 %v1065, %v762
        %1216 = vmatprep.subr.bf16.mxu0 0
        %1217 = vmatpush1.bf16.msra.mxu0 %v1214
        %1218 = vmatprep.subr.bf16.mxu0 0
        %1219 = vmatpush1.bf16.msra.mxu0 0
        %1220 = vmatprep.subr.bf16.mxu0 0
        %1221 = vmatpush1.bf16.msra.mxu0 0
        %1222 = vmatprep.subr.bf16.mxu0 0
        %1223 = vmatpush1.bf16.msra.mxu0 0
        %1224 = vmatprep.subr.bf16.mxu0 0
        %1225 = vmatpush1.bf16.msra.mxu0 0
        %1226 = vmatprep.subr.bf16.mxu0 0
        %1227 = vmatpush1.bf16.msra.mxu0 0
        %1228 = vmatprep.subr.bf16.mxu0 0
        %1229 = vmatpush1.bf16.msra.mxu0 0
        %1230 = vmatprep.subr.bf16.mxu0 0
        %1231 = vmatpush1.bf16.msra.mxu0 0
        %1232 = vmatprep.subr.bf16.mxu0 0
        %1233 = vmatpush1.bf16.msra.mxu0 0
        %1234 = vmatprep.subr.bf16.mxu0 0
        %1235 = vmatpush1.bf16.msra.mxu0 0
        %1236 = vmatprep.subr.bf16.mxu0 0
        %1237 = vmatpush1.bf16.msra.mxu0 0
        %1238 = vmatprep.subr.bf16.mxu0 0
        %1239 = vmatpush1.bf16.msra.mxu0 0
        %1240 = vmatprep.subr.bf16.mxu0 0
        %1241 = vmatpush1.bf16.msra.mxu0 0
        %1242 = vmatprep.subr.bf16.mxu0 0
        %1243 = vmatpush1.bf16.msra.mxu0 0
        %1244 = vmatprep.subr.bf16.mxu0 0
        %1245 = vmatpush1.bf16.msra.mxu0 0
        %1246 = vmatprep.subr.bf16.mxu0 0
        %1247 = vmatpush1.bf16.msra.mxu0 0
        %1248 = vmatprep.mubr.bf16.mxu0 0
        %1249 = vmatmul.mubr.bf16.gmra.mrb[0].mxu0 %v1142
        %v1250 = vpop.f32.mrb[0].mxu0
        %v1251 = vadd.f32 0.0, %v1250
        %v1252 = vpop.f32.mrb[0].mxu0
        %v1253 = vpop.f32.mrb[0].mxu0
        %v1254 = vadd.f32 0.0, %v1253
        %v1255 = vpop.f32.mrb[0].mxu0
        %1256 = vmatprep.mubr.bf16.mxu0 0
        %1257 = vmatmul.mubr.bf16.gmra.mrb[0].mxu0 %v1145
        %v1258 = vpop.f32.mrb[0].mxu0
        %v1259 = vadd.f32 0.0, %v1258
        %v1260 = vpop.f32.mrb[0].mxu0
        %v1261 = vpop.f32.mrb[0].mxu0
        %v1262 = vadd.f32 0.0, %v1261
        %v1263 = vpop.f32.mrb[0].mxu0
        %1264 = vmatprep.mubr.bf16.mxu0 0
        %1265 = vmatmul.mubr.bf16.gmra.mrb[0].mxu0 %v1148
        %v1266 = vpop.f32.mrb[0].mxu0
        %v1267 = vadd.f32 0.0, %v1266
        %v1268 = vpop.f32.mrb[0].mxu0
        %v1269 = vpop.f32.mrb[0].mxu0
        %v1270 = vadd.f32 0.0, %v1269
        %v1271 = vpop.f32.mrb[0].mxu0
        %1272 = vmatprep.mubr.bf16.mxu0 0
        %1273 = vmatmul.mubr.bf16.gmra.mrb[0].mxu0 %v1151
        %v1274 = vpop.f32.mrb[0].mxu0
        %v1275 = vadd.f32 0.0, %v1274
        %v1276 = vpop.f32.mrb[0].mxu0
        %v1277 = vpop.f32.mrb[0].mxu0
        %v1278 = vadd.f32 0.0, %v1277
        %v1279 = vpop.f32.mrb[0].mxu0
        %1280 = vmatprep.mubr.bf16.mxu0 0
        %1281 = vmatmul.mubr.bf16.gmra.mrb[0].mxu0 %v1154
        %v1282 = vpop.f32.mrb[0].mxu0
        %v1283 = vadd.f32 0.0, %v1282
        %v1284 = vpop.f32.mrb[0].mxu0
        %v1285 = vpop.f32.mrb[0].mxu0
        %v1286 = vadd.f32 0.0, %v1285
        %v1287 = vpop.f32.mrb[0].mxu0
        %1288 = vmatprep.mubr.bf16.mxu0 0
        %1289 = vmatmul.mubr.bf16.gmra.mrb[0].mxu0 %v1157
        %v1290 = vpop.f32.mrb[0].mxu0
        %v1291 = vadd.f32 0.0, %v1290
        %v1292 = vpop.f32.mrb[0].mxu0
        %v1293 = vpop.f32.mrb[0].mxu0
        %v1294 = vadd.f32 0.0, %v1293
        %v1295 = vpop.f32.mrb[0].mxu0
        %1296 = vmatprep.mubr.bf16.mxu0 0
        %1297 = vmatmul.mubr.bf16.gmra.mrb[0].mxu0 %v1160
        %v1298 = vpop.f32.mrb[0].mxu0
        %v1299 = vadd.f32 0.0, %v1298
        %v1300 = vpop.f32.mrb[0].mxu0
        %v1301 = vpop.f32.mrb[0].mxu0
        %v1302 = vadd.f32 0.0, %v1301
        %v1303 = vpop.f32.mrb[0].mxu0
        %1304 = vmatprep.mubr.bf16.mxu0 0
        %1305 = vmatmul.mubr.bf16.gmra.mrb[0].mxu0 %v1163
        %v1306 = vpop.f32.mrb[0].mxu0
        %v1307 = vadd.f32 0.0, %v1306
        %v1308 = vpop.f32.mrb[0].mxu0
        %v1309 = vpop.f32.mrb[0].mxu0
        %v1310 = vadd.f32 0.0, %v1309
        %v1311 = vpop.f32.mrb[0].mxu0
        %1312 = vmatprep.mubr.bf16.mxu0 0
        %1313 = vmatmul.mubr.bf16.gmra.mrb[0].mxu0 %v1166
        %v1314 = vpop.f32.mrb[0].mxu0
        %v1315 = vadd.f32 0.0, %v1314
        %v1316 = vpop.f32.mrb[0].mxu0
        %v1317 = vpop.f32.mrb[0].mxu0
        %v1318 = vadd.f32 0.0, %v1317
        %v1319 = vpop.f32.mrb[0].mxu0
        %1320 = vmatprep.mubr.bf16.mxu0 0
        %1321 = vmatmul.mubr.bf16.gmra.mrb[0].mxu0 %v1169
        %v1322 = vpop.f32.mrb[0].mxu0
        %v1323 = vadd.f32 0.0, %v1322
        %v1324 = vpop.f32.mrb[0].mxu0
        %v1325 = vpop.f32.mrb[0].mxu0
        %v1326 = vadd.f32 0.0, %v1325
        %v1327 = vpop.f32.mrb[0].mxu0
        %1328 = vmatprep.mubr.bf16.mxu0 0
        %1329 = vmatmul.mubr.bf16.gmra.mrb[0].mxu0 %v1172
        %v1330 = vpop.f32.mrb[0].mxu0
        %v1331 = vadd.f32 0.0, %v1330
        %v1332 = vpop.f32.mrb[0].mxu0
        %v1333 = vpop.f32.mrb[0].mxu0
        %v1334 = vadd.f32 0.0, %v1333
        %v1335 = vpop.f32.mrb[0].mxu0
        %1336 = vmatprep.mubr.bf16.mxu0 0
        %1337 = vmatmul.mubr.bf16.gmra.mrb[0].mxu0 %v1175
        %v1338 = vpop.f32.mrb[0].mxu0
        %v1339 = vadd.f32 0.0, %v1338
        %v1340 = vpop.f32.mrb[0].mxu0
        %v1341 = vpop.f32.mrb[0].mxu0
        %v1342 = vadd.f32 0.0, %v1341
        %v1343 = vpop.f32.mrb[0].mxu0
        %1344 = vmatprep.mubr.bf16.mxu0 0
        %1345 = vmatmul.mubr.bf16.gmra.mrb[0].mxu0 %v1178
        %v1346 = vpop.f32.mrb[0].mxu0
        %v1347 = vadd.f32 0.0, %v1346
        %v1348 = vpop.f32.mrb[0].mxu0
        %v1349 = vpop.f32.mrb[0].mxu0
        %v1350 = vadd.f32 0.0, %v1349
        %v1351 = vpop.f32.mrb[0].mxu0
        %1352 = vmatprep.mubr.bf16.mxu0 0
        %1353 = vmatmul.mubr.bf16.gmra.mrb[0].mxu0 %v1181
        %v1354 = vpop.f32.mrb[0].mxu0
        %v1355 = vadd.f32 0.0, %v1354
        %v1356 = vpop.f32.mrb[0].mxu0
        %v1357 = vpop.f32.mrb[0].mxu0
        %v1358 = vadd.f32 0.0, %v1357
        %v1359 = vpop.f32.mrb[0].mxu0
        %1360 = vmatprep.mubr.bf16.mxu0 0
        %1361 = vmatmul.mubr.bf16.gmra.mrb[0].mxu0 %v1184
        %v1362 = vpop.f32.mrb[0].mxu0
        %v1363 = vadd.f32 0.0, %v1362
        %v1364 = vpop.f32.mrb[0].mxu0
        %v1365 = vpop.f32.mrb[0].mxu0
        %v1366 = vadd.f32 0.0, %v1365
        %v1367 = vpop.f32.mrb[0].mxu0
        %1368 = vmatprep.mubr.bf16.mxu0 0
        %1369 = vmatmul.mubr.bf16.gmra.mrb[0].mxu0 %v1187
        %v1370 = vpop.f32.mrb[0].mxu0
        %v1371 = vadd.f32 0.0, %v1370
        %v1372 = vpop.f32.mrb[0].mxu0
        %v1373 = vpop.f32.mrb[0].mxu0
        %v1374 = vadd.f32 0.0, %v1373
        %v1375 = vpop.f32.mrb[0].mxu0
        %1376 = vmatprep.mubr.bf16.mxu0 0
        %1377 = vmatmul.mubr.bf16.gmra.mrb[0].mxu0 %v1190
        %v1378 = vpop.f32.mrb[0].mxu0
        %v1379 = vadd.f32 0.0, %v1378
        %v1380 = vpop.f32.mrb[0].mxu0
        %v1381 = vpop.f32.mrb[0].mxu0
        %v1382 = vadd.f32 0.0, %v1381
        %v1383 = vpop.f32.mrb[0].mxu0
        %1384 = vmatprep.mubr.bf16.mxu0 0
        %1385 = vmatmul.mubr.bf16.gmra.mrb[0].mxu0 %v1193
        %v1386 = vpop.f32.mrb[0].mxu0
        %v1387 = vadd.f32 0.0, %v1386
        %v1388 = vpop.f32.mrb[0].mxu0
        %v1389 = vpop.f32.mrb[0].mxu0
        %v1390 = vadd.f32 0.0, %v1389
        %v1391 = vpop.f32.mrb[0].mxu0
        %1392 = vmatprep.mubr.bf16.mxu0 0
        %1393 = vmatmul.mubr.bf16.gmra.mrb[0].mxu0 %v1196
        %v1394 = vpop.f32.mrb[0].mxu0
        %v1395 = vadd.f32 0.0, %v1394
        %v1396 = vpop.f32.mrb[0].mxu0
        %v1397 = vpop.f32.mrb[0].mxu0
        %v1398 = vadd.f32 0.0, %v1397
        %v1399 = vpop.f32.mrb[0].mxu0
        %1400 = vmatprep.mubr.bf16.mxu0 0
        %1401 = vmatmul.mubr.bf16.gmra.mrb[0].mxu0 %v1199
        %v1402 = vpop.f32.mrb[0].mxu0
        %v1403 = vadd.f32 0.0, %v1402
        %v1404 = vpop.f32.mrb[0].mxu0
        %v1405 = vpop.f32.mrb[0].mxu0
        %v1406 = vadd.f32 0.0, %v1405
        %v1407 = vpop.f32.mrb[0].mxu0
        %1408 = vmatprep.mubr.bf16.mxu0 0
        %1409 = vmatmul.mubr.bf16.gmra.mrb[0].mxu0 %v1202
        %v1410 = vpop.f32.mrb[0].mxu0
        %v1411 = vadd.f32 0.0, %v1410
        %v1412 = vpop.f32.mrb[0].mxu0
        %v1413 = vpop.f32.mrb[0].mxu0
        %v1414 = vadd.f32 0.0, %v1413
        %v1415 = vpop.f32.mrb[0].mxu0
        %1416 = vmatprep.mubr.bf16.mxu0 0
        %1417 = vmatmul.mubr.bf16.gmra.mrb[0].mxu0 %v1205
        %v1418 = vpop.f32.mrb[0].mxu0
        %v1419 = vadd.f32 0.0, %v1418
        %v1420 = vpop.f32.mrb[0].mxu0
        %v1421 = vpop.f32.mrb[0].mxu0
        %v1422 = vadd.f32 0.0, %v1421
        %v1423 = vpop.f32.mrb[0].mxu0
        %1424 = vmatprep.mubr.bf16.mxu0 0
        %1425 = vmatmul.mubr.bf16.gmra.mrb[0].mxu0 %v1208
        %v1426 = vpop.f32.mrb[0].mxu0
        %v1427 = vadd.f32 0.0, %v1426
        %v1428 = vpop.f32.mrb[0].mxu0
        %v1429 = vpop.f32.mrb[0].mxu0
        %v1430 = vadd.f32 0.0, %v1429
        %v1431 = vpop.f32.mrb[0].mxu0
        %1432 = vmatprep.mubr.bf16.mxu0 0
        %1433 = vmatmul.mubr.bf16.gmra.mrb[0].mxu0 %v1211
        %v1434 = vpop.f32.mrb[0].mxu0
        %v1435 = vadd.f32 0.0, %v1434
        %v1436 = vpop.f32.mrb[0].mxu0
        %v1437 = vpop.f32.mrb[0].mxu0
        %v1438 = vadd.f32 0.0, %v1437
        %v1439 = vpop.f32.mrb[0].mxu0
        %1440 = vdwg.mxu0
        %v1441 = vld [vmem:[#allocation3] sm:$0xff]
        %v1442 = vld [vmem:[#allocation3 + $0x8] sm:$0xff]
        %v1443 = vld [vmem:[#allocation3 + $0x10] sm:$0xff]
        %v1444 = vld [vmem:[#allocation3 + $0x18] sm:$0xff]
        %v1445 = vld [vmem:[#allocation3 + $0x20] sm:$0xff]
        %v1446 = vld [vmem:[#allocation3 + $0x28] sm:$0xff]
        %v1447 = vld [vmem:[#allocation3 + $0x30] sm:$0xff]
        %v1448 = vld [vmem:[#allocation3 + $0x38] sm:$0xff]
        %v1449 = vld [vmem:[#allocation3 + $0x40] sm:$0xff]
        %v1450 = vld [vmem:[#allocation3 + $0x48] sm:$0xff]
        %v1451 = vld [vmem:[#allocation3 + $0x50] sm:$0xff]
        %v1452 = vld [vmem:[#allocation3 + $0x58] sm:$0xff]
        %v1453 = vld [vmem:[#allocation3 + $0x60] sm:$0xff]
        %v1454 = vld [vmem:[#allocation3 + $0x68] sm:$0xff]
        %v1455 = vld [vmem:[#allocation3 + $0x70] sm:$0xff]
        %v1456 = vld [vmem:[#allocation3 + $0x78] sm:$0xff]
        %v1457 = vld [vmem:[#allocation3 + $0x80] sm:$0xff]
        %v1458 = vld [vmem:[#allocation3 + $0x88] sm:$0xff]
        %v1459 = vld [vmem:[#allocation3 + $0x90] sm:$0xff]
        %v1460 = vld [vmem:[#allocation3 + $0x98] sm:$0xff]
        %v1461 = vld [vmem:[#allocation3 + $0xa0] sm:$0xff]
        %v1462 = vld [vmem:[#allocation3 + $0xa8] sm:$0xff]
        %v1463 = vld [vmem:[#allocation3 + $0xb0] sm:$0xff]
        %v1464 = vld [vmem:[#allocation3 + $0xb8] sm:$0xff]
        %v1465 = vld [vmem:[#allocation3 + $0xc0] sm:$0xff]
        %v1466 = vld [vmem:[#allocation3 + $0xc8] sm:$0xff]
        %v1467 = vld [vmem:[#allocation3 + $0xd0] sm:$0xff]
        %v1468 = vld [vmem:[#allocation3 + $0xd8] sm:$0xff]
        %v1469 = vld [vmem:[#allocation3 + $0xe0] sm:$0xff]
        %v1470 = vld [vmem:[#allocation3 + $0xe8] sm:$0xff]
        %v1471 = vld [vmem:[#allocation3 + $0xf0] sm:$0xff]
        %v1472 = vld [vmem:[#allocation3 + $0xf8] sm:$0xff]
        %v1473 = vld [vmem:[#allocation3 + $0x100] sm:$0xff]
        %v1474 = vld [vmem:[#allocation3 + $0x108] sm:$0xff]
        %v1475 = vld [vmem:[#allocation3 + $0x110] sm:$0xff]
        %v1476 = vld [vmem:[#allocation3 + $0x118] sm:$0xff]
        %v1477 = vld [vmem:[#allocation3 + $0x120] sm:$0xff]
        %v1478 = vld [vmem:[#allocation3 + $0x128] sm:$0xff]
        %v1479 = vld [vmem:[#allocation3 + $0x130] sm:$0xff]
        %v1480 = vld [vmem:[#allocation3 + $0x138] sm:$0xff]
        %v1481 = vld [vmem:[#allocation3 + $0x140] sm:$0xff]
        %v1482 = vld [vmem:[#allocation3 + $0x148] sm:$0xff]
        %v1483 = vld [vmem:[#allocation3 + $0x150] sm:$0xff]
        %v1484 = vld [vmem:[#allocation3 + $0x158] sm:$0xff]
        %v1485 = vld [vmem:[#allocation3 + $0x160] sm:$0xff]
        %v1486 = vld [vmem:[#allocation3 + $0x168] sm:$0xff]
        %v1487 = vld [vmem:[#allocation3 + $0x170] sm:$0xff]
        %v1488 = vld [vmem:[#allocation3 + $0x178] sm:$0xff]
        %v1489 = vadd.f32 %v1441, %v1251
        %v1490 = vadd.f32 %v1442, %v1254
        %v1491 = vadd.f32 %v1443, %v1259
        %v1492 = vadd.f32 %v1444, %v1262
        %v1493 = vadd.f32 %v1445, %v1267
        %v1494 = vadd.f32 %v1446, %v1270
        %v1495 = vadd.f32 %v1447, %v1275
        %v1496 = vadd.f32 %v1448, %v1278
        %v1497 = vadd.f32 %v1449, %v1283
        %v1498 = vadd.f32 %v1450, %v1286
        %v1499 = vadd.f32 %v1451, %v1291
        %v1500 = vadd.f32 %v1452, %v1294
        %v1501 = vadd.f32 %v1453, %v1299
        %v1502 = vadd.f32 %v1454, %v1302
        %v1503 = vadd.f32 %v1455, %v1307
        %v1504 = vadd.f32 %v1456, %v1310
        %v1505 = vadd.f32 %v1457, %v1315
        %v1506 = vadd.f32 %v1458, %v1318
        %v1507 = vadd.f32 %v1459, %v1323
        %v1508 = vadd.f32 %v1460, %v1326
        %v1509 = vadd.f32 %v1461, %v1331
        %v1510 = vadd.f32 %v1462, %v1334
        %v1511 = vadd.f32 %v1463, %v1339
        %v1512 = vadd.f32 %v1464, %v1342
        %v1513 = vadd.f32 %v1465, %v1347
        %v1514 = vadd.f32 %v1466, %v1350
        %v1515 = vadd.f32 %v1467, %v1355
        %v1516 = vadd.f32 %v1468, %v1358
        %v1517 = vadd.f32 %v1469, %v1363
        %v1518 = vadd.f32 %v1470, %v1366
        %v1519 = vadd.f32 %v1471, %v1371
        %v1520 = vadd.f32 %v1472, %v1374
        %v1521 = vadd.f32 %v1473, %v1379
        %v1522 = vadd.f32 %v1474, %v1382
        %v1523 = vadd.f32 %v1475, %v1387
        %v1524 = vadd.f32 %v1476, %v1390
        %v1525 = vadd.f32 %v1477, %v1395
        %v1526 = vadd.f32 %v1478, %v1398
        %v1527 = vadd.f32 %v1479, %v1403
        %v1528 = vadd.f32 %v1480, %v1406
        %v1529 = vadd.f32 %v1481, %v1411
        %v1530 = vadd.f32 %v1482, %v1414
        %v1531 = vadd.f32 %v1483, %v1419
        %v1532 = vadd.f32 %v1484, %v1422
        %v1533 = vadd.f32 %v1485, %v1427
        %v1534 = vadd.f32 %v1486, %v1430
        %v1535 = vadd.f32 %v1487, %v1435
        %v1536 = vadd.f32 %v1488, %v1438
        %1537 = vst [vmem:[#allocation3] sm:$0xff] %v1489
        %1538 = vst [vmem:[#allocation3 + $0x8] sm:$0xff] %v1490
        %1539 = vst [vmem:[#allocation3 + $0x10] sm:$0xff] %v1491
        %1540 = vst [vmem:[#allocation3 + $0x18] sm:$0xff] %v1492
        %1541 = vst [vmem:[#allocation3 + $0x20] sm:$0xff] %v1493
        %1542 = vst [vmem:[#allocation3 + $0x28] sm:$0xff] %v1494
        %1543 = vst [vmem:[#allocation3 + $0x30] sm:$0xff] %v1495
        %1544 = vst [vmem:[#allocation3 + $0x38] sm:$0xff] %v1496
        %1545 = vst [vmem:[#allocation3 + $0x40] sm:$0xff] %v1497
        %1546 = vst [vmem:[#allocation3 + $0x48] sm:$0xff] %v1498
        %1547 = vst [vmem:[#allocation3 + $0x50] sm:$0xff] %v1499
        %1548 = vst [vmem:[#allocation3 + $0x58] sm:$0xff] %v1500
        %1549 = vst [vmem:[#allocation3 + $0x60] sm:$0xff] %v1501
        %1550 = vst [vmem:[#allocation3 + $0x68] sm:$0xff] %v1502
        %1551 = vst [vmem:[#allocation3 + $0x70] sm:$0xff] %v1503
        %1552 = vst [vmem:[#allocation3 + $0x78] sm:$0xff] %v1504
        %1553 = vst [vmem:[#allocation3 + $0x80] sm:$0xff] %v1505
        %1554 = vst [vmem:[#allocation3 + $0x88] sm:$0xff] %v1506
        %1555 = vst [vmem:[#allocation3 + $0x90] sm:$0xff] %v1507
        %1556 = vst [vmem:[#allocation3 + $0x98] sm:$0xff] %v1508
        %1557 = vst [vmem:[#allocation3 + $0xa0] sm:$0xff] %v1509
        %1558 = vst [vmem:[#allocation3 + $0xa8] sm:$0xff] %v1510
        %1559 = vst [vmem:[#allocation3 + $0xb0] sm:$0xff] %v1511
        %1560 = vst [vmem:[#allocation3 + $0xb8] sm:$0xff] %v1512
        %1561 = vst [vmem:[#allocation3 + $0xc0] sm:$0xff] %v1513
        %1562 = vst [vmem:[#allocation3 + $0xc8] sm:$0xff] %v1514
        %1563 = vst [vmem:[#allocation3 + $0xd0] sm:$0xff] %v1515
        %1564 = vst [vmem:[#allocation3 + $0xd8] sm:$0xff] %v1516
        %1565 = vst [vmem:[#allocation3 + $0xe0] sm:$0xff] %v1517
        %1566 = vst [vmem:[#allocation3 + $0xe8] sm:$0xff] %v1518
        %1567 = vst [vmem:[#allocation3 + $0xf0] sm:$0xff] %v1519
        %1568 = vst [vmem:[#allocation3 + $0xf8] sm:$0xff] %v1520
        %1569 = vst [vmem:[#allocation3 + $0x100] sm:$0xff] %v1521
        %1570 = vst [vmem:[#allocation3 + $0x108] sm:$0xff] %v1522
        %1571 = vst [vmem:[#allocation3 + $0x110] sm:$0xff] %v1523
        %1572 = vst [vmem:[#allocation3 + $0x118] sm:$0xff] %v1524
        %1573 = vst [vmem:[#allocation3 + $0x120] sm:$0xff] %v1525
        %1574 = vst [vmem:[#allocation3 + $0x128] sm:$0xff] %v1526
        %1575 = vst [vmem:[#allocation3 + $0x130] sm:$0xff] %v1527
        %1576 = vst [vmem:[#allocation3 + $0x138] sm:$0xff] %v1528
        %1577 = vst [vmem:[#allocation3 + $0x140] sm:$0xff] %v1529
        %1578 = vst [vmem:[#allocation3 + $0x148] sm:$0xff] %v1530
        %1579 = vst [vmem:[#allocation3 + $0x150] sm:$0xff] %v1531
        %1580 = vst [vmem:[#allocation3 + $0x158] sm:$0xff] %v1532
        %1581 = vst [vmem:[#allocation3 + $0x160] sm:$0xff] %v1533
        %1582 = vst [vmem:[#allocation3 + $0x168] sm:$0xff] %v1534
        %1583 = vst [vmem:[#allocation3 + $0x170] sm:$0xff] %v1535
        %1584 = vst [vmem:[#allocation3 + $0x178] sm:$0xff] %v1536
        %v1585 = vld [vmem:[#allocation2 + $0x8] sm:$0xf0]
        %v1586 = vld [vmem:[#allocation2 + $0x10] sm:$0xff]
        %v1587 = vld [vmem:[#allocation2 + $0x18] sm:$0xff]
        %v1588 = vld [vmem:[#allocation2 + $0x20] sm:$0xff]
        %v1589 = vld [vmem:[#allocation2 + $0x28] sm:$0xff]
        %v1590 = vld [vmem:[#allocation2 + $0x30] sm:$0xff]
        %v1591 = vld [vmem:[#allocation2 + $0x38] sm:$0xff]
        %v1592 = vld [vmem:[#allocation2 + $0x40] sm:$0xff]
        %v1593 = vld [vmem:[#allocation2 + $0x48] sm:$0xff]
        %v1594 = vld [vmem:[#allocation2 + $0x50] sm:$0xff]
        %v1595 = vld [vmem:[#allocation2 + $0x58] sm:$0xff]
        %v1596 = vld [vmem:[#allocation2 + $0x60] sm:$0xff]
        %v1597 = vld [vmem:[#allocation2 + $0x68] sm:$0xff]
        %v1598 = vld [vmem:[#allocation2 + $0x70] sm:$0xff]
        %v1599 = vld [vmem:[#allocation2 + $0x78] sm:$0xff]
        %v1600 = vld [vmem:[#allocation2 + $0x80] sm:$0xff]
        %v1601 = vld [vmem:[#allocation2 + $0x88] sm:$0xff]
        %v1602 = vld [vmem:[#allocation2 + $0x90] sm:$0xff]
        %v1603 = vld [vmem:[#allocation2 + $0x98] sm:$0xff]
        %v1604 = vld [vmem:[#allocation2 + $0xa0] sm:$0xff]
        %v1605 = vld [vmem:[#allocation2 + $0xa8] sm:$0xff]
        %v1606 = vld [vmem:[#allocation2 + $0xb0] sm:$0xff]
        %v1607 = vld [vmem:[#allocation2 + $0xb8] sm:$0xff]
        %v1608 = vld [vmem:[#allocation2 + $0xc0] sm:$0xff]
        %v1609 = vld [vmem:[#allocation2 + $0xc8] sm:$0x1f]
        %s1610 = scalar_lea.vmem %s210, 4
        %v1611 = vld [vmem:[%s1610] sm:$0x3]
        %vm1612 = vsmask.f32 3328
        %v1614 = vshrl.u32 %v1585, 16
        %v1616 = vrot.slane %v1614, 4
        %v1617 = vshll.u32 %v1585, 16
        %v1619 = vrot.slane %v1617, 5
        %v1620 = vor.u32 %v1616, %v1619
        %v1622 = vshrl.u32 %v1586, 16
        %v1624 = vrot.slane %v1622, 4
        %v1625 = vshll.u32 %v1586, 16
        %v1627 = vrot.slane %v1625, 5
        %v1628 = vor.u32 %v1624, %v1627
        %v1629 = vsel %vm1612, %v1620, %v1628
        %v1631 = vshrl.u32 %v1587, 16
        %v1633 = vrot.slane %v1631, 4
        %v1634 = vshll.u32 %v1587, 16
        %v1636 = vrot.slane %v1634, 5
        %v1637 = vor.u32 %v1633, %v1636
        %v1638 = vsel %vm1612, %v1628, %v1637
        %v1640 = vshrl.u32 %v1588, 16
        %v1642 = vrot.slane %v1640, 4
        %v1643 = vshll.u32 %v1588, 16
        %v1645 = vrot.slane %v1643, 5
        %v1646 = vor.u32 %v1642, %v1645
        %v1647 = vsel %vm1612, %v1637, %v1646
        %v1649 = vshrl.u32 %v1589, 16
        %v1651 = vrot.slane %v1649, 4
        %v1652 = vshll.u32 %v1589, 16
        %v1654 = vrot.slane %v1652, 5
        %v1655 = vor.u32 %v1651, %v1654
        %v1656 = vsel %vm1612, %v1646, %v1655
        %v1658 = vshrl.u32 %v1590, 16
        %v1660 = vrot.slane %v1658, 4
        %v1661 = vshll.u32 %v1590, 16
        %v1663 = vrot.slane %v1661, 5
        %v1664 = vor.u32 %v1660, %v1663
        %v1665 = vsel %vm1612, %v1655, %v1664
        %v1667 = vshrl.u32 %v1591, 16
        %v1669 = vrot.slane %v1667, 4
        %v1670 = vshll.u32 %v1591, 16
        %v1672 = vrot.slane %v1670, 5
        %v1673 = vor.u32 %v1669, %v1672
        %v1674 = vsel %vm1612, %v1664, %v1673
        %v1676 = vshrl.u32 %v1592, 16
        %v1678 = vrot.slane %v1676, 4
        %v1679 = vshll.u32 %v1592, 16
        %v1681 = vrot.slane %v1679, 5
        %v1682 = vor.u32 %v1678, %v1681
        %v1683 = vsel %vm1612, %v1673, %v1682
        %v1685 = vshrl.u32 %v1593, 16
        %v1687 = vrot.slane %v1685, 4
        %v1688 = vshll.u32 %v1593, 16
        %v1690 = vrot.slane %v1688, 5
        %v1691 = vor.u32 %v1687, %v1690
        %v1692 = vsel %vm1612, %v1682, %v1691
        %v1694 = vshrl.u32 %v1594, 16
        %v1696 = vrot.slane %v1694, 4
        %v1697 = vshll.u32 %v1594, 16
        %v1699 = vrot.slane %v1697, 5
        %v1700 = vor.u32 %v1696, %v1699
        %v1701 = vsel %vm1612, %v1691, %v1700
        %v1703 = vshrl.u32 %v1595, 16
        %v1705 = vrot.slane %v1703, 4
        %v1706 = vshll.u32 %v1595, 16
        %v1708 = vrot.slane %v1706, 5
        %v1709 = vor.u32 %v1705, %v1708
        %v1710 = vsel %vm1612, %v1700, %v1709
        %v1712 = vshrl.u32 %v1596, 16
        %v1714 = vrot.slane %v1712, 4
        %v1715 = vshll.u32 %v1596, 16
        %v1717 = vrot.slane %v1715, 5
        %v1718 = vor.u32 %v1714, %v1717
        %v1719 = vsel %vm1612, %v1709, %v1718
        %v1721 = vshrl.u32 %v1597, 16
        %v1723 = vrot.slane %v1721, 4
        %v1724 = vshll.u32 %v1597, 16
        %v1726 = vrot.slane %v1724, 5
        %v1727 = vor.u32 %v1723, %v1726
        %v1728 = vsel %vm1612, %v1718, %v1727
        %v1730 = vshrl.u32 %v1598, 16
        %v1732 = vrot.slane %v1730, 4
        %v1733 = vshll.u32 %v1598, 16
        %v1735 = vrot.slane %v1733, 5
        %v1736 = vor.u32 %v1732, %v1735
        %v1737 = vsel %vm1612, %v1727, %v1736
        %v1739 = vshrl.u32 %v1599, 16
        %v1741 = vrot.slane %v1739, 4
        %v1742 = vshll.u32 %v1599, 16
        %v1744 = vrot.slane %v1742, 5
        %v1745 = vor.u32 %v1741, %v1744
        %v1746 = vsel %vm1612, %v1736, %v1745
        %v1748 = vshrl.u32 %v1600, 16
        %v1750 = vrot.slane %v1748, 4
        %v1751 = vshll.u32 %v1600, 16
        %v1753 = vrot.slane %v1751, 5
        %v1754 = vor.u32 %v1750, %v1753
        %v1755 = vsel %vm1612, %v1745, %v1754
        %v1757 = vshrl.u32 %v1601, 16
        %v1759 = vrot.slane %v1757, 4
        %v1760 = vshll.u32 %v1601, 16
        %v1762 = vrot.slane %v1760, 5
        %v1763 = vor.u32 %v1759, %v1762
        %v1764 = vsel %vm1612, %v1754, %v1763
        %v1766 = vshrl.u32 %v1602, 16
        %v1768 = vrot.slane %v1766, 4
        %v1769 = vshll.u32 %v1602, 16
        %v1771 = vrot.slane %v1769, 5
        %v1772 = vor.u32 %v1768, %v1771
        %v1773 = vsel %vm1612, %v1763, %v1772
        %v1775 = vshrl.u32 %v1603, 16
        %v1777 = vrot.slane %v1775, 4
        %v1778 = vshll.u32 %v1603, 16
        %v1780 = vrot.slane %v1778, 5
        %v1781 = vor.u32 %v1777, %v1780
        %v1782 = vsel %vm1612, %v1772, %v1781
        %v1784 = vshrl.u32 %v1604, 16
        %v1786 = vrot.slane %v1784, 4
        %v1787 = vshll.u32 %v1604, 16
        %v1789 = vrot.slane %v1787, 5
        %v1790 = vor.u32 %v1786, %v1789
        %v1791 = vsel %vm1612, %v1781, %v1790
        %v1793 = vshrl.u32 %v1605, 16
        %v1795 = vrot.slane %v1793, 4
        %v1796 = vshll.u32 %v1605, 16
        %v1798 = vrot.slane %v1796, 5
        %v1799 = vor.u32 %v1795, %v1798
        %v1800 = vsel %vm1612, %v1790, %v1799
        %v1802 = vshrl.u32 %v1606, 16
        %v1804 = vrot.slane %v1802, 4
        %v1805 = vshll.u32 %v1606, 16
        %v1807 = vrot.slane %v1805, 5
        %v1808 = vor.u32 %v1804, %v1807
        %v1809 = vsel %vm1612, %v1799, %v1808
        %v1811 = vshrl.u32 %v1607, 16
        %v1813 = vrot.slane %v1811, 4
        %v1814 = vshll.u32 %v1607, 16
        %v1816 = vrot.slane %v1814, 5
        %v1817 = vor.u32 %v1813, %v1816
        %v1818 = vsel %vm1612, %v1808, %v1817
        %v1820 = vshrl.u32 %v1608, 16
        %v1822 = vrot.slane %v1820, 4
        %v1823 = vshll.u32 %v1608, 16
        %v1825 = vrot.slane %v1823, 5
        %v1826 = vor.u32 %v1822, %v1825
        %v1827 = vsel %vm1612, %v1817, %v1826
        %v1829 = vshrl.u32 %v1609, 16
        %v1831 = vrot.slane %v1829, 4
        %v1832 = vshll.u32 %v1609, 16
        %v1834 = vrot.slane %v1832, 5
        %v1835 = vor.u32 %v1831, %v1834
        %v1836 = vsel %vm1612, %v1826, %v1835
        %v1838 = vsel %vm686, %v1629, 0
        %v1841 = vsel %vm686, %v1638, 0
        %v1844 = vsel %vm686, %v1647, 0
        %v1847 = vsel %vm686, %v1656, 0
        %v1850 = vsel %vm686, %v1665, 0
        %v1853 = vsel %vm686, %v1674, 0
        %v1856 = vsel %vm686, %v1683, 0
        %v1859 = vsel %vm686, %v1692, 0
        %v1862 = vsel %vm686, %v1701, 0
        %v1865 = vsel %vm686, %v1710, 0
        %v1868 = vsel %vm686, %v1719, 0
        %v1871 = vsel %vm686, %v1728, 0
        %v1874 = vsel %vm686, %v1737, 0
        %v1877 = vsel %vm686, %v1746, 0
        %v1880 = vsel %vm686, %v1755, 0
        %v1883 = vsel %vm686, %v1764, 0
        %v1886 = vsel %vm686, %v1773, 0
        %v1889 = vsel %vm686, %v1782, 0
        %v1892 = vsel %vm686, %v1791, 0
        %v1895 = vsel %vm686, %v1800, 0
        %v1898 = vsel %vm686, %v1809, 0
        %v1901 = vsel %vm686, %v1818, 0
        %v1904 = vsel %vm686, %v1827, 0
        %v1907 = vsel %vm686, %v1836, 0
        %v1910 = vand.u32 %v1611, %v762
        %1912 = vmatprep.subr.bf16.mxu0 0
        %1913 = vmatpush1.bf16.msra.mxu0 %v1910
        %1914 = vmatprep.subr.bf16.mxu0 0
        %1915 = vmatpush1.bf16.msra.mxu0 0
        %1916 = vmatprep.subr.bf16.mxu0 0
        %1917 = vmatpush1.bf16.msra.mxu0 0
        %1918 = vmatprep.subr.bf16.mxu0 0
        %1919 = vmatpush1.bf16.msra.mxu0 0
        %1920 = vmatprep.subr.bf16.mxu0 0
        %1921 = vmatpush1.bf16.msra.mxu0 0
        %1922 = vmatprep.subr.bf16.mxu0 0
        %1923 = vmatpush1.bf16.msra.mxu0 0
        %1924 = vmatprep.subr.bf16.mxu0 0
        %1925 = vmatpush1.bf16.msra.mxu0 0
        %1926 = vmatprep.subr.bf16.mxu0 0
        %1927 = vmatpush1.bf16.msra.mxu0 0
        %1928 = vmatprep.subr.bf16.mxu0 0
        %1929 = vmatpush1.bf16.msra.mxu0 0
        %1930 = vmatprep.subr.bf16.mxu0 0
        %1931 = vmatpush1.bf16.msra.mxu0 0
        %1932 = vmatprep.subr.bf16.mxu0 0
        %1933 = vmatpush1.bf16.msra.mxu0 0
        %1934 = vmatprep.subr.bf16.mxu0 0
        %1935 = vmatpush1.bf16.msra.mxu0 0
        %1936 = vmatprep.subr.bf16.mxu0 0
        %1937 = vmatpush1.bf16.msra.mxu0 0
        %1938 = vmatprep.subr.bf16.mxu0 0
        %1939 = vmatpush1.bf16.msra.mxu0 0
        %1940 = vmatprep.subr.bf16.mxu0 0
        %1941 = vmatpush1.bf16.msra.mxu0 0
        %1942 = vmatprep.subr.bf16.mxu0 0
        %1943 = vmatpush1.bf16.msra.mxu0 0
        %1944 = vmatprep.mubr.bf16.mxu0 0
        %1945 = vmatmul.mubr.bf16.gmra.mrb[0].mxu0 %v1838
        %v1946 = vpop.f32.mrb[0].mxu0
        %v1947 = vadd.f32 0.0, %v1946
        %v1948 = vpop.f32.mrb[0].mxu0
        %v1949 = vpop.f32.mrb[0].mxu0
        %v1950 = vadd.f32 0.0, %v1949
        %v1951 = vpop.f32.mrb[0].mxu0
        %1952 = vmatprep.mubr.bf16.mxu0 0
        %1953 = vmatmul.mubr.bf16.gmra.mrb[0].mxu0 %v1841
        %v1954 = vpop.f32.mrb[0].mxu0
        %v1955 = vadd.f32 0.0, %v1954
        %v1956 = vpop.f32.mrb[0].mxu0
        %v1957 = vpop.f32.mrb[0].mxu0
        %v1958 = vadd.f32 0.0, %v1957
        %v1959 = vpop.f32.mrb[0].mxu0
        %1960 = vmatprep.mubr.bf16.mxu0 0
        %1961 = vmatmul.mubr.bf16.gmra.mrb[0].mxu0 %v1844
        %v1962 = vpop.f32.mrb[0].mxu0
        %v1963 = vadd.f32 0.0, %v1962
        %v1964 = vpop.f32.mrb[0].mxu0
        %v1965 = vpop.f32.mrb[0].mxu0
        %v1966 = vadd.f32 0.0, %v1965
        %v1967 = vpop.f32.mrb[0].mxu0
        %1968 = vmatprep.mubr.bf16.mxu0 0
        %1969 = vmatmul.mubr.bf16.gmra.mrb[0].mxu0 %v1847
        %v1970 = vpop.f32.mrb[0].mxu0
        %v1971 = vadd.f32 0.0, %v1970
        %v1972 = vpop.f32.mrb[0].mxu0
        %v1973 = vpop.f32.mrb[0].mxu0
        %v1974 = vadd.f32 0.0, %v1973
        %v1975 = vpop.f32.mrb[0].mxu0
        %1976 = vmatprep.mubr.bf16.mxu0 0
        %1977 = vmatmul.mubr.bf16.gmra.mrb[0].mxu0 %v1850
        %v1978 = vpop.f32.mrb[0].mxu0
        %v1979 = vadd.f32 0.0, %v1978
        %v1980 = vpop.f32.mrb[0].mxu0
        %v1981 = vpop.f32.mrb[0].mxu0
        %v1982 = vadd.f32 0.0, %v1981
        %v1983 = vpop.f32.mrb[0].mxu0
        %1984 = vmatprep.mubr.bf16.mxu0 0
        %1985 = vmatmul.mubr.bf16.gmra.mrb[0].mxu0 %v1853
        %v1986 = vpop.f32.mrb[0].mxu0
        %v1987 = vadd.f32 0.0, %v1986
        %v1988 = vpop.f32.mrb[0].mxu0
        %v1989 = vpop.f32.mrb[0].mxu0
        %v1990 = vadd.f32 0.0, %v1989
        %v1991 = vpop.f32.mrb[0].mxu0
        %1992 = vmatprep.mubr.bf16.mxu0 0
        %1993 = vmatmul.mubr.bf16.gmra.mrb[0].mxu0 %v1856
        %v1994 = vpop.f32.mrb[0].mxu0
        %v1995 = vadd.f32 0.0, %v1994
        %v1996 = vpop.f32.mrb[0].mxu0
        %v1997 = vpop.f32.mrb[0].mxu0
        %v1998 = vadd.f32 0.0, %v1997
        %v1999 = vpop.f32.mrb[0].mxu0
        %2000 = vmatprep.mubr.bf16.mxu0 0
        %2001 = vmatmul.mubr.bf16.gmra.mrb[0].mxu0 %v1859
        %v2002 = vpop.f32.mrb[0].mxu0
        %v2003 = vadd.f32 0.0, %v2002
        %v2004 = vpop.f32.mrb[0].mxu0
        %v2005 = vpop.f32.mrb[0].mxu0
        %v2006 = vadd.f32 0.0, %v2005
        %v2007 = vpop.f32.mrb[0].mxu0
        %2008 = vmatprep.mubr.bf16.mxu0 0
        %2009 = vmatmul.mubr.bf16.gmra.mrb[0].mxu0 %v1862
        %v2010 = vpop.f32.mrb[0].mxu0
        %v2011 = vadd.f32 0.0, %v2010
        %v2012 = vpop.f32.mrb[0].mxu0
        %v2013 = vpop.f32.mrb[0].mxu0
        %v2014 = vadd.f32 0.0, %v2013
        %v2015 = vpop.f32.mrb[0].mxu0
        %2016 = vmatprep.mubr.bf16.mxu0 0
        %2017 = vmatmul.mubr.bf16.gmra.mrb[0].mxu0 %v1865
        %v2018 = vpop.f32.mrb[0].mxu0
        %v2019 = vadd.f32 0.0, %v2018
        %v2020 = vpop.f32.mrb[0].mxu0
        %v2021 = vpop.f32.mrb[0].mxu0
        %v2022 = vadd.f32 0.0, %v2021
        %v2023 = vpop.f32.mrb[0].mxu0
        %2024 = vmatprep.mubr.bf16.mxu0 0
        %2025 = vmatmul.mubr.bf16.gmra.mrb[0].mxu0 %v1868
        %v2026 = vpop.f32.mrb[0].mxu0
        %v2027 = vadd.f32 0.0, %v2026
        %v2028 = vpop.f32.mrb[0].mxu0
        %v2029 = vpop.f32.mrb[0].mxu0
        %v2030 = vadd.f32 0.0, %v2029
        %v2031 = vpop.f32.mrb[0].mxu0
        %2032 = vmatprep.mubr.bf16.mxu0 0
        %2033 = vmatmul.mubr.bf16.gmra.mrb[0].mxu0 %v1871
        %v2034 = vpop.f32.mrb[0].mxu0
        %v2035 = vadd.f32 0.0, %v2034
        %v2036 = vpop.f32.mrb[0].mxu0
        %v2037 = vpop.f32.mrb[0].mxu0
        %v2038 = vadd.f32 0.0, %v2037
        %v2039 = vpop.f32.mrb[0].mxu0
        %2040 = vmatprep.mubr.bf16.mxu0 0
        %2041 = vmatmul.mubr.bf16.gmra.mrb[0].mxu0 %v1874
        %v2042 = vpop.f32.mrb[0].mxu0
        %v2043 = vadd.f32 0.0, %v2042
        %v2044 = vpop.f32.mrb[0].mxu0
        %v2045 = vpop.f32.mrb[0].mxu0
        %v2046 = vadd.f32 0.0, %v2045
        %v2047 = vpop.f32.mrb[0].mxu0
        %2048 = vmatprep.mubr.bf16.mxu0 0
        %2049 = vmatmul.mubr.bf16.gmra.mrb[0].mxu0 %v1877
        %v2050 = vpop.f32.mrb[0].mxu0
        %v2051 = vadd.f32 0.0, %v2050
        %v2052 = vpop.f32.mrb[0].mxu0
        %v2053 = vpop.f32.mrb[0].mxu0
        %v2054 = vadd.f32 0.0, %v2053
        %v2055 = vpop.f32.mrb[0].mxu0
        %2056 = vmatprep.mubr.bf16.mxu0 0
        %2057 = vmatmul.mubr.bf16.gmra.mrb[0].mxu0 %v1880
        %v2058 = vpop.f32.mrb[0].mxu0
        %v2059 = vadd.f32 0.0, %v2058
        %v2060 = vpop.f32.mrb[0].mxu0
        %v2061 = vpop.f32.mrb[0].mxu0
        %v2062 = vadd.f32 0.0, %v2061
        %v2063 = vpop.f32.mrb[0].mxu0
        %2064 = vmatprep.mubr.bf16.mxu0 0
        %2065 = vmatmul.mubr.bf16.gmra.mrb[0].mxu0 %v1883
        %v2066 = vpop.f32.mrb[0].mxu0
        %v2067 = vadd.f32 0.0, %v2066
        %v2068 = vpop.f32.mrb[0].mxu0
        %v2069 = vpop.f32.mrb[0].mxu0
        %v2070 = vadd.f32 0.0, %v2069
        %v2071 = vpop.f32.mrb[0].mxu0
        %2072 = vmatprep.mubr.bf16.mxu0 0
        %2073 = vmatmul.mubr.bf16.gmra.mrb[0].mxu0 %v1886
        %v2074 = vpop.f32.mrb[0].mxu0
        %v2075 = vadd.f32 0.0, %v2074
        %v2076 = vpop.f32.mrb[0].mxu0
        %v2077 = vpop.f32.mrb[0].mxu0
        %v2078 = vadd.f32 0.0, %v2077
        %v2079 = vpop.f32.mrb[0].mxu0
        %2080 = vmatprep.mubr.bf16.mxu0 0
        %2081 = vmatmul.mubr.bf16.gmra.mrb[0].mxu0 %v1889
        %v2082 = vpop.f32.mrb[0].mxu0
        %v2083 = vadd.f32 0.0, %v2082
        %v2084 = vpop.f32.mrb[0].mxu0
        %v2085 = vpop.f32.mrb[0].mxu0
        %v2086 = vadd.f32 0.0, %v2085
        %v2087 = vpop.f32.mrb[0].mxu0
        %2088 = vmatprep.mubr.bf16.mxu0 0
        %2089 = vmatmul.mubr.bf16.gmra.mrb[0].mxu0 %v1892
        %v2090 = vpop.f32.mrb[0].mxu0
        %v2091 = vadd.f32 0.0, %v2090
        %v2092 = vpop.f32.mrb[0].mxu0
        %v2093 = vpop.f32.mrb[0].mxu0
        %v2094 = vadd.f32 0.0, %v2093
        %v2095 = vpop.f32.mrb[0].mxu0
        %2096 = vmatprep.mubr.bf16.mxu0 0
        %2097 = vmatmul.mubr.bf16.gmra.mrb[0].mxu0 %v1895
        %v2098 = vpop.f32.mrb[0].mxu0
        %v2099 = vadd.f32 0.0, %v2098
        %v2100 = vpop.f32.mrb[0].mxu0
        %v2101 = vpop.f32.mrb[0].mxu0
        %v2102 = vadd.f32 0.0, %v2101
        %v2103 = vpop.f32.mrb[0].mxu0
        %2104 = vmatprep.mubr.bf16.mxu0 0
        %2105 = vmatmul.mubr.bf16.gmra.mrb[0].mxu0 %v1898
        %v2106 = vpop.f32.mrb[0].mxu0
        %v2107 = vadd.f32 0.0, %v2106
        %v2108 = vpop.f32.mrb[0].mxu0
        %v2109 = vpop.f32.mrb[0].mxu0
        %v2110 = vadd.f32 0.0, %v2109
        %v2111 = vpop.f32.mrb[0].mxu0
        %2112 = vmatprep.mubr.bf16.mxu0 0
        %2113 = vmatmul.mubr.bf16.gmra.mrb[0].mxu0 %v1901
        %v2114 = vpop.f32.mrb[0].mxu0
        %v2115 = vadd.f32 0.0, %v2114
        %v2116 = vpop.f32.mrb[0].mxu0
        %v2117 = vpop.f32.mrb[0].mxu0
        %v2118 = vadd.f32 0.0, %v2117
        %v2119 = vpop.f32.mrb[0].mxu0
        %2120 = vmatprep.mubr.bf16.mxu0 0
        %2121 = vmatmul.mubr.bf16.gmra.mrb[0].mxu0 %v1904
        %v2122 = vpop.f32.mrb[0].mxu0
        %v2123 = vadd.f32 0.0, %v2122
        %v2124 = vpop.f32.mrb[0].mxu0
        %v2125 = vpop.f32.mrb[0].mxu0
        %v2126 = vadd.f32 0.0, %v2125
        %v2127 = vpop.f32.mrb[0].mxu0
        %2128 = vmatprep.mubr.bf16.mxu0 0
        %2129 = vmatmul.mubr.bf16.gmra.mrb[0].mxu0 %v1907
        %v2130 = vpop.f32.mrb[0].mxu0
        %v2131 = vadd.f32 0.0, %v2130
        %v2132 = vpop.f32.mrb[0].mxu0
        %v2133 = vpop.f32.mrb[0].mxu0
        %v2134 = vadd.f32 0.0, %v2133
        %v2135 = vpop.f32.mrb[0].mxu0
        %2136 = vdwg.mxu0
        %v2137 = vld [vmem:[#allocation3] sm:$0xff]
        %v2138 = vld [vmem:[#allocation3 + $0x8] sm:$0xff]
        %v2139 = vld [vmem:[#allocation3 + $0x10] sm:$0xff]
        %v2140 = vld [vmem:[#allocation3 + $0x18] sm:$0xff]
        %v2141 = vld [vmem:[#allocation3 + $0x20] sm:$0xff]
        %v2142 = vld [vmem:[#allocation3 + $0x28] sm:$0xff]
        %v2143 = vld [vmem:[#allocation3 + $0x30] sm:$0xff]
        %v2144 = vld [vmem:[#allocation3 + $0x38] sm:$0xff]
        %v2145 = vld [vmem:[#allocation3 + $0x40] sm:$0xff]
        %v2146 = vld [vmem:[#allocation3 + $0x48] sm:$0xff]
        %v2147 = vld [vmem:[#allocation3 + $0x50] sm:$0xff]
        %v2148 = vld [vmem:[#allocation3 + $0x58] sm:$0xff]
        %v2149 = vld [vmem:[#allocation3 + $0x60] sm:$0xff]
        %v2150 = vld [vmem:[#allocation3 + $0x68] sm:$0xff]
        %v2151 = vld [vmem:[#allocation3 + $0x70] sm:$0xff]
        %v2152 = vld [vmem:[#allocation3 + $0x78] sm:$0xff]
        %v2153 = vld [vmem:[#allocation3 + $0x80] sm:$0xff]
        %v2154 = vld [vmem:[#allocation3 + $0x88] sm:$0xff]
        %v2155 = vld [vmem:[#allocation3 + $0x90] sm:$0xff]
        %v2156 = vld [vmem:[#allocation3 + $0x98] sm:$0xff]
        %v2157 = vld [vmem:[#allocation3 + $0xa0] sm:$0xff]
        %v2158 = vld [vmem:[#allocation3 + $0xa8] sm:$0xff]
        %v2159 = vld [vmem:[#allocation3 + $0xb0] sm:$0xff]
        %v2160 = vld [vmem:[#allocation3 + $0xb8] sm:$0xff]
        %v2161 = vld [vmem:[#allocation3 + $0xc0] sm:$0xff]
        %v2162 = vld [vmem:[#allocation3 + $0xc8] sm:$0xff]
        %v2163 = vld [vmem:[#allocation3 + $0xd0] sm:$0xff]
        %v2164 = vld [vmem:[#allocation3 + $0xd8] sm:$0xff]
        %v2165 = vld [vmem:[#allocation3 + $0xe0] sm:$0xff]
        %v2166 = vld [vmem:[#allocation3 + $0xe8] sm:$0xff]
        %v2167 = vld [vmem:[#allocation3 + $0xf0] sm:$0xff]
        %v2168 = vld [vmem:[#allocation3 + $0xf8] sm:$0xff]
        %v2169 = vld [vmem:[#allocation3 + $0x100] sm:$0xff]
        %v2170 = vld [vmem:[#allocation3 + $0x108] sm:$0xff]
        %v2171 = vld [vmem:[#allocation3 + $0x110] sm:$0xff]
        %v2172 = vld [vmem:[#allocation3 + $0x118] sm:$0xff]
        %v2173 = vld [vmem:[#allocation3 + $0x120] sm:$0xff]
        %v2174 = vld [vmem:[#allocation3 + $0x128] sm:$0xff]
        %v2175 = vld [vmem:[#allocation3 + $0x130] sm:$0xff]
        %v2176 = vld [vmem:[#allocation3 + $0x138] sm:$0xff]
        %v2177 = vld [vmem:[#allocation3 + $0x140] sm:$0xff]
        %v2178 = vld [vmem:[#allocation3 + $0x148] sm:$0xff]
        %v2179 = vld [vmem:[#allocation3 + $0x150] sm:$0xff]
        %v2180 = vld [vmem:[#allocation3 + $0x158] sm:$0xff]
        %v2181 = vld [vmem:[#allocation3 + $0x160] sm:$0xff]
        %v2182 = vld [vmem:[#allocation3 + $0x168] sm:$0xff]
        %v2183 = vld [vmem:[#allocation3 + $0x170] sm:$0xff]
        %v2184 = vld [vmem:[#allocation3 + $0x178] sm:$0xff]
        %v2185 = vadd.f32 %v2137, %v1947
        %v2186 = vadd.f32 %v2138, %v1950
        %v2187 = vadd.f32 %v2139, %v1955
        %v2188 = vadd.f32 %v2140, %v1958
        %v2189 = vadd.f32 %v2141, %v1963
        %v2190 = vadd.f32 %v2142, %v1966
        %v2191 = vadd.f32 %v2143, %v1971
        %v2192 = vadd.f32 %v2144, %v1974
        %v2193 = vadd.f32 %v2145, %v1979
        %v2194 = vadd.f32 %v2146, %v1982
        %v2195 = vadd.f32 %v2147, %v1987
        %v2196 = vadd.f32 %v2148, %v1990
        %v2197 = vadd.f32 %v2149, %v1995
        %v2198 = vadd.f32 %v2150, %v1998
        %v2199 = vadd.f32 %v2151, %v2003
        %v2200 = vadd.f32 %v2152, %v2006
        %v2201 = vadd.f32 %v2153, %v2011
        %v2202 = vadd.f32 %v2154, %v2014
        %v2203 = vadd.f32 %v2155, %v2019
        %v2204 = vadd.f32 %v2156, %v2022
        %v2205 = vadd.f32 %v2157, %v2027
        %v2206 = vadd.f32 %v2158, %v2030
        %v2207 = vadd.f32 %v2159, %v2035
        %v2208 = vadd.f32 %v2160, %v2038
        %v2209 = vadd.f32 %v2161, %v2043
        %v2210 = vadd.f32 %v2162, %v2046
        %v2211 = vadd.f32 %v2163, %v2051
        %v2212 = vadd.f32 %v2164, %v2054
        %v2213 = vadd.f32 %v2165, %v2059
        %v2214 = vadd.f32 %v2166, %v2062
        %v2215 = vadd.f32 %v2167, %v2067
        %v2216 = vadd.f32 %v2168, %v2070
        %v2217 = vadd.f32 %v2169, %v2075
        %v2218 = vadd.f32 %v2170, %v2078
        %v2219 = vadd.f32 %v2171, %v2083
        %v2220 = vadd.f32 %v2172, %v2086
        %v2221 = vadd.f32 %v2173, %v2091
        %v2222 = vadd.f32 %v2174, %v2094
        %v2223 = vadd.f32 %v2175, %v2099
        %v2224 = vadd.f32 %v2176, %v2102
        %v2225 = vadd.f32 %v2177, %v2107
        %v2226 = vadd.f32 %v2178, %v2110
        %v2227 = vadd.f32 %v2179, %v2115
        %v2228 = vadd.f32 %v2180, %v2118
        %v2229 = vadd.f32 %v2181, %v2123
        %v2230 = vadd.f32 %v2182, %v2126
        %v2231 = vadd.f32 %v2183, %v2131
        %v2232 = vadd.f32 %v2184, %v2134
        %2233 = vst [vmem:[#allocation3] sm:$0xff] %v2185
        %2234 = vst [vmem:[#allocation3 + $0x8] sm:$0xff] %v2186
        %2235 = vst [vmem:[#allocation3 + $0x10] sm:$0xff] %v2187
        %2236 = vst [vmem:[#allocation3 + $0x18] sm:$0xff] %v2188
        %2237 = vst [vmem:[#allocation3 + $0x20] sm:$0xff] %v2189
        %2238 = vst [vmem:[#allocation3 + $0x28] sm:$0xff] %v2190
        %2239 = vst [vmem:[#allocation3 + $0x30] sm:$0xff] %v2191
        %2240 = vst [vmem:[#allocation3 + $0x38] sm:$0xff] %v2192
        %2241 = vst [vmem:[#allocation3 + $0x40] sm:$0xff] %v2193
        %2242 = vst [vmem:[#allocation3 + $0x48] sm:$0xff] %v2194
        %2243 = vst [vmem:[#allocation3 + $0x50] sm:$0xff] %v2195
        %2244 = vst [vmem:[#allocation3 + $0x58] sm:$0xff] %v2196
        %2245 = vst [vmem:[#allocation3 + $0x60] sm:$0xff] %v2197
        %2246 = vst [vmem:[#allocation3 + $0x68] sm:$0xff] %v2198
        %2247 = vst [vmem:[#allocation3 + $0x70] sm:$0xff] %v2199
        %2248 = vst [vmem:[#allocation3 + $0x78] sm:$0xff] %v2200
        %2249 = vst [vmem:[#allocation3 + $0x80] sm:$0xff] %v2201
        %2250 = vst [vmem:[#allocation3 + $0x88] sm:$0xff] %v2202
        %2251 = vst [vmem:[#allocation3 + $0x90] sm:$0xff] %v2203
        %2252 = vst [vmem:[#allocation3 + $0x98] sm:$0xff] %v2204
        %2253 = vst [vmem:[#allocation3 + $0xa0] sm:$0xff] %v2205
        %2254 = vst [vmem:[#allocation3 + $0xa8] sm:$0xff] %v2206
        %2255 = vst [vmem:[#allocation3 + $0xb0] sm:$0xff] %v2207
        %2256 = vst [vmem:[#allocation3 + $0xb8] sm:$0xff] %v2208
        %2257 = vst [vmem:[#allocation3 + $0xc0] sm:$0xff] %v2209
        %2258 = vst [vmem:[#allocation3 + $0xc8] sm:$0xff] %v2210
        %2259 = vst [vmem:[#allocation3 + $0xd0] sm:$0xff] %v2211
        %2260 = vst [vmem:[#allocation3 + $0xd8] sm:$0xff] %v2212
        %2261 = vst [vmem:[#allocation3 + $0xe0] sm:$0xff] %v2213
        %2262 = vst [vmem:[#allocation3 + $0xe8] sm:$0xff] %v2214
        %2263 = vst [vmem:[#allocation3 + $0xf0] sm:$0xff] %v2215
        %2264 = vst [vmem:[#allocation3 + $0xf8] sm:$0xff] %v2216
        %2265 = vst [vmem:[#allocation3 + $0x100] sm:$0xff] %v2217
        %2266 = vst [vmem:[#allocation3 + $0x108] sm:$0xff] %v2218
        %2267 = vst [vmem:[#allocation3 + $0x110] sm:$0xff] %v2219
        %2268 = vst [vmem:[#allocation3 + $0x118] sm:$0xff] %v2220
        %2269 = vst [vmem:[#allocation3 + $0x120] sm:$0xff] %v2221
        %2270 = vst [vmem:[#allocation3 + $0x128] sm:$0xff] %v2222
        %2271 = vst [vmem:[#allocation3 + $0x130] sm:$0xff] %v2223
        %2272 = vst [vmem:[#allocation3 + $0x138] sm:$0xff] %v2224
        %2273 = vst [vmem:[#allocation3 + $0x140] sm:$0xff] %v2225
        %2274 = vst [vmem:[#allocation3 + $0x148] sm:$0xff] %v2226
        %2275 = vst [vmem:[#allocation3 + $0x150] sm:$0xff] %v2227
        %2276 = vst [vmem:[#allocation3 + $0x158] sm:$0xff] %v2228
        %2277 = vst [vmem:[#allocation3 + $0x160] sm:$0xff] %v2229
        %2278 = vst [vmem:[#allocation3 + $0x168] sm:$0xff] %v2230
        %2279 = vst [vmem:[#allocation3 + $0x170] sm:$0xff] %v2231
        %2280 = vst [vmem:[#allocation3 + $0x178] sm:$0xff] %v2232
        %v2281 = vld [vmem:[#allocation2 + $0x10] sm:$0x80]
        %v2282 = vld [vmem:[#allocation2 + $0x18] sm:$0xff]
        %v2283 = vld [vmem:[#allocation2 + $0x20] sm:$0xff]
        %v2284 = vld [vmem:[#allocation2 + $0x28] sm:$0xff]
        %v2285 = vld [vmem:[#allocation2 + $0x30] sm:$0xff]
        %v2286 = vld [vmem:[#allocation2 + $0x38] sm:$0xff]
        %v2287 = vld [vmem:[#allocation2 + $0x40] sm:$0xff]
        %v2288 = vld [vmem:[#allocation2 + $0x48] sm:$0xff]
        %v2289 = vld [vmem:[#allocation2 + $0x50] sm:$0xff]
        %v2290 = vld [vmem:[#allocation2 + $0x58] sm:$0xff]
        %v2291 = vld [vmem:[#allocation2 + $0x60] sm:$0xff]
        %v2292 = vld [vmem:[#allocation2 + $0x68] sm:$0xff]
        %v2293 = vld [vmem:[#allocation2 + $0x70] sm:$0xff]
        %v2294 = vld [vmem:[#allocation2 + $0x78] sm:$0xff]
        %v2295 = vld [vmem:[#allocation2 + $0x80] sm:$0xff]
        %v2296 = vld [vmem:[#allocation2 + $0x88] sm:$0xff]
        %v2297 = vld [vmem:[#allocation2 + $0x90] sm:$0xff]
        %v2298 = vld [vmem:[#allocation2 + $0x98] sm:$0xff]
        %v2299 = vld [vmem:[#allocation2 + $0xa0] sm:$0xff]
        %v2300 = vld [vmem:[#allocation2 + $0xa8] sm:$0xff]
        %v2301 = vld [vmem:[#allocation2 + $0xb0] sm:$0xff]
        %v2302 = vld [vmem:[#allocation2 + $0xb8] sm:$0xff]
        %v2303 = vld [vmem:[#allocation2 + $0xc0] sm:$0xff]
        %v2304 = vld [vmem:[#allocation2 + $0xc8] sm:$0xff]
        %v2305 = vld [vmem:[#allocation2 + $0xd0] sm:$0xff]
        %s2306 = scalar_lea.vmem %s210, 6
        %v2307 = vld [vmem:[%s2306] sm:$0x3]
        %vm2308 = vsmask.f32 256
        %v2310 = vshrl.u32 %v2281, 16
        %v2312 = vrot.slane %v2310, 7
        %v2314 = vshrl.u32 %v2282, 16
        %v2316 = vrot.slane %v2314, 7
        %v2317 = vshll.u32 %v2282, 16
        %v2319 = vor.u32 %v2316, %v2317
        %v2320 = vsel %vm2308, %v2312, %v2319
        %v2322 = vshrl.u32 %v2283, 16
        %v2324 = vrot.slane %v2322, 7
        %v2325 = vshll.u32 %v2283, 16
        %v2327 = vor.u32 %v2324, %v2325
        %v2328 = vsel %vm2308, %v2316, %v2327
        %v2330 = vshrl.u32 %v2284, 16
        %v2332 = vrot.slane %v2330, 7
        %v2333 = vshll.u32 %v2284, 16
        %v2335 = vor.u32 %v2332, %v2333
        %v2336 = vsel %vm2308, %v2324, %v2335
        %v2338 = vshrl.u32 %v2285, 16
        %v2340 = vrot.slane %v2338, 7
        %v2341 = vshll.u32 %v2285, 16
        %v2343 = vor.u32 %v2340, %v2341
        %v2344 = vsel %vm2308, %v2332, %v2343
        %v2346 = vshrl.u32 %v2286, 16
        %v2348 = vrot.slane %v2346, 7
        %v2349 = vshll.u32 %v2286, 16
        %v2351 = vor.u32 %v2348, %v2349
        %v2352 = vsel %vm2308, %v2340, %v2351
        %v2354 = vshrl.u32 %v2287, 16
        %v2356 = vrot.slane %v2354, 7
        %v2357 = vshll.u32 %v2287, 16
        %v2359 = vor.u32 %v2356, %v2357
        %v2360 = vsel %vm2308, %v2348, %v2359
        %v2362 = vshrl.u32 %v2288, 16
        %v2364 = vrot.slane %v2362, 7
        %v2365 = vshll.u32 %v2288, 16
        %v2367 = vor.u32 %v2364, %v2365
        %v2368 = vsel %vm2308, %v2356, %v2367
        %v2370 = vshrl.u32 %v2289, 16
        %v2372 = vrot.slane %v2370, 7
        %v2373 = vshll.u32 %v2289, 16
        %v2375 = vor.u32 %v2372, %v2373
        %v2376 = vsel %vm2308, %v2364, %v2375
        %v2378 = vshrl.u32 %v2290, 16
        %v2380 = vrot.slane %v2378, 7
        %v2381 = vshll.u32 %v2290, 16
        %v2383 = vor.u32 %v2380, %v2381
        %v2384 = vsel %vm2308, %v2372, %v2383
        %v2386 = vshrl.u32 %v2291, 16
        %v2388 = vrot.slane %v2386, 7
        %v2389 = vshll.u32 %v2291, 16
        %v2391 = vor.u32 %v2388, %v2389
        %v2392 = vsel %vm2308, %v2380, %v2391
        %v2394 = vshrl.u32 %v2292, 16
        %v2396 = vrot.slane %v2394, 7
        %v2397 = vshll.u32 %v2292, 16
        %v2399 = vor.u32 %v2396, %v2397
        %v2400 = vsel %vm2308, %v2388, %v2399
        %v2402 = vshrl.u32 %v2293, 16
        %v2404 = vrot.slane %v2402, 7
        %v2405 = vshll.u32 %v2293, 16
        %v2407 = vor.u32 %v2404, %v2405
        %v2408 = vsel %vm2308, %v2396, %v2407
        %v2410 = vshrl.u32 %v2294, 16
        %v2412 = vrot.slane %v2410, 7
        %v2413 = vshll.u32 %v2294, 16
        %v2415 = vor.u32 %v2412, %v2413
        %v2416 = vsel %vm2308, %v2404, %v2415
        %v2418 = vshrl.u32 %v2295, 16
        %v2420 = vrot.slane %v2418, 7
        %v2421 = vshll.u32 %v2295, 16
        %v2423 = vor.u32 %v2420, %v2421
        %v2424 = vsel %vm2308, %v2412, %v2423
        %v2426 = vshrl.u32 %v2296, 16
        %v2428 = vrot.slane %v2426, 7
        %v2429 = vshll.u32 %v2296, 16
        %v2431 = vor.u32 %v2428, %v2429
        %v2432 = vsel %vm2308, %v2420, %v2431
        %v2434 = vshrl.u32 %v2297, 16
        %v2436 = vrot.slane %v2434, 7
        %v2437 = vshll.u32 %v2297, 16
        %v2439 = vor.u32 %v2436, %v2437
        %v2440 = vsel %vm2308, %v2428, %v2439
        %v2442 = vshrl.u32 %v2298, 16
        %v2444 = vrot.slane %v2442, 7
        %v2445 = vshll.u32 %v2298, 16
        %v2447 = vor.u32 %v2444, %v2445
        %v2448 = vsel %vm2308, %v2436, %v2447
        %v2450 = vshrl.u32 %v2299, 16
        %v2452 = vrot.slane %v2450, 7
        %v2453 = vshll.u32 %v2299, 16
        %v2455 = vor.u32 %v2452, %v2453
        %v2456 = vsel %vm2308, %v2444, %v2455
        %v2458 = vshrl.u32 %v2300, 16
        %v2460 = vrot.slane %v2458, 7
        %v2461 = vshll.u32 %v2300, 16
        %v2463 = vor.u32 %v2460, %v2461
        %v2464 = vsel %vm2308, %v2452, %v2463
        %v2466 = vshrl.u32 %v2301, 16
        %v2468 = vrot.slane %v2466, 7
        %v2469 = vshll.u32 %v2301, 16
        %v2471 = vor.u32 %v2468, %v2469
        %v2472 = vsel %vm2308, %v2460, %v2471
        %v2474 = vshrl.u32 %v2302, 16
        %v2476 = vrot.slane %v2474, 7
        %v2477 = vshll.u32 %v2302, 16
        %v2479 = vor.u32 %v2476, %v2477
        %v2480 = vsel %vm2308, %v2468, %v2479
        %v2482 = vshrl.u32 %v2303, 16
        %v2484 = vrot.slane %v2482, 7
        %v2485 = vshll.u32 %v2303, 16
        %v2487 = vor.u32 %v2484, %v2485
        %v2488 = vsel %vm2308, %v2476, %v2487
        %v2490 = vshrl.u32 %v2304, 16
        %v2492 = vrot.slane %v2490, 7
        %v2493 = vshll.u32 %v2304, 16
        %v2495 = vor.u32 %v2492, %v2493
        %v2496 = vsel %vm2308, %v2484, %v2495
        %v2498 = vshrl.u32 %v2305, 16
        %v2500 = vrot.slane %v2498, 7
        %v2501 = vshll.u32 %v2305, 16
        %v2503 = vor.u32 %v2500, %v2501
        %v2504 = vsel %vm2308, %v2492, %v2503
        %v2506 = vsel %vm686, %v2320, 0
        %v2509 = vsel %vm686, %v2328, 0
        %v2512 = vsel %vm686, %v2336, 0
        %v2515 = vsel %vm686, %v2344, 0
        %v2518 = vsel %vm686, %v2352, 0
        %v2521 = vsel %vm686, %v2360, 0
        %v2524 = vsel %vm686, %v2368, 0
        %v2527 = vsel %vm686, %v2376, 0
        %v2530 = vsel %vm686, %v2384, 0
        %v2533 = vsel %vm686, %v2392, 0
        %v2536 = vsel %vm686, %v2400, 0
        %v2539 = vsel %vm686, %v2408, 0
        %v2542 = vsel %vm686, %v2416, 0
        %v2545 = vsel %vm686, %v2424, 0
        %v2548 = vsel %vm686, %v2432, 0
        %v2551 = vsel %vm686, %v2440, 0
        %v2554 = vsel %vm686, %v2448, 0
        %v2557 = vsel %vm686, %v2456, 0
        %v2560 = vsel %vm686, %v2464, 0
        %v2563 = vsel %vm686, %v2472, 0
        %v2566 = vsel %vm686, %v2480, 0
        %v2569 = vsel %vm686, %v2488, 0
        %v2572 = vsel %vm686, %v2496, 0
        %v2575 = vsel %vm686, %v2504, 0
        %v2578 = vand.u32 %v2307, %v762
        %2580 = vmatprep.subr.bf16.mxu0 0
        %2581 = vmatpush1.bf16.msra.mxu0 %v2578
        %2582 = vmatprep.subr.bf16.mxu0 0
        %2583 = vmatpush1.bf16.msra.mxu0 0
        %2584 = vmatprep.subr.bf16.mxu0 0
        %2585 = vmatpush1.bf16.msra.mxu0 0
        %2586 = vmatprep.subr.bf16.mxu0 0
        %2587 = vmatpush1.bf16.msra.mxu0 0
        %2588 = vmatprep.subr.bf16.mxu0 0
        %2589 = vmatpush1.bf16.msra.mxu0 0
        %2590 = vmatprep.subr.bf16.mxu0 0
        %2591 = vmatpush1.bf16.msra.mxu0 0
        %2592 = vmatprep.subr.bf16.mxu0 0
        %2593 = vmatpush1.bf16.msra.mxu0 0
        %2594 = vmatprep.subr.bf16.mxu0 0
        %2595 = vmatpush1.bf16.msra.mxu0 0
        %2596 = vmatprep.subr.bf16.mxu0 0
        %2597 = vmatpush1.bf16.msra.mxu0 0
        %2598 = vmatprep.subr.bf16.mxu0 0
        %2599 = vmatpush1.bf16.msra.mxu0 0
        %2600 = vmatprep.subr.bf16.mxu0 0
        %2601 = vmatpush1.bf16.msra.mxu0 0
        %2602 = vmatprep.subr.bf16.mxu0 0
        %2603 = vmatpush1.bf16.msra.mxu0 0
        %2604 = vmatprep.subr.bf16.mxu0 0
        %2605 = vmatpush1.bf16.msra.mxu0 0
        %2606 = vmatprep.subr.bf16.mxu0 0
        %2607 = vmatpush1.bf16.msra.mxu0 0
        %2608 = vmatprep.subr.bf16.mxu0 0
        %2609 = vmatpush1.bf16.msra.mxu0 0
        %2610 = vmatprep.subr.bf16.mxu0 0
        %2611 = vmatpush1.bf16.msra.mxu0 0
        %2612 = vmatprep.mubr.bf16.mxu0 0
        %2613 = vmatmul.mubr.bf16.gmra.mrb[0].mxu0 %v2506
        %v2614 = vpop.f32.mrb[0].mxu0
        %v2615 = vadd.f32 0.0, %v2614
        %v2616 = vpop.f32.mrb[0].mxu0
        %v2617 = vpop.f32.mrb[0].mxu0
        %v2618 = vadd.f32 0.0, %v2617
        %v2619 = vpop.f32.mrb[0].mxu0
        %2620 = vmatprep.mubr.bf16.mxu0 0
        %2621 = vmatmul.mubr.bf16.gmra.mrb[0].mxu0 %v2509
        %v2622 = vpop.f32.mrb[0].mxu0
        %v2623 = vadd.f32 0.0, %v2622
        %v2624 = vpop.f32.mrb[0].mxu0
        %v2625 = vpop.f32.mrb[0].mxu0
        %v2626 = vadd.f32 0.0, %v2625
        %v2627 = vpop.f32.mrb[0].mxu0
        %2628 = vmatprep.mubr.bf16.mxu0 0
        %2629 = vmatmul.mubr.bf16.gmra.mrb[0].mxu0 %v2512
        %v2630 = vpop.f32.mrb[0].mxu0
        %v2631 = vadd.f32 0.0, %v2630
        %v2632 = vpop.f32.mrb[0].mxu0
        %v2633 = vpop.f32.mrb[0].mxu0
        %v2634 = vadd.f32 0.0, %v2633
        %v2635 = vpop.f32.mrb[0].mxu0
        %2636 = vmatprep.mubr.bf16.mxu0 0
        %2637 = vmatmul.mubr.bf16.gmra.mrb[0].mxu0 %v2515
        %v2638 = vpop.f32.mrb[0].mxu0
        %v2639 = vadd.f32 0.0, %v2638
        %v2640 = vpop.f32.mrb[0].mxu0
        %v2641 = vpop.f32.mrb[0].mxu0
        %v2642 = vadd.f32 0.0, %v2641
        %v2643 = vpop.f32.mrb[0].mxu0
        %2644 = vmatprep.mubr.bf16.mxu0 0
        %2645 = vmatmul.mubr.bf16.gmra.mrb[0].mxu0 %v2518
        %v2646 = vpop.f32.mrb[0].mxu0
        %v2647 = vadd.f32 0.0, %v2646
        %v2648 = vpop.f32.mrb[0].mxu0
        %v2649 = vpop.f32.mrb[0].mxu0
        %v2650 = vadd.f32 0.0, %v2649
        %v2651 = vpop.f32.mrb[0].mxu0
        %2652 = vmatprep.mubr.bf16.mxu0 0
        %2653 = vmatmul.mubr.bf16.gmra.mrb[0].mxu0 %v2521
        %v2654 = vpop.f32.mrb[0].mxu0
        %v2655 = vadd.f32 0.0, %v2654
        %v2656 = vpop.f32.mrb[0].mxu0
        %v2657 = vpop.f32.mrb[0].mxu0
        %v2658 = vadd.f32 0.0, %v2657
        %v2659 = vpop.f32.mrb[0].mxu0
        %2660 = vmatprep.mubr.bf16.mxu0 0
        %2661 = vmatmul.mubr.bf16.gmra.mrb[0].mxu0 %v2524
        %v2662 = vpop.f32.mrb[0].mxu0
        %v2663 = vadd.f32 0.0, %v2662
        %v2664 = vpop.f32.mrb[0].mxu0
        %v2665 = vpop.f32.mrb[0].mxu0
        %v2666 = vadd.f32 0.0, %v2665
        %v2667 = vpop.f32.mrb[0].mxu0
        %2668 = vmatprep.mubr.bf16.mxu0 0
        %2669 = vmatmul.mubr.bf16.gmra.mrb[0].mxu0 %v2527
        %v2670 = vpop.f32.mrb[0].mxu0
        %v2671 = vadd.f32 0.0, %v2670
        %v2672 = vpop.f32.mrb[0].mxu0
        %v2673 = vpop.f32.mrb[0].mxu0
        %v2674 = vadd.f32 0.0, %v2673
        %v2675 = vpop.f32.mrb[0].mxu0
        %2676 = vmatprep.mubr.bf16.mxu0 0
        %2677 = vmatmul.mubr.bf16.gmra.mrb[0].mxu0 %v2530
        %v2678 = vpop.f32.mrb[0].mxu0
        %v2679 = vadd.f32 0.0, %v2678
        %v2680 = vpop.f32.mrb[0].mxu0
        %v2681 = vpop.f32.mrb[0].mxu0
        %v2682 = vadd.f32 0.0, %v2681
        %v2683 = vpop.f32.mrb[0].mxu0
        %2684 = vmatprep.mubr.bf16.mxu0 0
        %2685 = vmatmul.mubr.bf16.gmra.mrb[0].mxu0 %v2533
        %v2686 = vpop.f32.mrb[0].mxu0
        %v2687 = vadd.f32 0.0, %v2686
        %v2688 = vpop.f32.mrb[0].mxu0
        %v2689 = vpop.f32.mrb[0].mxu0
        %v2690 = vadd.f32 0.0, %v2689
        %v2691 = vpop.f32.mrb[0].mxu0
        %2692 = vmatprep.mubr.bf16.mxu0 0
        %2693 = vmatmul.mubr.bf16.gmra.mrb[0].mxu0 %v2536
        %v2694 = vpop.f32.mrb[0].mxu0
        %v2695 = vadd.f32 0.0, %v2694
        %v2696 = vpop.f32.mrb[0].mxu0
        %v2697 = vpop.f32.mrb[0].mxu0
        %v2698 = vadd.f32 0.0, %v2697
        %v2699 = vpop.f32.mrb[0].mxu0
        %2700 = vmatprep.mubr.bf16.mxu0 0
        %2701 = vmatmul.mubr.bf16.gmra.mrb[0].mxu0 %v2539
        %v2702 = vpop.f32.mrb[0].mxu0
        %v2703 = vadd.f32 0.0, %v2702
        %v2704 = vpop.f32.mrb[0].mxu0
        %v2705 = vpop.f32.mrb[0].mxu0
        %v2706 = vadd.f32 0.0, %v2705
        %v2707 = vpop.f32.mrb[0].mxu0
        %2708 = vmatprep.mubr.bf16.mxu0 0
        %2709 = vmatmul.mubr.bf16.gmra.mrb[0].mxu0 %v2542
        %v2710 = vpop.f32.mrb[0].mxu0
        %v2711 = vadd.f32 0.0, %v2710
        %v2712 = vpop.f32.mrb[0].mxu0
        %v2713 = vpop.f32.mrb[0].mxu0
        %v2714 = vadd.f32 0.0, %v2713
        %v2715 = vpop.f32.mrb[0].mxu0
        %2716 = vmatprep.mubr.bf16.mxu0 0
        %2717 = vmatmul.mubr.bf16.gmra.mrb[0].mxu0 %v2545
        %v2718 = vpop.f32.mrb[0].mxu0
        %v2719 = vadd.f32 0.0, %v2718
        %v2720 = vpop.f32.mrb[0].mxu0
        %v2721 = vpop.f32.mrb[0].mxu0
        %v2722 = vadd.f32 0.0, %v2721
        %v2723 = vpop.f32.mrb[0].mxu0
        %2724 = vmatprep.mubr.bf16.mxu0 0
        %2725 = vmatmul.mubr.bf16.gmra.mrb[0].mxu0 %v2548
        %v2726 = vpop.f32.mrb[0].mxu0
        %v2727 = vadd.f32 0.0, %v2726
        %v2728 = vpop.f32.mrb[0].mxu0
        %v2729 = vpop.f32.mrb[0].mxu0
        %v2730 = vadd.f32 0.0, %v2729
        %v2731 = vpop.f32.mrb[0].mxu0
        %2732 = vmatprep.mubr.bf16.mxu0 0
        %2733 = vmatmul.mubr.bf16.gmra.mrb[0].mxu0 %v2551
        %v2734 = vpop.f32.mrb[0].mxu0
        %v2735 = vadd.f32 0.0, %v2734
        %v2736 = vpop.f32.mrb[0].mxu0
        %v2737 = vpop.f32.mrb[0].mxu0
        %v2738 = vadd.f32 0.0, %v2737
        %v2739 = vpop.f32.mrb[0].mxu0
        %2740 = vmatprep.mubr.bf16.mxu0 0
        %2741 = vmatmul.mubr.bf16.gmra.mrb[0].mxu0 %v2554
        %v2742 = vpop.f32.mrb[0].mxu0
        %v2743 = vadd.f32 0.0, %v2742
        %v2744 = vpop.f32.mrb[0].mxu0
        %v2745 = vpop.f32.mrb[0].mxu0
        %v2746 = vadd.f32 0.0, %v2745
        %v2747 = vpop.f32.mrb[0].mxu0
        %2748 = vmatprep.mubr.bf16.mxu0 0
        %2749 = vmatmul.mubr.bf16.gmra.mrb[0].mxu0 %v2557
        %v2750 = vpop.f32.mrb[0].mxu0
        %v2751 = vadd.f32 0.0, %v2750
        %v2752 = vpop.f32.mrb[0].mxu0
        %v2753 = vpop.f32.mrb[0].mxu0
        %v2754 = vadd.f32 0.0, %v2753
        %v2755 = vpop.f32.mrb[0].mxu0
        %2756 = vmatprep.mubr.bf16.mxu0 0
        %2757 = vmatmul.mubr.bf16.gmra.mrb[0].mxu0 %v2560
        %v2758 = vpop.f32.mrb[0].mxu0
        %v2759 = vadd.f32 0.0, %v2758
        %v2760 = vpop.f32.mrb[0].mxu0
        %v2761 = vpop.f32.mrb[0].mxu0
        %v2762 = vadd.f32 0.0, %v2761
        %v2763 = vpop.f32.mrb[0].mxu0
        %2764 = vmatprep.mubr.bf16.mxu0 0
        %2765 = vmatmul.mubr.bf16.gmra.mrb[0].mxu0 %v2563
        %v2766 = vpop.f32.mrb[0].mxu0
        %v2767 = vadd.f32 0.0, %v2766
        %v2768 = vpop.f32.mrb[0].mxu0
        %v2769 = vpop.f32.mrb[0].mxu0
        %v2770 = vadd.f32 0.0, %v2769
        %v2771 = vpop.f32.mrb[0].mxu0
        %2772 = vmatprep.mubr.bf16.mxu0 0
        %2773 = vmatmul.mubr.bf16.gmra.mrb[0].mxu0 %v2566
        %v2774 = vpop.f32.mrb[0].mxu0
        %v2775 = vadd.f32 0.0, %v2774
        %v2776 = vpop.f32.mrb[0].mxu0
        %v2777 = vpop.f32.mrb[0].mxu0
        %v2778 = vadd.f32 0.0, %v2777
        %v2779 = vpop.f32.mrb[0].mxu0
        %2780 = vmatprep.mubr.bf16.mxu0 0
        %2781 = vmatmul.mubr.bf16.gmra.mrb[0].mxu0 %v2569
        %v2782 = vpop.f32.mrb[0].mxu0
        %v2783 = vadd.f32 0.0, %v2782
        %v2784 = vpop.f32.mrb[0].mxu0
        %v2785 = vpop.f32.mrb[0].mxu0
        %v2786 = vadd.f32 0.0, %v2785
        %v2787 = vpop.f32.mrb[0].mxu0
        %2788 = vmatprep.mubr.bf16.mxu0 0
        %2789 = vmatmul.mubr.bf16.gmra.mrb[0].mxu0 %v2572
        %v2790 = vpop.f32.mrb[0].mxu0
        %v2791 = vadd.f32 0.0, %v2790
        %v2792 = vpop.f32.mrb[0].mxu0
        %v2793 = vpop.f32.mrb[0].mxu0
        %v2794 = vadd.f32 0.0, %v2793
        %v2795 = vpop.f32.mrb[0].mxu0
        %2796 = vmatprep.mubr.bf16.mxu0 0
        %2797 = vmatmul.mubr.bf16.gmra.mrb[0].mxu0 %v2575
        %v2798 = vpop.f32.mrb[0].mxu0
        %v2799 = vadd.f32 0.0, %v2798
        %v2800 = vpop.f32.mrb[0].mxu0
        %v2801 = vpop.f32.mrb[0].mxu0
        %v2802 = vadd.f32 0.0, %v2801
        %v2803 = vpop.f32.mrb[0].mxu0
        %2804 = vdwg.mxu0
        %v2805 = vld [vmem:[#allocation3] sm:$0xff]
        %v2806 = vld [vmem:[#allocation3 + $0x8] sm:$0xff]
        %v2807 = vld [vmem:[#allocation3 + $0x10] sm:$0xff]
        %v2808 = vld [vmem:[#allocation3 + $0x18] sm:$0xff]
        %v2809 = vld [vmem:[#allocation3 + $0x20] sm:$0xff]
        %v2810 = vld [vmem:[#allocation3 + $0x28] sm:$0xff]
        %v2811 = vld [vmem:[#allocation3 + $0x30] sm:$0xff]
        %v2812 = vld [vmem:[#allocation3 + $0x38] sm:$0xff]
        %v2813 = vld [vmem:[#allocation3 + $0x40] sm:$0xff]
        %v2814 = vld [vmem:[#allocation3 + $0x48] sm:$0xff]
        %v2815 = vld [vmem:[#allocation3 + $0x50] sm:$0xff]
        %v2816 = vld [vmem:[#allocation3 + $0x58] sm:$0xff]
        %v2817 = vld [vmem:[#allocation3 + $0x60] sm:$0xff]
        %v2818 = vld [vmem:[#allocation3 + $0x68] sm:$0xff]
        %v2819 = vld [vmem:[#allocation3 + $0x70] sm:$0xff]
        %v2820 = vld [vmem:[#allocation3 + $0x78] sm:$0xff]
        %v2821 = vld [vmem:[#allocation3 + $0x80] sm:$0xff]
        %v2822 = vld [vmem:[#allocation3 + $0x88] sm:$0xff]
        %v2823 = vld [vmem:[#allocation3 + $0x90] sm:$0xff]
        %v2824 = vld [vmem:[#allocation3 + $0x98] sm:$0xff]
        %v2825 = vld [vmem:[#allocation3 + $0xa0] sm:$0xff]
        %v2826 = vld [vmem:[#allocation3 + $0xa8] sm:$0xff]
        %v2827 = vld [vmem:[#allocation3 + $0xb0] sm:$0xff]
        %v2828 = vld [vmem:[#allocation3 + $0xb8] sm:$0xff]
        %v2829 = vld [vmem:[#allocation3 + $0xc0] sm:$0xff]
        %v2830 = vld [vmem:[#allocation3 + $0xc8] sm:$0xff]
        %v2831 = vld [vmem:[#allocation3 + $0xd0] sm:$0xff]
        %v2832 = vld [vmem:[#allocation3 + $0xd8] sm:$0xff]
        %v2833 = vld [vmem:[#allocation3 + $0xe0] sm:$0xff]
        %v2834 = vld [vmem:[#allocation3 + $0xe8] sm:$0xff]
        %v2835 = vld [vmem:[#allocation3 + $0xf0] sm:$0xff]
        %v2836 = vld [vmem:[#allocation3 + $0xf8] sm:$0xff]
        %v2837 = vld [vmem:[#allocation3 + $0x100] sm:$0xff]
        %v2838 = vld [vmem:[#allocation3 + $0x108] sm:$0xff]
        %v2839 = vld [vmem:[#allocation3 + $0x110] sm:$0xff]
        %v2840 = vld [vmem:[#allocation3 + $0x118] sm:$0xff]
        %v2841 = vld [vmem:[#allocation3 + $0x120] sm:$0xff]
        %v2842 = vld [vmem:[#allocation3 + $0x128] sm:$0xff]
        %v2843 = vld [vmem:[#allocation3 + $0x130] sm:$0xff]
        %v2844 = vld [vmem:[#allocation3 + $0x138] sm:$0xff]
        %v2845 = vld [vmem:[#allocation3 + $0x140] sm:$0xff]
        %v2846 = vld [vmem:[#allocation3 + $0x148] sm:$0xff]
        %v2847 = vld [vmem:[#allocation3 + $0x150] sm:$0xff]
        %v2848 = vld [vmem:[#allocation3 + $0x158] sm:$0xff]
        %v2849 = vld [vmem:[#allocation3 + $0x160] sm:$0xff]
        %v2850 = vld [vmem:[#allocation3 + $0x168] sm:$0xff]
        %v2851 = vld [vmem:[#allocation3 + $0x170] sm:$0xff]
        %v2852 = vld [vmem:[#allocation3 + $0x178] sm:$0xff]
        %v2853 = vadd.f32 %v2805, %v2615
        %v2854 = vadd.f32 %v2806, %v2618
        %v2855 = vadd.f32 %v2807, %v2623
        %v2856 = vadd.f32 %v2808, %v2626
        %v2857 = vadd.f32 %v2809, %v2631
        %v2858 = vadd.f32 %v2810, %v2634
        %v2859 = vadd.f32 %v2811, %v2639
        %v2860 = vadd.f32 %v2812, %v2642
        %v2861 = vadd.f32 %v2813, %v2647
        %v2862 = vadd.f32 %v2814, %v2650
        %v2863 = vadd.f32 %v2815, %v2655
        %v2864 = vadd.f32 %v2816, %v2658
        %v2865 = vadd.f32 %v2817, %v2663
        %v2866 = vadd.f32 %v2818, %v2666
        %v2867 = vadd.f32 %v2819, %v2671
        %v2868 = vadd.f32 %v2820, %v2674
        %v2869 = vadd.f32 %v2821, %v2679
        %v2870 = vadd.f32 %v2822, %v2682
        %v2871 = vadd.f32 %v2823, %v2687
        %v2872 = vadd.f32 %v2824, %v2690
        %v2873 = vadd.f32 %v2825, %v2695
        %v2874 = vadd.f32 %v2826, %v2698
        %v2875 = vadd.f32 %v2827, %v2703
        %v2876 = vadd.f32 %v2828, %v2706
        %v2877 = vadd.f32 %v2829, %v2711
        %v2878 = vadd.f32 %v2830, %v2714
        %v2879 = vadd.f32 %v2831, %v2719
        %v2880 = vadd.f32 %v2832, %v2722
        %v2881 = vadd.f32 %v2833, %v2727
        %v2882 = vadd.f32 %v2834, %v2730
        %v2883 = vadd.f32 %v2835, %v2735
        %v2884 = vadd.f32 %v2836, %v2738
        %v2885 = vadd.f32 %v2837, %v2743
        %v2886 = vadd.f32 %v2838, %v2746
        %v2887 = vadd.f32 %v2839, %v2751
        %v2888 = vadd.f32 %v2840, %v2754
        %v2889 = vadd.f32 %v2841, %v2759
        %v2890 = vadd.f32 %v2842, %v2762
        %v2891 = vadd.f32 %v2843, %v2767
        %v2892 = vadd.f32 %v2844, %v2770
        %v2893 = vadd.f32 %v2845, %v2775
        %v2894 = vadd.f32 %v2846, %v2778
        %v2895 = vadd.f32 %v2847, %v2783
        %v2896 = vadd.f32 %v2848, %v2786
        %v2897 = vadd.f32 %v2849, %v2791
        %v2898 = vadd.f32 %v2850, %v2794
        %v2899 = vadd.f32 %v2851, %v2799
        %v2900 = vadd.f32 %v2852, %v2802
        %2901 = vst [vmem:[#allocation3] sm:$0xff] %v2853
        %2902 = vst [vmem:[#allocation3 + $0x8] sm:$0xff] %v2854
        %2903 = vst [vmem:[#allocation3 + $0x10] sm:$0xff] %v2855
        %2904 = vst [vmem:[#allocation3 + $0x18] sm:$0xff] %v2856
        %2905 = vst [vmem:[#allocation3 + $0x20] sm:$0xff] %v2857
        %2906 = vst [vmem:[#allocation3 + $0x28] sm:$0xff] %v2858
        %2907 = vst [vmem:[#allocation3 + $0x30] sm:$0xff] %v2859
        %2908 = vst [vmem:[#allocation3 + $0x38] sm:$0xff] %v2860
        %2909 = vst [vmem:[#allocation3 + $0x40] sm:$0xff] %v2861
        %2910 = vst [vmem:[#allocation3 + $0x48] sm:$0xff] %v2862
        %2911 = vst [vmem:[#allocation3 + $0x50] sm:$0xff] %v2863
        %2912 = vst [vmem:[#allocation3 + $0x58] sm:$0xff] %v2864
        %2913 = vst [vmem:[#allocation3 + $0x60] sm:$0xff] %v2865
        %2914 = vst [vmem:[#allocation3 + $0x68] sm:$0xff] %v2866
        %2915 = vst [vmem:[#allocation3 + $0x70] sm:$0xff] %v2867
        %2916 = vst [vmem:[#allocation3 + $0x78] sm:$0xff] %v2868
        %2917 = vst [vmem:[#allocation3 + $0x80] sm:$0xff] %v2869
        %2918 = vst [vmem:[#allocation3 + $0x88] sm:$0xff] %v2870
        %2919 = vst [vmem:[#allocation3 + $0x90] sm:$0xff] %v2871
        %2920 = vst [vmem:[#allocation3 + $0x98] sm:$0xff] %v2872
        %2921 = vst [vmem:[#allocation3 + $0xa0] sm:$0xff] %v2873
        %2922 = vst [vmem:[#allocation3 + $0xa8] sm:$0xff] %v2874
        %2923 = vst [vmem:[#allocation3 + $0xb0] sm:$0xff] %v2875
        %2924 = vst [vmem:[#allocation3 + $0xb8] sm:$0xff] %v2876
        %2925 = vst [vmem:[#allocation3 + $0xc0] sm:$0xff] %v2877
        %2926 = vst [vmem:[#allocation3 + $0xc8] sm:$0xff] %v2878
        %2927 = vst [vmem:[#allocation3 + $0xd0] sm:$0xff] %v2879
        %2928 = vst [vmem:[#allocation3 + $0xd8] sm:$0xff] %v2880
        %2929 = vst [vmem:[#allocation3 + $0xe0] sm:$0xff] %v2881
        %2930 = vst [vmem:[#allocation3 + $0xe8] sm:$0xff] %v2882
        %2931 = vst [vmem:[#allocation3 + $0xf0] sm:$0xff] %v2883
        %2932 = vst [vmem:[#allocation3 + $0xf8] sm:$0xff] %v2884
        %2933 = vst [vmem:[#allocation3 + $0x100] sm:$0xff] %v2885
        %2934 = vst [vmem:[#allocation3 + $0x108] sm:$0xff] %v2886
        %2935 = vst [vmem:[#allocation3 + $0x110] sm:$0xff] %v2887
        %2936 = vst [vmem:[#allocation3 + $0x118] sm:$0xff] %v2888
        %2937 = vst [vmem:[#allocation3 + $0x120] sm:$0xff] %v2889
        %2938 = vst [vmem:[#allocation3 + $0x128] sm:$0xff] %v2890
        %2939 = vst [vmem:[#allocation3 + $0x130] sm:$0xff] %v2891
        %2940 = vst [vmem:[#allocation3 + $0x138] sm:$0xff] %v2892
        %2941 = vst [vmem:[#allocation3 + $0x140] sm:$0xff] %v2893
        %2942 = vst [vmem:[#allocation3 + $0x148] sm:$0xff] %v2894
        %2943 = vst [vmem:[#allocation3 + $0x150] sm:$0xff] %v2895
        %2944 = vst [vmem:[#allocation3 + $0x158] sm:$0xff] %v2896
        %2945 = vst [vmem:[#allocation3 + $0x160] sm:$0xff] %v2897
        %2946 = vst [vmem:[#allocation3 + $0x168] sm:$0xff] %v2898
        %2947 = vst [vmem:[#allocation3 + $0x170] sm:$0xff] %v2899
        %2948 = vst [vmem:[#allocation3 + $0x178] sm:$0xff] %v2900
        %v2949 = vld [vmem:[#allocation2 + $0x18] sm:$0xff]
        %v2950 = vld [vmem:[#allocation2 + $0x20] sm:$0xff]
        %v2951 = vld [vmem:[#allocation2 + $0x28] sm:$0xff]
        %v2952 = vld [vmem:[#allocation2 + $0x30] sm:$0xff]
        %v2953 = vld [vmem:[#allocation2 + $0x38] sm:$0xff]
        %v2954 = vld [vmem:[#allocation2 + $0x40] sm:$0xff]
        %v2955 = vld [vmem:[#allocation2 + $0x48] sm:$0xff]
        %v2956 = vld [vmem:[#allocation2 + $0x50] sm:$0xff]
        %v2957 = vld [vmem:[#allocation2 + $0x58] sm:$0xff]
        %v2958 = vld [vmem:[#allocation2 + $0x60] sm:$0xff]
        %v2959 = vld [vmem:[#allocation2 + $0x68] sm:$0xff]
        %v2960 = vld [vmem:[#allocation2 + $0x70] sm:$0xff]
        %v2961 = vld [vmem:[#allocation2 + $0x78] sm:$0xff]
        %v2962 = vld [vmem:[#allocation2 + $0x80] sm:$0xff]
        %v2963 = vld [vmem:[#allocation2 + $0x88] sm:$0xff]
        %v2964 = vld [vmem:[#allocation2 + $0x90] sm:$0xff]
        %v2965 = vld [vmem:[#allocation2 + $0x98] sm:$0xff]
        %v2966 = vld [vmem:[#allocation2 + $0xa0] sm:$0xff]
        %v2967 = vld [vmem:[#allocation2 + $0xa8] sm:$0xff]
        %v2968 = vld [vmem:[#allocation2 + $0xb0] sm:$0xff]
        %v2969 = vld [vmem:[#allocation2 + $0xb8] sm:$0xff]
        %v2970 = vld [vmem:[#allocation2 + $0xc0] sm:$0xff]
        %v2971 = vld [vmem:[#allocation2 + $0xc8] sm:$0xff]
        %v2972 = vld [vmem:[#allocation2 + $0xd0] sm:$0xff]
        %s2973 = scalar_lea.vmem %s210, 8
        %v2974 = vld [vmem:[%s2973] sm:$0x3]
        %v2976 = vsel %vm686, %v2949, 0
        %v2979 = vsel %vm686, %v2950, 0
        %v2982 = vsel %vm686, %v2951, 0
        %v2985 = vsel %vm686, %v2952, 0
        %v2988 = vsel %vm686, %v2953, 0
        %v2991 = vsel %vm686, %v2954, 0
        %v2994 = vsel %vm686, %v2955, 0
        %v2997 = vsel %vm686, %v2956, 0
        %v3000 = vsel %vm686, %v2957, 0
        %v3003 = vsel %vm686, %v2958, 0
        %v3006 = vsel %vm686, %v2959, 0
        %v3009 = vsel %vm686, %v2960, 0
        %v3012 = vsel %vm686, %v2961, 0
        %v3015 = vsel %vm686, %v2962, 0
        %v3018 = vsel %vm686, %v2963, 0
        %v3021 = vsel %vm686, %v2964, 0
        %v3024 = vsel %vm686, %v2965, 0
        %v3027 = vsel %vm686, %v2966, 0
        %v3030 = vsel %vm686, %v2967, 0
        %v3033 = vsel %vm686, %v2968, 0
        %v3036 = vsel %vm686, %v2969, 0
        %v3039 = vsel %vm686, %v2970, 0
        %v3042 = vsel %vm686, %v2971, 0
        %v3045 = vsel %vm686, %v2972, 0
        %v3048 = vand.u32 %v2974, %v762
        %3050 = vmatprep.subr.bf16.mxu0 0
        %3051 = vmatpush1.bf16.msra.mxu0 %v3048
        %3052 = vmatprep.subr.bf16.mxu0 0
        %3053 = vmatpush1.bf16.msra.mxu0 0
        %3054 = vmatprep.subr.bf16.mxu0 0
        %3055 = vmatpush1.bf16.msra.mxu0 0
        %3056 = vmatprep.subr.bf16.mxu0 0
        %3057 = vmatpush1.bf16.msra.mxu0 0
        %3058 = vmatprep.subr.bf16.mxu0 0
        %3059 = vmatpush1.bf16.msra.mxu0 0
        %3060 = vmatprep.subr.bf16.mxu0 0
        %3061 = vmatpush1.bf16.msra.mxu0 0
        %3062 = vmatprep.subr.bf16.mxu0 0
        %3063 = vmatpush1.bf16.msra.mxu0 0
        %3064 = vmatprep.subr.bf16.mxu0 0
        %3065 = vmatpush1.bf16.msra.mxu0 0
        %3066 = vmatprep.subr.bf16.mxu0 0
        %3067 = vmatpush1.bf16.msra.mxu0 0
        %3068 = vmatprep.subr.bf16.mxu0 0
        %3069 = vmatpush1.bf16.msra.mxu0 0
        %3070 = vmatprep.subr.bf16.mxu0 0
        %3071 = vmatpush1.bf16.msra.mxu0 0
        %3072 = vmatprep.subr.bf16.mxu0 0
        %3073 = vmatpush1.bf16.msra.mxu0 0
        %3074 = vmatprep.subr.bf16.mxu0 0
        %3075 = vmatpush1.bf16.msra.mxu0 0
        %3076 = vmatprep.subr.bf16.mxu0 0
        %3077 = vmatpush1.bf16.msra.mxu0 0
        %3078 = vmatprep.subr.bf16.mxu0 0
        %3079 = vmatpush1.bf16.msra.mxu0 0
        %3080 = vmatprep.subr.bf16.mxu0 0
        %3081 = vmatpush1.bf16.msra.mxu0 0
        %3082 = vmatprep.mubr.bf16.mxu0 0
        %3083 = vmatmul.mubr.bf16.gmra.mrb[0].mxu0 %v2976
        %v3084 = vpop.f32.mrb[0].mxu0
        %v3085 = vadd.f32 0.0, %v3084
        %v3086 = vpop.f32.mrb[0].mxu0
        %v3087 = vpop.f32.mrb[0].mxu0
        %v3088 = vadd.f32 0.0, %v3087
        %v3089 = vpop.f32.mrb[0].mxu0
        %3090 = vmatprep.mubr.bf16.mxu0 0
        %3091 = vmatmul.mubr.bf16.gmra.mrb[0].mxu0 %v2979
        %v3092 = vpop.f32.mrb[0].mxu0
        %v3093 = vadd.f32 0.0, %v3092
        %v3094 = vpop.f32.mrb[0].mxu0
        %v3095 = vpop.f32.mrb[0].mxu0
        %v3096 = vadd.f32 0.0, %v3095
        %v3097 = vpop.f32.mrb[0].mxu0
        %3098 = vmatprep.mubr.bf16.mxu0 0
        %3099 = vmatmul.mubr.bf16.gmra.mrb[0].mxu0 %v2982
        %v3100 = vpop.f32.mrb[0].mxu0
        %v3101 = vadd.f32 0.0, %v3100
        %v3102 = vpop.f32.mrb[0].mxu0
        %v3103 = vpop.f32.mrb[0].mxu0
        %v3104 = vadd.f32 0.0, %v3103
        %v3105 = vpop.f32.mrb[0].mxu0
        %3106 = vmatprep.mubr.bf16.mxu0 0
        %3107 = vmatmul.mubr.bf16.gmra.mrb[0].mxu0 %v2985
        %v3108 = vpop.f32.mrb[0].mxu0
        %v3109 = vadd.f32 0.0, %v3108
        %v3110 = vpop.f32.mrb[0].mxu0
        %v3111 = vpop.f32.mrb[0].mxu0
        %v3112 = vadd.f32 0.0, %v3111
        %v3113 = vpop.f32.mrb[0].mxu0
        %3114 = vmatprep.mubr.bf16.mxu0 0
        %3115 = vmatmul.mubr.bf16.gmra.mrb[0].mxu0 %v2988
        %v3116 = vpop.f32.mrb[0].mxu0
        %v3117 = vadd.f32 0.0, %v3116
        %v3118 = vpop.f32.mrb[0].mxu0
        %v3119 = vpop.f32.mrb[0].mxu0
        %v3120 = vadd.f32 0.0, %v3119
        %v3121 = vpop.f32.mrb[0].mxu0
        %3122 = vmatprep.mubr.bf16.mxu0 0
        %3123 = vmatmul.mubr.bf16.gmra.mrb[0].mxu0 %v2991
        %v3124 = vpop.f32.mrb[0].mxu0
        %v3125 = vadd.f32 0.0, %v3124
        %v3126 = vpop.f32.mrb[0].mxu0
        %v3127 = vpop.f32.mrb[0].mxu0
        %v3128 = vadd.f32 0.0, %v3127
        %v3129 = vpop.f32.mrb[0].mxu0
        %3130 = vmatprep.mubr.bf16.mxu0 0
        %3131 = vmatmul.mubr.bf16.gmra.mrb[0].mxu0 %v2994
        %v3132 = vpop.f32.mrb[0].mxu0
        %v3133 = vadd.f32 0.0, %v3132
        %v3134 = vpop.f32.mrb[0].mxu0
        %v3135 = vpop.f32.mrb[0].mxu0
        %v3136 = vadd.f32 0.0, %v3135
        %v3137 = vpop.f32.mrb[0].mxu0
        %3138 = vmatprep.mubr.bf16.mxu0 0
        %3139 = vmatmul.mubr.bf16.gmra.mrb[0].mxu0 %v2997
        %v3140 = vpop.f32.mrb[0].mxu0
        %v3141 = vadd.f32 0.0, %v3140
        %v3142 = vpop.f32.mrb[0].mxu0
        %v3143 = vpop.f32.mrb[0].mxu0
        %v3144 = vadd.f32 0.0, %v3143
        %v3145 = vpop.f32.mrb[0].mxu0
        %3146 = vmatprep.mubr.bf16.mxu0 0
        %3147 = vmatmul.mubr.bf16.gmra.mrb[0].mxu0 %v3000
        %v3148 = vpop.f32.mrb[0].mxu0
        %v3149 = vadd.f32 0.0, %v3148
        %v3150 = vpop.f32.mrb[0].mxu0
        %v3151 = vpop.f32.mrb[0].mxu0
        %v3152 = vadd.f32 0.0, %v3151
        %v3153 = vpop.f32.mrb[0].mxu0
        %3154 = vmatprep.mubr.bf16.mxu0 0
        %3155 = vmatmul.mubr.bf16.gmra.mrb[0].mxu0 %v3003
        %v3156 = vpop.f32.mrb[0].mxu0
        %v3157 = vadd.f32 0.0, %v3156
        %v3158 = vpop.f32.mrb[0].mxu0
        %v3159 = vpop.f32.mrb[0].mxu0
        %v3160 = vadd.f32 0.0, %v3159
        %v3161 = vpop.f32.mrb[0].mxu0
        %3162 = vmatprep.mubr.bf16.mxu0 0
        %3163 = vmatmul.mubr.bf16.gmra.mrb[0].mxu0 %v3006
        %v3164 = vpop.f32.mrb[0].mxu0
        %v3165 = vadd.f32 0.0, %v3164
        %v3166 = vpop.f32.mrb[0].mxu0
        %v3167 = vpop.f32.mrb[0].mxu0
        %v3168 = vadd.f32 0.0, %v3167
        %v3169 = vpop.f32.mrb[0].mxu0
        %3170 = vmatprep.mubr.bf16.mxu0 0
        %3171 = vmatmul.mubr.bf16.gmra.mrb[0].mxu0 %v3009
        %v3172 = vpop.f32.mrb[0].mxu0
        %v3173 = vadd.f32 0.0, %v3172
        %v3174 = vpop.f32.mrb[0].mxu0
        %v3175 = vpop.f32.mrb[0].mxu0
        %v3176 = vadd.f32 0.0, %v3175
        %v3177 = vpop.f32.mrb[0].mxu0
        %3178 = vmatprep.mubr.bf16.mxu0 0
        %3179 = vmatmul.mubr.bf16.gmra.mrb[0].mxu0 %v3012
        %v3180 = vpop.f32.mrb[0].mxu0
        %v3181 = vadd.f32 0.0, %v3180
        %v3182 = vpop.f32.mrb[0].mxu0
        %v3183 = vpop.f32.mrb[0].mxu0
        %v3184 = vadd.f32 0.0, %v3183
        %v3185 = vpop.f32.mrb[0].mxu0
        %3186 = vmatprep.mubr.bf16.mxu0 0
        %3187 = vmatmul.mubr.bf16.gmra.mrb[0].mxu0 %v3015
        %v3188 = vpop.f32.mrb[0].mxu0
        %v3189 = vadd.f32 0.0, %v3188
        %v3190 = vpop.f32.mrb[0].mxu0
        %v3191 = vpop.f32.mrb[0].mxu0
        %v3192 = vadd.f32 0.0, %v3191
        %v3193 = vpop.f32.mrb[0].mxu0
        %3194 = vmatprep.mubr.bf16.mxu0 0
        %3195 = vmatmul.mubr.bf16.gmra.mrb[0].mxu0 %v3018
        %v3196 = vpop.f32.mrb[0].mxu0
        %v3197 = vadd.f32 0.0, %v3196
        %v3198 = vpop.f32.mrb[0].mxu0
        %v3199 = vpop.f32.mrb[0].mxu0
        %v3200 = vadd.f32 0.0, %v3199
        %v3201 = vpop.f32.mrb[0].mxu0
        %3202 = vmatprep.mubr.bf16.mxu0 0
        %3203 = vmatmul.mubr.bf16.gmra.mrb[0].mxu0 %v3021
        %v3204 = vpop.f32.mrb[0].mxu0
        %v3205 = vadd.f32 0.0, %v3204
        %v3206 = vpop.f32.mrb[0].mxu0
        %v3207 = vpop.f32.mrb[0].mxu0
        %v3208 = vadd.f32 0.0, %v3207
        %v3209 = vpop.f32.mrb[0].mxu0
        %3210 = vmatprep.mubr.bf16.mxu0 0
        %3211 = vmatmul.mubr.bf16.gmra.mrb[0].mxu0 %v3024
        %v3212 = vpop.f32.mrb[0].mxu0
        %v3213 = vadd.f32 0.0, %v3212
        %v3214 = vpop.f32.mrb[0].mxu0
        %v3215 = vpop.f32.mrb[0].mxu0
        %v3216 = vadd.f32 0.0, %v3215
        %v3217 = vpop.f32.mrb[0].mxu0
        %3218 = vmatprep.mubr.bf16.mxu0 0
        %3219 = vmatmul.mubr.bf16.gmra.mrb[0].mxu0 %v3027
        %v3220 = vpop.f32.mrb[0].mxu0
        %v3221 = vadd.f32 0.0, %v3220
        %v3222 = vpop.f32.mrb[0].mxu0
        %v3223 = vpop.f32.mrb[0].mxu0
        %v3224 = vadd.f32 0.0, %v3223
        %v3225 = vpop.f32.mrb[0].mxu0
        %3226 = vmatprep.mubr.bf16.mxu0 0
        %3227 = vmatmul.mubr.bf16.gmra.mrb[0].mxu0 %v3030
        %v3228 = vpop.f32.mrb[0].mxu0
        %v3229 = vadd.f32 0.0, %v3228
        %v3230 = vpop.f32.mrb[0].mxu0
        %v3231 = vpop.f32.mrb[0].mxu0
        %v3232 = vadd.f32 0.0, %v3231
        %v3233 = vpop.f32.mrb[0].mxu0
        %3234 = vmatprep.mubr.bf16.mxu0 0
        %3235 = vmatmul.mubr.bf16.gmra.mrb[0].mxu0 %v3033
        %v3236 = vpop.f32.mrb[0].mxu0
        %v3237 = vadd.f32 0.0, %v3236
        %v3238 = vpop.f32.mrb[0].mxu0
        %v3239 = vpop.f32.mrb[0].mxu0
        %v3240 = vadd.f32 0.0, %v3239
        %v3241 = vpop.f32.mrb[0].mxu0
        %3242 = vmatprep.mubr.bf16.mxu0 0
        %3243 = vmatmul.mubr.bf16.gmra.mrb[0].mxu0 %v3036
        %v3244 = vpop.f32.mrb[0].mxu0
        %v3245 = vadd.f32 0.0, %v3244
        %v3246 = vpop.f32.mrb[0].mxu0
        %v3247 = vpop.f32.mrb[0].mxu0
        %v3248 = vadd.f32 0.0, %v3247
        %v3249 = vpop.f32.mrb[0].mxu0
        %3250 = vmatprep.mubr.bf16.mxu0 0
        %3251 = vmatmul.mubr.bf16.gmra.mrb[0].mxu0 %v3039
        %v3252 = vpop.f32.mrb[0].mxu0
        %v3253 = vadd.f32 0.0, %v3252
        %v3254 = vpop.f32.mrb[0].mxu0
        %v3255 = vpop.f32.mrb[0].mxu0
        %v3256 = vadd.f32 0.0, %v3255
        %v3257 = vpop.f32.mrb[0].mxu0
        %3258 = vmatprep.mubr.bf16.mxu0 0
        %3259 = vmatmul.mubr.bf16.gmra.mrb[0].mxu0 %v3042
        %v3260 = vpop.f32.mrb[0].mxu0
        %v3261 = vadd.f32 0.0, %v3260
        %v3262 = vpop.f32.mrb[0].mxu0
        %v3263 = vpop.f32.mrb[0].mxu0
        %v3264 = vadd.f32 0.0, %v3263
        %v3265 = vpop.f32.mrb[0].mxu0
        %3266 = vmatprep.mubr.bf16.mxu0 0
        %3267 = vmatmul.mubr.bf16.gmra.mrb[0].mxu0 %v3045
        %v3268 = vpop.f32.mrb[0].mxu0
        %v3269 = vadd.f32 0.0, %v3268
        %v3270 = vpop.f32.mrb[0].mxu0
        %v3271 = vpop.f32.mrb[0].mxu0
        %v3272 = vadd.f32 0.0, %v3271
        %v3273 = vpop.f32.mrb[0].mxu0
        %3274 = vdwg.mxu0
        %v3275 = vld [vmem:[#allocation3] sm:$0xff]
        %v3276 = vld [vmem:[#allocation3 + $0x8] sm:$0xff]
        %v3277 = vld [vmem:[#allocation3 + $0x10] sm:$0xff]
        %v3278 = vld [vmem:[#allocation3 + $0x18] sm:$0xff]
        %v3279 = vld [vmem:[#allocation3 + $0x20] sm:$0xff]
        %v3280 = vld [vmem:[#allocation3 + $0x28] sm:$0xff]
        %v3281 = vld [vmem:[#allocation3 + $0x30] sm:$0xff]
        %v3282 = vld [vmem:[#allocation3 + $0x38] sm:$0xff]
        %v3283 = vld [vmem:[#allocation3 + $0x40] sm:$0xff]
        %v3284 = vld [vmem:[#allocation3 + $0x48] sm:$0xff]
        %v3285 = vld [vmem:[#allocation3 + $0x50] sm:$0xff]
        %v3286 = vld [vmem:[#allocation3 + $0x58] sm:$0xff]
        %v3287 = vld [vmem:[#allocation3 + $0x60] sm:$0xff]
        %v3288 = vld [vmem:[#allocation3 + $0x68] sm:$0xff]
        %v3289 = vld [vmem:[#allocation3 + $0x70] sm:$0xff]
        %v3290 = vld [vmem:[#allocation3 + $0x78] sm:$0xff]
        %v3291 = vld [vmem:[#allocation3 + $0x80] sm:$0xff]
        %v3292 = vld [vmem:[#allocation3 + $0x88] sm:$0xff]
        %v3293 = vld [vmem:[#allocation3 + $0x90] sm:$0xff]
        %v3294 = vld [vmem:[#allocation3 + $0x98] sm:$0xff]
        %v3295 = vld [vmem:[#allocation3 + $0xa0] sm:$0xff]
        %v3296 = vld [vmem:[#allocation3 + $0xa8] sm:$0xff]
        %v3297 = vld [vmem:[#allocation3 + $0xb0] sm:$0xff]
        %v3298 = vld [vmem:[#allocation3 + $0xb8] sm:$0xff]
        %v3299 = vld [vmem:[#allocation3 + $0xc0] sm:$0xff]
        %v3300 = vld [vmem:[#allocation3 + $0xc8] sm:$0xff]
        %v3301 = vld [vmem:[#allocation3 + $0xd0] sm:$0xff]
        %v3302 = vld [vmem:[#allocation3 + $0xd8] sm:$0xff]
        %v3303 = vld [vmem:[#allocation3 + $0xe0] sm:$0xff]
        %v3304 = vld [vmem:[#allocation3 + $0xe8] sm:$0xff]
        %v3305 = vld [vmem:[#allocation3 + $0xf0] sm:$0xff]
        %v3306 = vld [vmem:[#allocation3 + $0xf8] sm:$0xff]
        %v3307 = vld [vmem:[#allocation3 + $0x100] sm:$0xff]
        %v3308 = vld [vmem:[#allocation3 + $0x108] sm:$0xff]
        %v3309 = vld [vmem:[#allocation3 + $0x110] sm:$0xff]
        %v3310 = vld [vmem:[#allocation3 + $0x118] sm:$0xff]
        %v3311 = vld [vmem:[#allocation3 + $0x120] sm:$0xff]
        %v3312 = vld [vmem:[#allocation3 + $0x128] sm:$0xff]
        %v3313 = vld [vmem:[#allocation3 + $0x130] sm:$0xff]
        %v3314 = vld [vmem:[#allocation3 + $0x138] sm:$0xff]
        %v3315 = vld [vmem:[#allocation3 + $0x140] sm:$0xff]
        %v3316 = vld [vmem:[#allocation3 + $0x148] sm:$0xff]
        %v3317 = vld [vmem:[#allocation3 + $0x150] sm:$0xff]
        %v3318 = vld [vmem:[#allocation3 + $0x158] sm:$0xff]
        %v3319 = vld [vmem:[#allocation3 + $0x160] sm:$0xff]
        %v3320 = vld [vmem:[#allocation3 + $0x168] sm:$0xff]
        %v3321 = vld [vmem:[#allocation3 + $0x170] sm:$0xff]
        %v3322 = vld [vmem:[#allocation3 + $0x178] sm:$0xff]
        %v3323 = vadd.f32 %v3275, %v3085
        %v3324 = vadd.f32 %v3276, %v3088
        %v3325 = vadd.f32 %v3277, %v3093
        %v3326 = vadd.f32 %v3278, %v3096
        %v3327 = vadd.f32 %v3279, %v3101
        %v3328 = vadd.f32 %v3280, %v3104
        %v3329 = vadd.f32 %v3281, %v3109
        %v3330 = vadd.f32 %v3282, %v3112
        %v3331 = vadd.f32 %v3283, %v3117
        %v3332 = vadd.f32 %v3284, %v3120
        %v3333 = vadd.f32 %v3285, %v3125
        %v3334 = vadd.f32 %v3286, %v3128
        %v3335 = vadd.f32 %v3287, %v3133
        %v3336 = vadd.f32 %v3288, %v3136
        %v3337 = vadd.f32 %v3289, %v3141
        %v3338 = vadd.f32 %v3290, %v3144
        %v3339 = vadd.f32 %v3291, %v3149
        %v3340 = vadd.f32 %v3292, %v3152
        %v3341 = vadd.f32 %v3293, %v3157
        %v3342 = vadd.f32 %v3294, %v3160
        %v3343 = vadd.f32 %v3295, %v3165
        %v3344 = vadd.f32 %v3296, %v3168
        %v3345 = vadd.f32 %v3297, %v3173
        %v3346 = vadd.f32 %v3298, %v3176
        %v3347 = vadd.f32 %v3299, %v3181
        %v3348 = vadd.f32 %v3300, %v3184
        %v3349 = vadd.f32 %v3301, %v3189
        %v3350 = vadd.f32 %v3302, %v3192
        %v3351 = vadd.f32 %v3303, %v3197
        %v3352 = vadd.f32 %v3304, %v3200
        %v3353 = vadd.f32 %v3305, %v3205
        %v3354 = vadd.f32 %v3306, %v3208
        %v3355 = vadd.f32 %v3307, %v3213
        %v3356 = vadd.f32 %v3308, %v3216
        %v3357 = vadd.f32 %v3309, %v3221
        %v3358 = vadd.f32 %v3310, %v3224
        %v3359 = vadd.f32 %v3311, %v3229
        %v3360 = vadd.f32 %v3312, %v3232
        %v3361 = vadd.f32 %v3313, %v3237
        %v3362 = vadd.f32 %v3314, %v3240
        %v3363 = vadd.f32 %v3315, %v3245
        %v3364 = vadd.f32 %v3316, %v3248
        %v3365 = vadd.f32 %v3317, %v3253
        %v3366 = vadd.f32 %v3318, %v3256
        %v3367 = vadd.f32 %v3319, %v3261
        %v3368 = vadd.f32 %v3320, %v3264
        %v3369 = vadd.f32 %v3321, %v3269
        %v3370 = vadd.f32 %v3322, %v3272
        %3371 = vst [vmem:[#allocation3] sm:$0xff] %v3323
        %3372 = vst [vmem:[#allocation3 + $0x8] sm:$0xff] %v3324
        %3373 = vst [vmem:[#allocation3 + $0x10] sm:$0xff] %v3325
        %3374 = vst [vmem:[#allocation3 + $0x18] sm:$0xff] %v3326
        %3375 = vst [vmem:[#allocation3 + $0x20] sm:$0xff] %v3327
        %3376 = vst [vmem:[#allocation3 + $0x28] sm:$0xff] %v3328
        %3377 = vst [vmem:[#allocation3 + $0x30] sm:$0xff] %v3329
        %3378 = vst [vmem:[#allocation3 + $0x38] sm:$0xff] %v3330
        %3379 = vst [vmem:[#allocation3 + $0x40] sm:$0xff] %v3331
        %3380 = vst [vmem:[#allocation3 + $0x48] sm:$0xff] %v3332
        %3381 = vst [vmem:[#allocation3 + $0x50] sm:$0xff] %v3333
        %3382 = vst [vmem:[#allocation3 + $0x58] sm:$0xff] %v3334
        %3383 = vst [vmem:[#allocation3 + $0x60] sm:$0xff] %v3335
        %3384 = vst [vmem:[#allocation3 + $0x68] sm:$0xff] %v3336
        %3385 = vst [vmem:[#allocation3 + $0x70] sm:$0xff] %v3337
        %3386 = vst [vmem:[#allocation3 + $0x78] sm:$0xff] %v3338
        %3387 = vst [vmem:[#allocation3 + $0x80] sm:$0xff] %v3339
        %3388 = vst [vmem:[#allocation3 + $0x88] sm:$0xff] %v3340
        %3389 = vst [vmem:[#allocation3 + $0x90] sm:$0xff] %v3341
        %3390 = vst [vmem:[#allocation3 + $0x98] sm:$0xff] %v3342
        %3391 = vst [vmem:[#allocation3 + $0xa0] sm:$0xff] %v3343
        %3392 = vst [vmem:[#allocation3 + $0xa8] sm:$0xff] %v3344
        %3393 = vst [vmem:[#allocation3 + $0xb0] sm:$0xff] %v3345
        %3394 = vst [vmem:[#allocation3 + $0xb8] sm:$0xff] %v3346
        %3395 = vst [vmem:[#allocation3 + $0xc0] sm:$0xff] %v3347
        %3396 = vst [vmem:[#allocation3 + $0xc8] sm:$0xff] %v3348
        %3397 = vst [vmem:[#allocation3 + $0xd0] sm:$0xff] %v3349
        %3398 = vst [vmem:[#allocation3 + $0xd8] sm:$0xff] %v3350
        %3399 = vst [vmem:[#allocation3 + $0xe0] sm:$0xff] %v3351
        %3400 = vst [vmem:[#allocation3 + $0xe8] sm:$0xff] %v3352
        %3401 = vst [vmem:[#allocation3 + $0xf0] sm:$0xff] %v3353
        %3402 = vst [vmem:[#allocation3 + $0xf8] sm:$0xff] %v3354
        %3403 = vst [vmem:[#allocation3 + $0x100] sm:$0xff] %v3355
        %3404 = vst [vmem:[#allocation3 + $0x108] sm:$0xff] %v3356
        %3405 = vst [vmem:[#allocation3 + $0x110] sm:$0xff] %v3357
        %3406 = vst [vmem:[#allocation3 + $0x118] sm:$0xff] %v3358
        %3407 = vst [vmem:[#allocation3 + $0x120] sm:$0xff] %v3359
        %3408 = vst [vmem:[#allocation3 + $0x128] sm:$0xff] %v3360
        %3409 = vst [vmem:[#allocation3 + $0x130] sm:$0xff] %v3361
        %3410 = vst [vmem:[#allocation3 + $0x138] sm:$0xff] %v3362
        %3411 = vst [vmem:[#allocation3 + $0x140] sm:$0xff] %v3363
        %3412 = vst [vmem:[#allocation3 + $0x148] sm:$0xff] %v3364
        %3413 = vst [vmem:[#allocation3 + $0x150] sm:$0xff] %v3365
        %3414 = vst [vmem:[#allocation3 + $0x158] sm:$0xff] %v3366
        %3415 = vst [vmem:[#allocation3 + $0x160] sm:$0xff] %v3367
        %3416 = vst [vmem:[#allocation3 + $0x168] sm:$0xff] %v3368
        %3417 = vst [vmem:[#allocation3 + $0x170] sm:$0xff] %v3369
        %3418 = vst [vmem:[#allocation3 + $0x178] sm:$0xff] %v3370
        %v3419 = vld [vmem:[#allocation2 + $0x18] sm:$0xff]
        %v3420 = vld [vmem:[#allocation2 + $0x20] sm:$0xff]
        %v3421 = vld [vmem:[#allocation2 + $0x28] sm:$0xff]
        %v3422 = vld [vmem:[#allocation2 + $0x30] sm:$0xff]
        %v3423 = vld [vmem:[#allocation2 + $0x38] sm:$0xff]
        %v3424 = vld [vmem:[#allocation2 + $0x40] sm:$0xff]
        %v3425 = vld [vmem:[#allocation2 + $0x48] sm:$0xff]
        %v3426 = vld [vmem:[#allocation2 + $0x50] sm:$0xff]
        %v3427 = vld [vmem:[#allocation2 + $0x58] sm:$0xff]
        %v3428 = vld [vmem:[#allocation2 + $0x60] sm:$0xff]
        %v3429 = vld [vmem:[#allocation2 + $0x68] sm:$0xff]
        %v3430 = vld [vmem:[#allocation2 + $0x70] sm:$0xff]
        %v3431 = vld [vmem:[#allocation2 + $0x78] sm:$0xff]
        %v3432 = vld [vmem:[#allocation2 + $0x80] sm:$0xff]
        %v3433 = vld [vmem:[#allocation2 + $0x88] sm:$0xff]
        %v3434 = vld [vmem:[#allocation2 + $0x90] sm:$0xff]
        %v3435 = vld [vmem:[#allocation2 + $0x98] sm:$0xff]
        %v3436 = vld [vmem:[#allocation2 + $0xa0] sm:$0xff]
        %v3437 = vld [vmem:[#allocation2 + $0xa8] sm:$0xff]
        %v3438 = vld [vmem:[#allocation2 + $0xb0] sm:$0xff]
        %v3439 = vld [vmem:[#allocation2 + $0xb8] sm:$0xff]
        %v3440 = vld [vmem:[#allocation2 + $0xc0] sm:$0xff]
        %v3441 = vld [vmem:[#allocation2 + $0xc8] sm:$0xff]
        %v3442 = vld [vmem:[#allocation2 + $0xd0] sm:$0xff]
        %v3443 = vld [vmem:[#allocation2 + $0xd8] sm:$0x1]
        %s3444 = scalar_lea.vmem %s210, 10
        %v3445 = vld [vmem:[%s3444] sm:$0x3]
        %vm3446 = vsmask.f32 7424
        %v3448 = vshrl.u32 %v3419, 16
        %v3450 = vshll.u32 %v3419, 16
        %v3452 = vrot.slane %v3450, 1
        %v3453 = vor.u32 %v3448, %v3452
        %v3455 = vshll.u32 %v3420, 16
        %v3457 = vrot.slane %v3455, 1
        %v3458 = vsel %vm3446, %v3453, %v3457
        %v3459 = vshrl.u32 %v3420, 16
        %v3461 = vor.u32 %v3459, %v3457
        %v3463 = vshll.u32 %v3421, 16
        %v3465 = vrot.slane %v3463, 1
        %v3466 = vsel %vm3446, %v3461, %v3465
        %v3467 = vshrl.u32 %v3421, 16
        %v3469 = vor.u32 %v3467, %v3465
        %v3471 = vshll.u32 %v3422, 16
        %v3473 = vrot.slane %v3471, 1
        %v3474 = vsel %vm3446, %v3469, %v3473
        %v3475 = vshrl.u32 %v3422, 16
        %v3477 = vor.u32 %v3475, %v3473
        %v3479 = vshll.u32 %v3423, 16
        %v3481 = vrot.slane %v3479, 1
        %v3482 = vsel %vm3446, %v3477, %v3481
        %v3483 = vshrl.u32 %v3423, 16
        %v3485 = vor.u32 %v3483, %v3481
        %v3487 = vshll.u32 %v3424, 16
        %v3489 = vrot.slane %v3487, 1
        %v3490 = vsel %vm3446, %v3485, %v3489
        %v3491 = vshrl.u32 %v3424, 16
        %v3493 = vor.u32 %v3491, %v3489
        %v3495 = vshll.u32 %v3425, 16
        %v3497 = vrot.slane %v3495, 1
        %v3498 = vsel %vm3446, %v3493, %v3497
        %v3499 = vshrl.u32 %v3425, 16
        %v3501 = vor.u32 %v3499, %v3497
        %v3503 = vshll.u32 %v3426, 16
        %v3505 = vrot.slane %v3503, 1
        %v3506 = vsel %vm3446, %v3501, %v3505
        %v3507 = vshrl.u32 %v3426, 16
        %v3509 = vor.u32 %v3507, %v3505
        %v3511 = vshll.u32 %v3427, 16
        %v3513 = vrot.slane %v3511, 1
        %v3514 = vsel %vm3446, %v3509, %v3513
        %v3515 = vshrl.u32 %v3427, 16
        %v3517 = vor.u32 %v3515, %v3513
        %v3519 = vshll.u32 %v3428, 16
        %v3521 = vrot.slane %v3519, 1
        %v3522 = vsel %vm3446, %v3517, %v3521
        %v3523 = vshrl.u32 %v3428, 16
        %v3525 = vor.u32 %v3523, %v3521
        %v3527 = vshll.u32 %v3429, 16
        %v3529 = vrot.slane %v3527, 1
        %v3530 = vsel %vm3446, %v3525, %v3529
        %v3531 = vshrl.u32 %v3429, 16
        %v3533 = vor.u32 %v3531, %v3529
        %v3535 = vshll.u32 %v3430, 16
        %v3537 = vrot.slane %v3535, 1
        %v3538 = vsel %vm3446, %v3533, %v3537
        %v3539 = vshrl.u32 %v3430, 16
        %v3541 = vor.u32 %v3539, %v3537
        %v3543 = vshll.u32 %v3431, 16
        %v3545 = vrot.slane %v3543, 1
        %v3546 = vsel %vm3446, %v3541, %v3545
        %v3547 = vshrl.u32 %v3431, 16
        %v3549 = vor.u32 %v3547, %v3545
        %v3551 = vshll.u32 %v3432, 16
        %v3553 = vrot.slane %v3551, 1
        %v3554 = vsel %vm3446, %v3549, %v3553
        %v3555 = vshrl.u32 %v3432, 16
        %v3557 = vor.u32 %v3555, %v3553
        %v3559 = vshll.u32 %v3433, 16
        %v3561 = vrot.slane %v3559, 1
        %v3562 = vsel %vm3446, %v3557, %v3561
        %v3563 = vshrl.u32 %v3433, 16
        %v3565 = vor.u32 %v3563, %v3561
        %v3567 = vshll.u32 %v3434, 16
        %v3569 = vrot.slane %v3567, 1
        %v3570 = vsel %vm3446, %v3565, %v3569
        %v3571 = vshrl.u32 %v3434, 16
        %v3573 = vor.u32 %v3571, %v3569
        %v3575 = vshll.u32 %v3435, 16
        %v3577 = vrot.slane %v3575, 1
        %v3578 = vsel %vm3446, %v3573, %v3577
        %v3579 = vshrl.u32 %v3435, 16
        %v3581 = vor.u32 %v3579, %v3577
        %v3583 = vshll.u32 %v3436, 16
        %v3585 = vrot.slane %v3583, 1
        %v3586 = vsel %vm3446, %v3581, %v3585
        %v3587 = vshrl.u32 %v3436, 16
        %v3589 = vor.u32 %v3587, %v3585
        %v3591 = vshll.u32 %v3437, 16
        %v3593 = vrot.slane %v3591, 1
        %v3594 = vsel %vm3446, %v3589, %v3593
        %v3595 = vshrl.u32 %v3437, 16
        %v3597 = vor.u32 %v3595, %v3593
        %v3599 = vshll.u32 %v3438, 16
        %v3601 = vrot.slane %v3599, 1
        %v3602 = vsel %vm3446, %v3597, %v3601
        %v3603 = vshrl.u32 %v3438, 16
        %v3605 = vor.u32 %v3603, %v3601
        %v3607 = vshll.u32 %v3439, 16
        %v3609 = vrot.slane %v3607, 1
        %v3610 = vsel %vm3446, %v3605, %v3609
        %v3611 = vshrl.u32 %v3439, 16
        %v3613 = vor.u32 %v3611, %v3609
        %v3615 = vshll.u32 %v3440, 16
        %v3617 = vrot.slane %v3615, 1
        %v3618 = vsel %vm3446, %v3613, %v3617
        %v3619 = vshrl.u32 %v3440, 16
        %v3621 = vor.u32 %v3619, %v3617
        %v3623 = vshll.u32 %v3441, 16
        %v3625 = vrot.slane %v3623, 1
        %v3626 = vsel %vm3446, %v3621, %v3625
        %v3627 = vshrl.u32 %v3441, 16
        %v3629 = vor.u32 %v3627, %v3625
        %v3631 = vshll.u32 %v3442, 16
        %v3633 = vrot.slane %v3631, 1
        %v3634 = vsel %vm3446, %v3629, %v3633
        %v3635 = vshrl.u32 %v3442, 16
        %v3637 = vor.u32 %v3635, %v3633
        %v3639 = vshll.u32 %v3443, 16
        %v3641 = vrot.slane %v3639, 1
        %v3642 = vsel %vm3446, %v3637, %v3641
        %v3644 = vsel %vm686, %v3458, 0
        %v3647 = vsel %vm686, %v3466, 0
        %v3650 = vsel %vm686, %v3474, 0
        %v3653 = vsel %vm686, %v3482, 0
        %v3656 = vsel %vm686, %v3490, 0
        %v3659 = vsel %vm686, %v3498, 0
        %v3662 = vsel %vm686, %v3506, 0
        %v3665 = vsel %vm686, %v3514, 0
        %v3668 = vsel %vm686, %v3522, 0
        %v3671 = vsel %vm686, %v3530, 0
        %v3674 = vsel %vm686, %v3538, 0
        %v3677 = vsel %vm686, %v3546, 0
        %v3680 = vsel %vm686, %v3554, 0
        %v3683 = vsel %vm686, %v3562, 0
        %v3686 = vsel %vm686, %v3570, 0
        %v3689 = vsel %vm686, %v3578, 0
        %v3692 = vsel %vm686, %v3586, 0
        %v3695 = vsel %vm686, %v3594, 0
        %v3698 = vsel %vm686, %v3602, 0
        %v3701 = vsel %vm686, %v3610, 0
        %v3704 = vsel %vm686, %v3618, 0
        %v3707 = vsel %vm686, %v3626, 0
        %v3710 = vsel %vm686, %v3634, 0
        %v3713 = vsel %vm686, %v3642, 0
        %v3716 = vand.u32 %v3445, %v762
        %3718 = vmatprep.subr.bf16.mxu0 0
        %3719 = vmatpush1.bf16.msra.mxu0 %v3716
        %3720 = vmatprep.subr.bf16.mxu0 0
        %3721 = vmatpush1.bf16.msra.mxu0 0
        %3722 = vmatprep.subr.bf16.mxu0 0
        %3723 = vmatpush1.bf16.msra.mxu0 0
        %3724 = vmatprep.subr.bf16.mxu0 0
        %3725 = vmatpush1.bf16.msra.mxu0 0
        %3726 = vmatprep.subr.bf16.mxu0 0
        %3727 = vmatpush1.bf16.msra.mxu0 0
        %3728 = vmatprep.subr.bf16.mxu0 0
        %3729 = vmatpush1.bf16.msra.mxu0 0
        %3730 = vmatprep.subr.bf16.mxu0 0
        %3731 = vmatpush1.bf16.msra.mxu0 0
        %3732 = vmatprep.subr.bf16.mxu0 0
        %3733 = vmatpush1.bf16.msra.mxu0 0
        %3734 = vmatprep.subr.bf16.mxu0 0
        %3735 = vmatpush1.bf16.msra.mxu0 0
        %3736 = vmatprep.subr.bf16.mxu0 0
        %3737 = vmatpush1.bf16.msra.mxu0 0
        %3738 = vmatprep.subr.bf16.mxu0 0
        %3739 = vmatpush1.bf16.msra.mxu0 0
        %3740 = vmatprep.subr.bf16.mxu0 0
        %3741 = vmatpush1.bf16.msra.mxu0 0
        %3742 = vmatprep.subr.bf16.mxu0 0
        %3743 = vmatpush1.bf16.msra.mxu0 0
        %3744 = vmatprep.subr.bf16.mxu0 0
        %3745 = vmatpush1.bf16.msra.mxu0 0
        %3746 = vmatprep.subr.bf16.mxu0 0
        %3747 = vmatpush1.bf16.msra.mxu0 0
        %3748 = vmatprep.subr.bf16.mxu0 0
        %3749 = vmatpush1.bf16.msra.mxu0 0
        %3750 = vmatprep.mubr.bf16.mxu0 0
        %3751 = vmatmul.mubr.bf16.gmra.mrb[0].mxu0 %v3644
        %v3752 = vpop.f32.mrb[0].mxu0
        %v3753 = vadd.f32 0.0, %v3752
        %v3754 = vpop.f32.mrb[0].mxu0
        %v3755 = vpop.f32.mrb[0].mxu0
        %v3756 = vadd.f32 0.0, %v3755
        %v3757 = vpop.f32.mrb[0].mxu0
        %3758 = vmatprep.mubr.bf16.mxu0 0
        %3759 = vmatmul.mubr.bf16.gmra.mrb[0].mxu0 %v3647
        %v3760 = vpop.f32.mrb[0].mxu0
        %v3761 = vadd.f32 0.0, %v3760
        %v3762 = vpop.f32.mrb[0].mxu0
        %v3763 = vpop.f32.mrb[0].mxu0
        %v3764 = vadd.f32 0.0, %v3763
        %v3765 = vpop.f32.mrb[0].mxu0
        %3766 = vmatprep.mubr.bf16.mxu0 0
        %3767 = vmatmul.mubr.bf16.gmra.mrb[0].mxu0 %v3650
        %v3768 = vpop.f32.mrb[0].mxu0
        %v3769 = vadd.f32 0.0, %v3768
        %v3770 = vpop.f32.mrb[0].mxu0
        %v3771 = vpop.f32.mrb[0].mxu0
        %v3772 = vadd.f32 0.0, %v3771
        %v3773 = vpop.f32.mrb[0].mxu0
        %3774 = vmatprep.mubr.bf16.mxu0 0
        %3775 = vmatmul.mubr.bf16.gmra.mrb[0].mxu0 %v3653
        %v3776 = vpop.f32.mrb[0].mxu0
        %v3777 = vadd.f32 0.0, %v3776
        %v3778 = vpop.f32.mrb[0].mxu0
        %v3779 = vpop.f32.mrb[0].mxu0
        %v3780 = vadd.f32 0.0, %v3779
        %v3781 = vpop.f32.mrb[0].mxu0
        %3782 = vmatprep.mubr.bf16.mxu0 0
        %3783 = vmatmul.mubr.bf16.gmra.mrb[0].mxu0 %v3656
        %v3784 = vpop.f32.mrb[0].mxu0
        %v3785 = vadd.f32 0.0, %v3784
        %v3786 = vpop.f32.mrb[0].mxu0
        %v3787 = vpop.f32.mrb[0].mxu0
        %v3788 = vadd.f32 0.0, %v3787
        %v3789 = vpop.f32.mrb[0].mxu0
        %3790 = vmatprep.mubr.bf16.mxu0 0
        %3791 = vmatmul.mubr.bf16.gmra.mrb[0].mxu0 %v3659
        %v3792 = vpop.f32.mrb[0].mxu0
        %v3793 = vadd.f32 0.0, %v3792
        %v3794 = vpop.f32.mrb[0].mxu0
        %v3795 = vpop.f32.mrb[0].mxu0
        %v3796 = vadd.f32 0.0, %v3795
        %v3797 = vpop.f32.mrb[0].mxu0
        %3798 = vmatprep.mubr.bf16.mxu0 0
        %3799 = vmatmul.mubr.bf16.gmra.mrb[0].mxu0 %v3662
        %v3800 = vpop.f32.mrb[0].mxu0
        %v3801 = vadd.f32 0.0, %v3800
        %v3802 = vpop.f32.mrb[0].mxu0
        %v3803 = vpop.f32.mrb[0].mxu0
        %v3804 = vadd.f32 0.0, %v3803
        %v3805 = vpop.f32.mrb[0].mxu0
        %3806 = vmatprep.mubr.bf16.mxu0 0
        %3807 = vmatmul.mubr.bf16.gmra.mrb[0].mxu0 %v3665
        %v3808 = vpop.f32.mrb[0].mxu0
        %v3809 = vadd.f32 0.0, %v3808
        %v3810 = vpop.f32.mrb[0].mxu0
        %v3811 = vpop.f32.mrb[0].mxu0
        %v3812 = vadd.f32 0.0, %v3811
        %v3813 = vpop.f32.mrb[0].mxu0
        %3814 = vmatprep.mubr.bf16.mxu0 0
        %3815 = vmatmul.mubr.bf16.gmra.mrb[0].mxu0 %v3668
        %v3816 = vpop.f32.mrb[0].mxu0
        %v3817 = vadd.f32 0.0, %v3816
        %v3818 = vpop.f32.mrb[0].mxu0
        %v3819 = vpop.f32.mrb[0].mxu0
        %v3820 = vadd.f32 0.0, %v3819
        %v3821 = vpop.f32.mrb[0].mxu0
        %3822 = vmatprep.mubr.bf16.mxu0 0
        %3823 = vmatmul.mubr.bf16.gmra.mrb[0].mxu0 %v3671
        %v3824 = vpop.f32.mrb[0].mxu0
        %v3825 = vadd.f32 0.0, %v3824
        %v3826 = vpop.f32.mrb[0].mxu0
        %v3827 = vpop.f32.mrb[0].mxu0
        %v3828 = vadd.f32 0.0, %v3827
        %v3829 = vpop.f32.mrb[0].mxu0
        %3830 = vmatprep.mubr.bf16.mxu0 0
        %3831 = vmatmul.mubr.bf16.gmra.mrb[0].mxu0 %v3674
        %v3832 = vpop.f32.mrb[0].mxu0
        %v3833 = vadd.f32 0.0, %v3832
        %v3834 = vpop.f32.mrb[0].mxu0
        %v3835 = vpop.f32.mrb[0].mxu0
        %v3836 = vadd.f32 0.0, %v3835
        %v3837 = vpop.f32.mrb[0].mxu0
        %3838 = vmatprep.mubr.bf16.mxu0 0
        %3839 = vmatmul.mubr.bf16.gmra.mrb[0].mxu0 %v3677
        %v3840 = vpop.f32.mrb[0].mxu0
        %v3841 = vadd.f32 0.0, %v3840
        %v3842 = vpop.f32.mrb[0].mxu0
        %v3843 = vpop.f32.mrb[0].mxu0
        %v3844 = vadd.f32 0.0, %v3843
        %v3845 = vpop.f32.mrb[0].mxu0
        %3846 = vmatprep.mubr.bf16.mxu0 0
        %3847 = vmatmul.mubr.bf16.gmra.mrb[0].mxu0 %v3680
        %v3848 = vpop.f32.mrb[0].mxu0
        %v3849 = vadd.f32 0.0, %v3848
        %v3850 = vpop.f32.mrb[0].mxu0
        %v3851 = vpop.f32.mrb[0].mxu0
        %v3852 = vadd.f32 0.0, %v3851
        %v3853 = vpop.f32.mrb[0].mxu0
        %3854 = vmatprep.mubr.bf16.mxu0 0
        %3855 = vmatmul.mubr.bf16.gmra.mrb[0].mxu0 %v3683
        %v3856 = vpop.f32.mrb[0].mxu0
        %v3857 = vadd.f32 0.0, %v3856
        %v3858 = vpop.f32.mrb[0].mxu0
        %v3859 = vpop.f32.mrb[0].mxu0
        %v3860 = vadd.f32 0.0, %v3859
        %v3861 = vpop.f32.mrb[0].mxu0
        %3862 = vmatprep.mubr.bf16.mxu0 0
        %3863 = vmatmul.mubr.bf16.gmra.mrb[0].mxu0 %v3686
        %v3864 = vpop.f32.mrb[0].mxu0
        %v3865 = vadd.f32 0.0, %v3864
        %v3866 = vpop.f32.mrb[0].mxu0
        %v3867 = vpop.f32.mrb[0].mxu0
        %v3868 = vadd.f32 0.0, %v3867
        %v3869 = vpop.f32.mrb[0].mxu0
        %3870 = vmatprep.mubr.bf16.mxu0 0
        %3871 = vmatmul.mubr.bf16.gmra.mrb[0].mxu0 %v3689
        %v3872 = vpop.f32.mrb[0].mxu0
        %v3873 = vadd.f32 0.0, %v3872
        %v3874 = vpop.f32.mrb[0].mxu0
        %v3875 = vpop.f32.mrb[0].mxu0
        %v3876 = vadd.f32 0.0, %v3875
        %v3877 = vpop.f32.mrb[0].mxu0
        %3878 = vmatprep.mubr.bf16.mxu0 0
        %3879 = vmatmul.mubr.bf16.gmra.mrb[0].mxu0 %v3692
        %v3880 = vpop.f32.mrb[0].mxu0
        %v3881 = vadd.f32 0.0, %v3880
        %v3882 = vpop.f32.mrb[0].mxu0
        %v3883 = vpop.f32.mrb[0].mxu0
        %v3884 = vadd.f32 0.0, %v3883
        %v3885 = vpop.f32.mrb[0].mxu0
        %3886 = vmatprep.mubr.bf16.mxu0 0
        %3887 = vmatmul.mubr.bf16.gmra.mrb[0].mxu0 %v3695
        %v3888 = vpop.f32.mrb[0].mxu0
        %v3889 = vadd.f32 0.0, %v3888
        %v3890 = vpop.f32.mrb[0].mxu0
        %v3891 = vpop.f32.mrb[0].mxu0
        %v3892 = vadd.f32 0.0, %v3891
        %v3893 = vpop.f32.mrb[0].mxu0
        %3894 = vmatprep.mubr.bf16.mxu0 0
        %3895 = vmatmul.mubr.bf16.gmra.mrb[0].mxu0 %v3698
        %v3896 = vpop.f32.mrb[0].mxu0
        %v3897 = vadd.f32 0.0, %v3896
        %v3898 = vpop.f32.mrb[0].mxu0
        %v3899 = vpop.f32.mrb[0].mxu0
        %v3900 = vadd.f32 0.0, %v3899
        %v3901 = vpop.f32.mrb[0].mxu0
        %3902 = vmatprep.mubr.bf16.mxu0 0
        %3903 = vmatmul.mubr.bf16.gmra.mrb[0].mxu0 %v3701
        %v3904 = vpop.f32.mrb[0].mxu0
        %v3905 = vadd.f32 0.0, %v3904
        %v3906 = vpop.f32.mrb[0].mxu0
        %v3907 = vpop.f32.mrb[0].mxu0
        %v3908 = vadd.f32 0.0, %v3907
        %v3909 = vpop.f32.mrb[0].mxu0
        %3910 = vmatprep.mubr.bf16.mxu0 0
        %3911 = vmatmul.mubr.bf16.gmra.mrb[0].mxu0 %v3704
        %v3912 = vpop.f32.mrb[0].mxu0
        %v3913 = vadd.f32 0.0, %v3912
        %v3914 = vpop.f32.mrb[0].mxu0
        %v3915 = vpop.f32.mrb[0].mxu0
        %v3916 = vadd.f32 0.0, %v3915
        %v3917 = vpop.f32.mrb[0].mxu0
        %3918 = vmatprep.mubr.bf16.mxu0 0
        %3919 = vmatmul.mubr.bf16.gmra.mrb[0].mxu0 %v3707
        %v3920 = vpop.f32.mrb[0].mxu0
        %v3921 = vadd.f32 0.0, %v3920
        %v3922 = vpop.f32.mrb[0].mxu0
        %v3923 = vpop.f32.mrb[0].mxu0
        %v3924 = vadd.f32 0.0, %v3923
        %v3925 = vpop.f32.mrb[0].mxu0
        %3926 = vmatprep.mubr.bf16.mxu0 0
        %3927 = vmatmul.mubr.bf16.gmra.mrb[0].mxu0 %v3710
        %v3928 = vpop.f32.mrb[0].mxu0
        %v3929 = vadd.f32 0.0, %v3928
        %v3930 = vpop.f32.mrb[0].mxu0
        %v3931 = vpop.f32.mrb[0].mxu0
        %v3932 = vadd.f32 0.0, %v3931
        %v3933 = vpop.f32.mrb[0].mxu0
        %3934 = vmatprep.mubr.bf16.mxu0 0
        %3935 = vmatmul.mubr.bf16.gmra.mrb[0].mxu0 %v3713
        %v3936 = vpop.f32.mrb[0].mxu0
        %v3937 = vadd.f32 0.0, %v3936
        %v3938 = vpop.f32.mrb[0].mxu0
        %v3939 = vpop.f32.mrb[0].mxu0
        %v3940 = vadd.f32 0.0, %v3939
        %v3941 = vpop.f32.mrb[0].mxu0
        %3942 = vdwg.mxu0
        %v3943 = vld [vmem:[#allocation3] sm:$0xff]
        %v3944 = vld [vmem:[#allocation3 + $0x8] sm:$0xff]
        %v3945 = vld [vmem:[#allocation3 + $0x10] sm:$0xff]
        %v3946 = vld [vmem:[#allocation3 + $0x18] sm:$0xff]
        %v3947 = vld [vmem:[#allocation3 + $0x20] sm:$0xff]
        %v3948 = vld [vmem:[#allocation3 + $0x28] sm:$0xff]
        %v3949 = vld [vmem:[#allocation3 + $0x30] sm:$0xff]
        %v3950 = vld [vmem:[#allocation3 + $0x38] sm:$0xff]
        %v3951 = vld [vmem:[#allocation3 + $0x40] sm:$0xff]
        %v3952 = vld [vmem:[#allocation3 + $0x48] sm:$0xff]
        %v3953 = vld [vmem:[#allocation3 + $0x50] sm:$0xff]
        %v3954 = vld [vmem:[#allocation3 + $0x58] sm:$0xff]
        %v3955 = vld [vmem:[#allocation3 + $0x60] sm:$0xff]
        %v3956 = vld [vmem:[#allocation3 + $0x68] sm:$0xff]
        %v3957 = vld [vmem:[#allocation3 + $0x70] sm:$0xff]
        %v3958 = vld [vmem:[#allocation3 + $0x78] sm:$0xff]
        %v3959 = vld [vmem:[#allocation3 + $0x80] sm:$0xff]
        %v3960 = vld [vmem:[#allocation3 + $0x88] sm:$0xff]
        %v3961 = vld [vmem:[#allocation3 + $0x90] sm:$0xff]
        %v3962 = vld [vmem:[#allocation3 + $0x98] sm:$0xff]
        %v3963 = vld [vmem:[#allocation3 + $0xa0] sm:$0xff]
        %v3964 = vld [vmem:[#allocation3 + $0xa8] sm:$0xff]
        %v3965 = vld [vmem:[#allocation3 + $0xb0] sm:$0xff]
        %v3966 = vld [vmem:[#allocation3 + $0xb8] sm:$0xff]
        %v3967 = vld [vmem:[#allocation3 + $0xc0] sm:$0xff]
        %v3968 = vld [vmem:[#allocation3 + $0xc8] sm:$0xff]
        %v3969 = vld [vmem:[#allocation3 + $0xd0] sm:$0xff]
        %v3970 = vld [vmem:[#allocation3 + $0xd8] sm:$0xff]
        %v3971 = vld [vmem:[#allocation3 + $0xe0] sm:$0xff]
        %v3972 = vld [vmem:[#allocation3 + $0xe8] sm:$0xff]
        %v3973 = vld [vmem:[#allocation3 + $0xf0] sm:$0xff]
        %v3974 = vld [vmem:[#allocation3 + $0xf8] sm:$0xff]
        %v3975 = vld [vmem:[#allocation3 + $0x100] sm:$0xff]
        %v3976 = vld [vmem:[#allocation3 + $0x108] sm:$0xff]
        %v3977 = vld [vmem:[#allocation3 + $0x110] sm:$0xff]
        %v3978 = vld [vmem:[#allocation3 + $0x118] sm:$0xff]
        %v3979 = vld [vmem:[#allocation3 + $0x120] sm:$0xff]
        %v3980 = vld [vmem:[#allocation3 + $0x128] sm:$0xff]
        %v3981 = vld [vmem:[#allocation3 + $0x130] sm:$0xff]
        %v3982 = vld [vmem:[#allocation3 + $0x138] sm:$0xff]
        %v3983 = vld [vmem:[#allocation3 + $0x140] sm:$0xff]
        %v3984 = vld [vmem:[#allocation3 + $0x148] sm:$0xff]
        %v3985 = vld [vmem:[#allocation3 + $0x150] sm:$0xff]
        %v3986 = vld [vmem:[#allocation3 + $0x158] sm:$0xff]
        %v3987 = vld [vmem:[#allocation3 + $0x160] sm:$0xff]
        %v3988 = vld [vmem:[#allocation3 + $0x168] sm:$0xff]
        %v3989 = vld [vmem:[#allocation3 + $0x170] sm:$0xff]
        %v3990 = vld [vmem:[#allocation3 + $0x178] sm:$0xff]
        %v3991 = vadd.f32 %v3943, %v3753
        %v3992 = vadd.f32 %v3944, %v3756
        %v3993 = vadd.f32 %v3945, %v3761
        %v3994 = vadd.f32 %v3946, %v3764
        %v3995 = vadd.f32 %v3947, %v3769
        %v3996 = vadd.f32 %v3948, %v3772
        %v3997 = vadd.f32 %v3949, %v3777
        %v3998 = vadd.f32 %v3950, %v3780
        %v3999 = vadd.f32 %v3951, %v3785
        %v4000 = vadd.f32 %v3952, %v3788
        %v4001 = vadd.f32 %v3953, %v3793
        %v4002 = vadd.f32 %v3954, %v3796
        %v4003 = vadd.f32 %v3955, %v3801
        %v4004 = vadd.f32 %v3956, %v3804
        %v4005 = vadd.f32 %v3957, %v3809
        %v4006 = vadd.f32 %v3958, %v3812
        %v4007 = vadd.f32 %v3959, %v3817
        %v4008 = vadd.f32 %v3960, %v3820
        %v4009 = vadd.f32 %v3961, %v3825
        %v4010 = vadd.f32 %v3962, %v3828
        %v4011 = vadd.f32 %v3963, %v3833
        %v4012 = vadd.f32 %v3964, %v3836
        %v4013 = vadd.f32 %v3965, %v3841
        %v4014 = vadd.f32 %v3966, %v3844
        %v4015 = vadd.f32 %v3967, %v3849
        %v4016 = vadd.f32 %v3968, %v3852
        %v4017 = vadd.f32 %v3969, %v3857
        %v4018 = vadd.f32 %v3970, %v3860
        %v4019 = vadd.f32 %v3971, %v3865
        %v4020 = vadd.f32 %v3972, %v3868
        %v4021 = vadd.f32 %v3973, %v3873
        %v4022 = vadd.f32 %v3974, %v3876
        %v4023 = vadd.f32 %v3975, %v3881
        %v4024 = vadd.f32 %v3976, %v3884
        %v4025 = vadd.f32 %v3977, %v3889
        %v4026 = vadd.f32 %v3978, %v3892
        %v4027 = vadd.f32 %v3979, %v3897
        %v4028 = vadd.f32 %v3980, %v3900
        %v4029 = vadd.f32 %v3981, %v3905
        %v4030 = vadd.f32 %v3982, %v3908
        %v4031 = vadd.f32 %v3983, %v3913
        %v4032 = vadd.f32 %v3984, %v3916
        %v4033 = vadd.f32 %v3985, %v3921
        %v4034 = vadd.f32 %v3986, %v3924
        %v4035 = vadd.f32 %v3987, %v3929
        %v4036 = vadd.f32 %v3988, %v3932
        %v4037 = vadd.f32 %v3989, %v3937
        %v4038 = vadd.f32 %v3990, %v3940
        %4039 = vst [vmem:[#allocation3] sm:$0xff] %v3991
        %4040 = vst [vmem:[#allocation3 + $0x8] sm:$0xff] %v3992
        %4041 = vst [vmem:[#allocation3 + $0x10] sm:$0xff] %v3993
        %4042 = vst [vmem:[#allocation3 + $0x18] sm:$0xff] %v3994
        %4043 = vst [vmem:[#allocation3 + $0x20] sm:$0xff] %v3995
        %4044 = vst [vmem:[#allocation3 + $0x28] sm:$0xff] %v3996
        %4045 = vst [vmem:[#allocation3 + $0x30] sm:$0xff] %v3997
        %4046 = vst [vmem:[#allocation3 + $0x38] sm:$0xff] %v3998
        %4047 = vst [vmem:[#allocation3 + $0x40] sm:$0xff] %v3999
        %4048 = vst [vmem:[#allocation3 + $0x48] sm:$0xff] %v4000
        %4049 = vst [vmem:[#allocation3 + $0x50] sm:$0xff] %v4001
        %4050 = vst [vmem:[#allocation3 + $0x58] sm:$0xff] %v4002
        %4051 = vst [vmem:[#allocation3 + $0x60] sm:$0xff] %v4003
        %4052 = vst [vmem:[#allocation3 + $0x68] sm:$0xff] %v4004
        %4053 = vst [vmem:[#allocation3 + $0x70] sm:$0xff] %v4005
        %4054 = vst [vmem:[#allocation3 + $0x78] sm:$0xff] %v4006
        %4055 = vst [vmem:[#allocation3 + $0x80] sm:$0xff] %v4007
        %4056 = vst [vmem:[#allocation3 + $0x88] sm:$0xff] %v4008
        %4057 = vst [vmem:[#allocation3 + $0x90] sm:$0xff] %v4009
        %4058 = vst [vmem:[#allocation3 + $0x98] sm:$0xff] %v4010
        %4059 = vst [vmem:[#allocation3 + $0xa0] sm:$0xff] %v4011
        %4060 = vst [vmem:[#allocation3 + $0xa8] sm:$0xff] %v4012
        %4061 = vst [vmem:[#allocation3 + $0xb0] sm:$0xff] %v4013
        %4062 = vst [vmem:[#allocation3 + $0xb8] sm:$0xff] %v4014
        %4063 = vst [vmem:[#allocation3 + $0xc0] sm:$0xff] %v4015
        %4064 = vst [vmem:[#allocation3 + $0xc8] sm:$0xff] %v4016
        %4065 = vst [vmem:[#allocation3 + $0xd0] sm:$0xff] %v4017
        %4066 = vst [vmem:[#allocation3 + $0xd8] sm:$0xff] %v4018
        %4067 = vst [vmem:[#allocation3 + $0xe0] sm:$0xff] %v4019
        %4068 = vst [vmem:[#allocation3 + $0xe8] sm:$0xff] %v4020
        %4069 = vst [vmem:[#allocation3 + $0xf0] sm:$0xff] %v4021
        %4070 = vst [vmem:[#allocation3 + $0xf8] sm:$0xff] %v4022
        %4071 = vst [vmem:[#allocation3 + $0x100] sm:$0xff] %v4023
        %4072 = vst [vmem:[#allocation3 + $0x108] sm:$0xff] %v4024
        %4073 = vst [vmem:[#allocation3 + $0x110] sm:$0xff] %v4025
        %4074 = vst [vmem:[#allocation3 + $0x118] sm:$0xff] %v4026
        %4075 = vst [vmem:[#allocation3 + $0x120] sm:$0xff] %v4027
        %4076 = vst [vmem:[#allocation3 + $0x128] sm:$0xff] %v4028
        %4077 = vst [vmem:[#allocation3 + $0x130] sm:$0xff] %v4029
        %4078 = vst [vmem:[#allocation3 + $0x138] sm:$0xff] %v4030
        %4079 = vst [vmem:[#allocation3 + $0x140] sm:$0xff] %v4031
        %4080 = vst [vmem:[#allocation3 + $0x148] sm:$0xff] %v4032
        %4081 = vst [vmem:[#allocation3 + $0x150] sm:$0xff] %v4033
        %4082 = vst [vmem:[#allocation3 + $0x158] sm:$0xff] %v4034
        %4083 = vst [vmem:[#allocation3 + $0x160] sm:$0xff] %v4035
        %4084 = vst [vmem:[#allocation3 + $0x168] sm:$0xff] %v4036
        %4085 = vst [vmem:[#allocation3 + $0x170] sm:$0xff] %v4037
        %4086 = vst [vmem:[#allocation3 + $0x178] sm:$0xff] %v4038
        %v4087 = vld [vmem:[#allocation2 + $0x20] sm:$0xf8]
        %v4088 = vld [vmem:[#allocation2 + $0x28] sm:$0xff]
        %v4089 = vld [vmem:[#allocation2 + $0x30] sm:$0xff]
        %v4090 = vld [vmem:[#allocation2 + $0x38] sm:$0xff]
        %v4091 = vld [vmem:[#allocation2 + $0x40] sm:$0xff]
        %v4092 = vld [vmem:[#allocation2 + $0x48] sm:$0xff]
        %v4093 = vld [vmem:[#allocation2 + $0x50] sm:$0xff]
        %v4094 = vld [vmem:[#allocation2 + $0x58] sm:$0xff]
        %v4095 = vld [vmem:[#allocation2 + $0x60] sm:$0xff]
        %v4096 = vld [vmem:[#allocation2 + $0x68] sm:$0xff]
        %v4097 = vld [vmem:[#allocation2 + $0x70] sm:$0xff]
        %v4098 = vld [vmem:[#allocation2 + $0x78] sm:$0xff]
        %v4099 = vld [vmem:[#allocation2 + $0x80] sm:$0xff]
        %v4100 = vld [vmem:[#allocation2 + $0x88] sm:$0xff]
        %v4101 = vld [vmem:[#allocation2 + $0x90] sm:$0xff]
        %v4102 = vld [vmem:[#allocation2 + $0x98] sm:$0xff]
        %v4103 = vld [vmem:[#allocation2 + $0xa0] sm:$0xff]
        %v4104 = vld [vmem:[#allocation2 + $0xa8] sm:$0xff]
        %v4105 = vld [vmem:[#allocation2 + $0xb0] sm:$0xff]
        %v4106 = vld [vmem:[#allocation2 + $0xb8] sm:$0xff]
        %v4107 = vld [vmem:[#allocation2 + $0xc0] sm:$0xff]
        %v4108 = vld [vmem:[#allocation2 + $0xc8] sm:$0xff]
        %v4109 = vld [vmem:[#allocation2 + $0xd0] sm:$0xff]
        %v4110 = vld [vmem:[#allocation2 + $0xd8] sm:$0xff]
        %v4111 = vld [vmem:[#allocation2 + $0xe0] sm:$0xf]
        %s4112 = scalar_lea.vmem %s210, 12
        %v4113 = vld [vmem:[%s4112] sm:$0x3]
        %v4115 = vshrl.u32 %v4087, 16
        %v4117 = vrot.slane %v4115, 3
        %v4118 = vshll.u32 %v4087, 16
        %v4120 = vrot.slane %v4118, 4
        %v4121 = vor.u32 %v4117, %v4120
        %v4123 = vshrl.u32 %v4088, 16
        %v4125 = vrot.slane %v4123, 3
        %v4126 = vshll.u32 %v4088, 16
        %v4128 = vrot.slane %v4126, 4
        %v4129 = vor.u32 %v4125, %v4128
        %v4130 = vsel %vm461, %v4121, %v4129
        %v4132 = vshrl.u32 %v4089, 16
        %v4134 = vrot.slane %v4132, 3
        %v4135 = vshll.u32 %v4089, 16
        %v4137 = vrot.slane %v4135, 4
        %v4138 = vor.u32 %v4134, %v4137
        %v4139 = vsel %vm461, %v4129, %v4138
        %v4141 = vshrl.u32 %v4090, 16
        %v4143 = vrot.slane %v4141, 3
        %v4144 = vshll.u32 %v4090, 16
        %v4146 = vrot.slane %v4144, 4
        %v4147 = vor.u32 %v4143, %v4146
        %v4148 = vsel %vm461, %v4138, %v4147
        %v4150 = vshrl.u32 %v4091, 16
        %v4152 = vrot.slane %v4150, 3
        %v4153 = vshll.u32 %v4091, 16
        %v4155 = vrot.slane %v4153, 4
        %v4156 = vor.u32 %v4152, %v4155
        %v4157 = vsel %vm461, %v4147, %v4156
        %v4159 = vshrl.u32 %v4092, 16
        %v4161 = vrot.slane %v4159, 3
        %v4162 = vshll.u32 %v4092, 16
        %v4164 = vrot.slane %v4162, 4
        %v4165 = vor.u32 %v4161, %v4164
        %v4166 = vsel %vm461, %v4156, %v4165
        %v4168 = vshrl.u32 %v4093, 16
        %v4170 = vrot.slane %v4168, 3
        %v4171 = vshll.u32 %v4093, 16
        %v4173 = vrot.slane %v4171, 4
        %v4174 = vor.u32 %v4170, %v4173
        %v4175 = vsel %vm461, %v4165, %v4174
        %v4177 = vshrl.u32 %v4094, 16
        %v4179 = vrot.slane %v4177, 3
        %v4180 = vshll.u32 %v4094, 16
        %v4182 = vrot.slane %v4180, 4
        %v4183 = vor.u32 %v4179, %v4182
        %v4184 = vsel %vm461, %v4174, %v4183
        %v4186 = vshrl.u32 %v4095, 16
        %v4188 = vrot.slane %v4186, 3
        %v4189 = vshll.u32 %v4095, 16
        %v4191 = vrot.slane %v4189, 4
        %v4192 = vor.u32 %v4188, %v4191
        %v4193 = vsel %vm461, %v4183, %v4192
        %v4195 = vshrl.u32 %v4096, 16
        %v4197 = vrot.slane %v4195, 3
        %v4198 = vshll.u32 %v4096, 16
        %v4200 = vrot.slane %v4198, 4
        %v4201 = vor.u32 %v4197, %v4200
        %v4202 = vsel %vm461, %v4192, %v4201
        %v4204 = vshrl.u32 %v4097, 16
        %v4206 = vrot.slane %v4204, 3
        %v4207 = vshll.u32 %v4097, 16
        %v4209 = vrot.slane %v4207, 4
        %v4210 = vor.u32 %v4206, %v4209
        %v4211 = vsel %vm461, %v4201, %v4210
        %v4213 = vshrl.u32 %v4098, 16
        %v4215 = vrot.slane %v4213, 3
        %v4216 = vshll.u32 %v4098, 16
        %v4218 = vrot.slane %v4216, 4
        %v4219 = vor.u32 %v4215, %v4218
        %v4220 = vsel %vm461, %v4210, %v4219
        %v4222 = vshrl.u32 %v4099, 16
        %v4224 = vrot.slane %v4222, 3
        %v4225 = vshll.u32 %v4099, 16
        %v4227 = vrot.slane %v4225, 4
        %v4228 = vor.u32 %v4224, %v4227
        %v4229 = vsel %vm461, %v4219, %v4228
        %v4231 = vshrl.u32 %v4100, 16
        %v4233 = vrot.slane %v4231, 3
        %v4234 = vshll.u32 %v4100, 16
        %v4236 = vrot.slane %v4234, 4
        %v4237 = vor.u32 %v4233, %v4236
        %v4238 = vsel %vm461, %v4228, %v4237
        %v4240 = vshrl.u32 %v4101, 16
        %v4242 = vrot.slane %v4240, 3
        %v4243 = vshll.u32 %v4101, 16
        %v4245 = vrot.slane %v4243, 4
        %v4246 = vor.u32 %v4242, %v4245
        %v4247 = vsel %vm461, %v4237, %v4246
        %v4249 = vshrl.u32 %v4102, 16
        %v4251 = vrot.slane %v4249, 3
        %v4252 = vshll.u32 %v4102, 16
        %v4254 = vrot.slane %v4252, 4
        %v4255 = vor.u32 %v4251, %v4254
        %v4256 = vsel %vm461, %v4246, %v4255
        %v4258 = vshrl.u32 %v4103, 16
        %v4260 = vrot.slane %v4258, 3
        %v4261 = vshll.u32 %v4103, 16
        %v4263 = vrot.slane %v4261, 4
        %v4264 = vor.u32 %v4260, %v4263
        %v4265 = vsel %vm461, %v4255, %v4264
        %v4267 = vshrl.u32 %v4104, 16
        %v4269 = vrot.slane %v4267, 3
        %v4270 = vshll.u32 %v4104, 16
        %v4272 = vrot.slane %v4270, 4
        %v4273 = vor.u32 %v4269, %v4272
        %v4274 = vsel %vm461, %v4264, %v4273
        %v4276 = vshrl.u32 %v4105, 16
        %v4278 = vrot.slane %v4276, 3
        %v4279 = vshll.u32 %v4105, 16
        %v4281 = vrot.slane %v4279, 4
        %v4282 = vor.u32 %v4278, %v4281
        %v4283 = vsel %vm461, %v4273, %v4282
        %v4285 = vshrl.u32 %v4106, 16
        %v4287 = vrot.slane %v4285, 3
        %v4288 = vshll.u32 %v4106, 16
        %v4290 = vrot.slane %v4288, 4
        %v4291 = vor.u32 %v4287, %v4290
        %v4292 = vsel %vm461, %v4282, %v4291
        %v4294 = vshrl.u32 %v4107, 16
        %v4296 = vrot.slane %v4294, 3
        %v4297 = vshll.u32 %v4107, 16
        %v4299 = vrot.slane %v4297, 4
        %v4300 = vor.u32 %v4296, %v4299
        %v4301 = vsel %vm461, %v4291, %v4300
        %v4303 = vshrl.u32 %v4108, 16
        %v4305 = vrot.slane %v4303, 3
        %v4306 = vshll.u32 %v4108, 16
        %v4308 = vrot.slane %v4306, 4
        %v4309 = vor.u32 %v4305, %v4308
        %v4310 = vsel %vm461, %v4300, %v4309
        %v4312 = vshrl.u32 %v4109, 16
        %v4314 = vrot.slane %v4312, 3
        %v4315 = vshll.u32 %v4109, 16
        %v4317 = vrot.slane %v4315, 4
        %v4318 = vor.u32 %v4314, %v4317
        %v4319 = vsel %vm461, %v4309, %v4318
        %v4321 = vshrl.u32 %v4110, 16
        %v4323 = vrot.slane %v4321, 3
        %v4324 = vshll.u32 %v4110, 16
        %v4326 = vrot.slane %v4324, 4
        %v4327 = vor.u32 %v4323, %v4326
        %v4328 = vsel %vm461, %v4318, %v4327
        %v4330 = vshrl.u32 %v4111, 16
        %v4332 = vrot.slane %v4330, 3
        %v4333 = vshll.u32 %v4111, 16
        %v4335 = vrot.slane %v4333, 4
        %v4336 = vor.u32 %v4332, %v4335
        %v4337 = vsel %vm461, %v4327, %v4336
        %v4339 = vsel %vm686, %v4130, 0
        %v4342 = vsel %vm686, %v4139, 0
        %v4345 = vsel %vm686, %v4148, 0
        %v4348 = vsel %vm686, %v4157, 0
        %v4351 = vsel %vm686, %v4166, 0
        %v4354 = vsel %vm686, %v4175, 0
        %v4357 = vsel %vm686, %v4184, 0
        %v4360 = vsel %vm686, %v4193, 0
        %v4363 = vsel %vm686, %v4202, 0
        %v4366 = vsel %vm686, %v4211, 0
        %v4369 = vsel %vm686, %v4220, 0
        %v4372 = vsel %vm686, %v4229, 0
        %v4375 = vsel %vm686, %v4238, 0
        %v4378 = vsel %vm686, %v4247, 0
        %v4381 = vsel %vm686, %v4256, 0
        %v4384 = vsel %vm686, %v4265, 0
        %v4387 = vsel %vm686, %v4274, 0
        %v4390 = vsel %vm686, %v4283, 0
        %v4393 = vsel %vm686, %v4292, 0
        %v4396 = vsel %vm686, %v4301, 0
        %v4399 = vsel %vm686, %v4310, 0
        %v4402 = vsel %vm686, %v4319, 0
        %v4405 = vsel %vm686, %v4328, 0
        %v4408 = vsel %vm686, %v4337, 0
        %v4411 = vand.u32 %v4113, %v762
        %4413 = vmatprep.subr.bf16.mxu0 0
        %4414 = vmatpush1.bf16.msra.mxu0 %v4411
        %4415 = vmatprep.subr.bf16.mxu0 0
        %4416 = vmatpush1.bf16.msra.mxu0 0
        %4417 = vmatprep.subr.bf16.mxu0 0
        %4418 = vmatpush1.bf16.msra.mxu0 0
        %4419 = vmatprep.subr.bf16.mxu0 0
        %4420 = vmatpush1.bf16.msra.mxu0 0
        %4421 = vmatprep.subr.bf16.mxu0 0
        %4422 = vmatpush1.bf16.msra.mxu0 0
        %4423 = vmatprep.subr.bf16.mxu0 0
        %4424 = vmatpush1.bf16.msra.mxu0 0
        %4425 = vmatprep.subr.bf16.mxu0 0
        %4426 = vmatpush1.bf16.msra.mxu0 0
        %4427 = vmatprep.subr.bf16.mxu0 0
        %4428 = vmatpush1.bf16.msra.mxu0 0
        %4429 = vmatprep.subr.bf16.mxu0 0
        %4430 = vmatpush1.bf16.msra.mxu0 0
        %4431 = vmatprep.subr.bf16.mxu0 0
        %4432 = vmatpush1.bf16.msra.mxu0 0
        %4433 = vmatprep.subr.bf16.mxu0 0
        %4434 = vmatpush1.bf16.msra.mxu0 0
        %4435 = vmatprep.subr.bf16.mxu0 0
        %4436 = vmatpush1.bf16.msra.mxu0 0
        %4437 = vmatprep.subr.bf16.mxu0 0
        %4438 = vmatpush1.bf16.msra.mxu0 0
        %4439 = vmatprep.subr.bf16.mxu0 0
        %4440 = vmatpush1.bf16.msra.mxu0 0
        %4441 = vmatprep.subr.bf16.mxu0 0
        %4442 = vmatpush1.bf16.msra.mxu0 0
        %4443 = vmatprep.subr.bf16.mxu0 0
        %4444 = vmatpush1.bf16.msra.mxu0 0
        %4445 = vmatprep.mubr.bf16.mxu0 0
        %4446 = vmatmul.mubr.bf16.gmra.mrb[0].mxu0 %v4339
        %v4447 = vpop.f32.mrb[0].mxu0
        %v4448 = vadd.f32 0.0, %v4447
        %v4449 = vpop.f32.mrb[0].mxu0
        %v4450 = vpop.f32.mrb[0].mxu0
        %v4451 = vadd.f32 0.0, %v4450
        %v4452 = vpop.f32.mrb[0].mxu0
        %4453 = vmatprep.mubr.bf16.mxu0 0
        %4454 = vmatmul.mubr.bf16.gmra.mrb[0].mxu0 %v4342
        %v4455 = vpop.f32.mrb[0].mxu0
        %v4456 = vadd.f32 0.0, %v4455
        %v4457 = vpop.f32.mrb[0].mxu0
        %v4458 = vpop.f32.mrb[0].mxu0
        %v4459 = vadd.f32 0.0, %v4458
        %v4460 = vpop.f32.mrb[0].mxu0
        %4461 = vmatprep.mubr.bf16.mxu0 0
        %4462 = vmatmul.mubr.bf16.gmra.mrb[0].mxu0 %v4345
        %v4463 = vpop.f32.mrb[0].mxu0
        %v4464 = vadd.f32 0.0, %v4463
        %v4465 = vpop.f32.mrb[0].mxu0
        %v4466 = vpop.f32.mrb[0].mxu0
        %v4467 = vadd.f32 0.0, %v4466
        %v4468 = vpop.f32.mrb[0].mxu0
        %4469 = vmatprep.mubr.bf16.mxu0 0
        %4470 = vmatmul.mubr.bf16.gmra.mrb[0].mxu0 %v4348
        %v4471 = vpop.f32.mrb[0].mxu0
        %v4472 = vadd.f32 0.0, %v4471
        %v4473 = vpop.f32.mrb[0].mxu0
        %v4474 = vpop.f32.mrb[0].mxu0
        %v4475 = vadd.f32 0.0, %v4474
        %v4476 = vpop.f32.mrb[0].mxu0
        %4477 = vmatprep.mubr.bf16.mxu0 0
        %4478 = vmatmul.mubr.bf16.gmra.mrb[0].mxu0 %v4351
        %v4479 = vpop.f32.mrb[0].mxu0
        %v4480 = vadd.f32 0.0, %v4479
        %v4481 = vpop.f32.mrb[0].mxu0
        %v4482 = vpop.f32.mrb[0].mxu0
        %v4483 = vadd.f32 0.0, %v4482
        %v4484 = vpop.f32.mrb[0].mxu0
        %4485 = vmatprep.mubr.bf16.mxu0 0
        %4486 = vmatmul.mubr.bf16.gmra.mrb[0].mxu0 %v4354
        %v4487 = vpop.f32.mrb[0].mxu0
        %v4488 = vadd.f32 0.0, %v4487
        %v4489 = vpop.f32.mrb[0].mxu0
        %v4490 = vpop.f32.mrb[0].mxu0
        %v4491 = vadd.f32 0.0, %v4490
        %v4492 = vpop.f32.mrb[0].mxu0
        %4493 = vmatprep.mubr.bf16.mxu0 0
        %4494 = vmatmul.mubr.bf16.gmra.mrb[0].mxu0 %v4357
        %v4495 = vpop.f32.mrb[0].mxu0
        %v4496 = vadd.f32 0.0, %v4495
        %v4497 = vpop.f32.mrb[0].mxu0
        %v4498 = vpop.f32.mrb[0].mxu0
        %v4499 = vadd.f32 0.0, %v4498
        %v4500 = vpop.f32.mrb[0].mxu0
        %4501 = vmatprep.mubr.bf16.mxu0 0
        %4502 = vmatmul.mubr.bf16.gmra.mrb[0].mxu0 %v4360
        %v4503 = vpop.f32.mrb[0].mxu0
        %v4504 = vadd.f32 0.0, %v4503
        %v4505 = vpop.f32.mrb[0].mxu0
        %v4506 = vpop.f32.mrb[0].mxu0
        %v4507 = vadd.f32 0.0, %v4506
        %v4508 = vpop.f32.mrb[0].mxu0
        %4509 = vmatprep.mubr.bf16.mxu0 0
        %4510 = vmatmul.mubr.bf16.gmra.mrb[0].mxu0 %v4363
        %v4511 = vpop.f32.mrb[0].mxu0
        %v4512 = vadd.f32 0.0, %v4511
        %v4513 = vpop.f32.mrb[0].mxu0
        %v4514 = vpop.f32.mrb[0].mxu0
        %v4515 = vadd.f32 0.0, %v4514
        %v4516 = vpop.f32.mrb[0].mxu0
        %4517 = vmatprep.mubr.bf16.mxu0 0
        %4518 = vmatmul.mubr.bf16.gmra.mrb[0].mxu0 %v4366
        %v4519 = vpop.f32.mrb[0].mxu0
        %v4520 = vadd.f32 0.0, %v4519
        %v4521 = vpop.f32.mrb[0].mxu0
        %v4522 = vpop.f32.mrb[0].mxu0
        %v4523 = vadd.f32 0.0, %v4522
        %v4524 = vpop.f32.mrb[0].mxu0
        %4525 = vmatprep.mubr.bf16.mxu0 0
        %4526 = vmatmul.mubr.bf16.gmra.mrb[0].mxu0 %v4369
        %v4527 = vpop.f32.mrb[0].mxu0
        %v4528 = vadd.f32 0.0, %v4527
        %v4529 = vpop.f32.mrb[0].mxu0
        %v4530 = vpop.f32.mrb[0].mxu0
        %v4531 = vadd.f32 0.0, %v4530
        %v4532 = vpop.f32.mrb[0].mxu0
        %4533 = vmatprep.mubr.bf16.mxu0 0
        %4534 = vmatmul.mubr.bf16.gmra.mrb[0].mxu0 %v4372
        %v4535 = vpop.f32.mrb[0].mxu0
        %v4536 = vadd.f32 0.0, %v4535
        %v4537 = vpop.f32.mrb[0].mxu0
        %v4538 = vpop.f32.mrb[0].mxu0
        %v4539 = vadd.f32 0.0, %v4538
        %v4540 = vpop.f32.mrb[0].mxu0
        %4541 = vmatprep.mubr.bf16.mxu0 0
        %4542 = vmatmul.mubr.bf16.gmra.mrb[0].mxu0 %v4375
        %v4543 = vpop.f32.mrb[0].mxu0
        %v4544 = vadd.f32 0.0, %v4543
        %v4545 = vpop.f32.mrb[0].mxu0
        %v4546 = vpop.f32.mrb[0].mxu0
        %v4547 = vadd.f32 0.0, %v4546
        %v4548 = vpop.f32.mrb[0].mxu0
        %4549 = vmatprep.mubr.bf16.mxu0 0
        %4550 = vmatmul.mubr.bf16.gmra.mrb[0].mxu0 %v4378
        %v4551 = vpop.f32.mrb[0].mxu0
        %v4552 = vadd.f32 0.0, %v4551
        %v4553 = vpop.f32.mrb[0].mxu0
        %v4554 = vpop.f32.mrb[0].mxu0
        %v4555 = vadd.f32 0.0, %v4554
        %v4556 = vpop.f32.mrb[0].mxu0
        %4557 = vmatprep.mubr.bf16.mxu0 0
        %4558 = vmatmul.mubr.bf16.gmra.mrb[0].mxu0 %v4381
        %v4559 = vpop.f32.mrb[0].mxu0
        %v4560 = vadd.f32 0.0, %v4559
        %v4561 = vpop.f32.mrb[0].mxu0
        %v4562 = vpop.f32.mrb[0].mxu0
        %v4563 = vadd.f32 0.0, %v4562
        %v4564 = vpop.f32.mrb[0].mxu0
        %4565 = vmatprep.mubr.bf16.mxu0 0
        %4566 = vmatmul.mubr.bf16.gmra.mrb[0].mxu0 %v4384
        %v4567 = vpop.f32.mrb[0].mxu0
        %v4568 = vadd.f32 0.0, %v4567
        %v4569 = vpop.f32.mrb[0].mxu0
        %v4570 = vpop.f32.mrb[0].mxu0
        %v4571 = vadd.f32 0.0, %v4570
        %v4572 = vpop.f32.mrb[0].mxu0
        %4573 = vmatprep.mubr.bf16.mxu0 0
        %4574 = vmatmul.mubr.bf16.gmra.mrb[0].mxu0 %v4387
        %v4575 = vpop.f32.mrb[0].mxu0
        %v4576 = vadd.f32 0.0, %v4575
        %v4577 = vpop.f32.mrb[0].mxu0
        %v4578 = vpop.f32.mrb[0].mxu0
        %v4579 = vadd.f32 0.0, %v4578
        %v4580 = vpop.f32.mrb[0].mxu0
        %4581 = vmatprep.mubr.bf16.mxu0 0
        %4582 = vmatmul.mubr.bf16.gmra.mrb[0].mxu0 %v4390
        %v4583 = vpop.f32.mrb[0].mxu0
        %v4584 = vadd.f32 0.0, %v4583
        %v4585 = vpop.f32.mrb[0].mxu0
        %v4586 = vpop.f32.mrb[0].mxu0
        %v4587 = vadd.f32 0.0, %v4586
        %v4588 = vpop.f32.mrb[0].mxu0
        %4589 = vmatprep.mubr.bf16.mxu0 0
        %4590 = vmatmul.mubr.bf16.gmra.mrb[0].mxu0 %v4393
        %v4591 = vpop.f32.mrb[0].mxu0
        %v4592 = vadd.f32 0.0, %v4591
        %v4593 = vpop.f32.mrb[0].mxu0
        %v4594 = vpop.f32.mrb[0].mxu0
        %v4595 = vadd.f32 0.0, %v4594
        %v4596 = vpop.f32.mrb[0].mxu0
        %4597 = vmatprep.mubr.bf16.mxu0 0
        %4598 = vmatmul.mubr.bf16.gmra.mrb[0].mxu0 %v4396
        %v4599 = vpop.f32.mrb[0].mxu0
        %v4600 = vadd.f32 0.0, %v4599
        %v4601 = vpop.f32.mrb[0].mxu0
        %v4602 = vpop.f32.mrb[0].mxu0
        %v4603 = vadd.f32 0.0, %v4602
        %v4604 = vpop.f32.mrb[0].mxu0
        %4605 = vmatprep.mubr.bf16.mxu0 0
        %4606 = vmatmul.mubr.bf16.gmra.mrb[0].mxu0 %v4399
        %v4607 = vpop.f32.mrb[0].mxu0
        %v4608 = vadd.f32 0.0, %v4607
        %v4609 = vpop.f32.mrb[0].mxu0
        %v4610 = vpop.f32.mrb[0].mxu0
        %v4611 = vadd.f32 0.0, %v4610
        %v4612 = vpop.f32.mrb[0].mxu0
        %4613 = vmatprep.mubr.bf16.mxu0 0
        %4614 = vmatmul.mubr.bf16.gmra.mrb[0].mxu0 %v4402
        %v4615 = vpop.f32.mrb[0].mxu0
        %v4616 = vadd.f32 0.0, %v4615
        %v4617 = vpop.f32.mrb[0].mxu0
        %v4618 = vpop.f32.mrb[0].mxu0
        %v4619 = vadd.f32 0.0, %v4618
        %v4620 = vpop.f32.mrb[0].mxu0
        %4621 = vmatprep.mubr.bf16.mxu0 0
        %4622 = vmatmul.mubr.bf16.gmra.mrb[0].mxu0 %v4405
        %v4623 = vpop.f32.mrb[0].mxu0
        %v4624 = vadd.f32 0.0, %v4623
        %v4625 = vpop.f32.mrb[0].mxu0
        %v4626 = vpop.f32.mrb[0].mxu0
        %v4627 = vadd.f32 0.0, %v4626
        %v4628 = vpop.f32.mrb[0].mxu0
        %4629 = vmatprep.mubr.bf16.mxu0 0
        %4630 = vmatmul.mubr.bf16.gmra.mrb[0].mxu0 %v4408
        %v4631 = vpop.f32.mrb[0].mxu0
        %v4632 = vadd.f32 0.0, %v4631
        %v4633 = vpop.f32.mrb[0].mxu0
        %v4634 = vpop.f32.mrb[0].mxu0
        %v4635 = vadd.f32 0.0, %v4634
        %v4636 = vpop.f32.mrb[0].mxu0
        %4637 = vdwg.mxu0
        %v4638 = vld [vmem:[#allocation3] sm:$0xff]
        %v4639 = vld [vmem:[#allocation3 + $0x8] sm:$0xff]
        %v4640 = vld [vmem:[#allocation3 + $0x10] sm:$0xff]
        %v4641 = vld [vmem:[#allocation3 + $0x18] sm:$0xff]
        %v4642 = vld [vmem:[#allocation3 + $0x20] sm:$0xff]
        %v4643 = vld [vmem:[#allocation3 + $0x28] sm:$0xff]
        %v4644 = vld [vmem:[#allocation3 + $0x30] sm:$0xff]
        %v4645 = vld [vmem:[#allocation3 + $0x38] sm:$0xff]
        %v4646 = vld [vmem:[#allocation3 + $0x40] sm:$0xff]
        %v4647 = vld [vmem:[#allocation3 + $0x48] sm:$0xff]
        %v4648 = vld [vmem:[#allocation3 + $0x50] sm:$0xff]
        %v4649 = vld [vmem:[#allocation3 + $0x58] sm:$0xff]
        %v4650 = vld [vmem:[#allocation3 + $0x60] sm:$0xff]
        %v4651 = vld [vmem:[#allocation3 + $0x68] sm:$0xff]
        %v4652 = vld [vmem:[#allocation3 + $0x70] sm:$0xff]
        %v4653 = vld [vmem:[#allocation3 + $0x78] sm:$0xff]
        %v4654 = vld [vmem:[#allocation3 + $0x80] sm:$0xff]
        %v4655 = vld [vmem:[#allocation3 + $0x88] sm:$0xff]
        %v4656 = vld [vmem:[#allocation3 + $0x90] sm:$0xff]
        %v4657 = vld [vmem:[#allocation3 + $0x98] sm:$0xff]
        %v4658 = vld [vmem:[#allocation3 + $0xa0] sm:$0xff]
        %v4659 = vld [vmem:[#allocation3 + $0xa8] sm:$0xff]
        %v4660 = vld [vmem:[#allocation3 + $0xb0] sm:$0xff]
        %v4661 = vld [vmem:[#allocation3 + $0xb8] sm:$0xff]
        %v4662 = vld [vmem:[#allocation3 + $0xc0] sm:$0xff]
        %v4663 = vld [vmem:[#allocation3 + $0xc8] sm:$0xff]
        %v4664 = vld [vmem:[#allocation3 + $0xd0] sm:$0xff]
        %v4665 = vld [vmem:[#allocation3 + $0xd8] sm:$0xff]
        %v4666 = vld [vmem:[#allocation3 + $0xe0] sm:$0xff]
        %v4667 = vld [vmem:[#allocation3 + $0xe8] sm:$0xff]
        %v4668 = vld [vmem:[#allocation3 + $0xf0] sm:$0xff]
        %v4669 = vld [vmem:[#allocation3 + $0xf8] sm:$0xff]
        %v4670 = vld [vmem:[#allocation3 + $0x100] sm:$0xff]
        %v4671 = vld [vmem:[#allocation3 + $0x108] sm:$0xff]
        %v4672 = vld [vmem:[#allocation3 + $0x110] sm:$0xff]
        %v4673 = vld [vmem:[#allocation3 + $0x118] sm:$0xff]
        %v4674 = vld [vmem:[#allocation3 + $0x120] sm:$0xff]
        %v4675 = vld [vmem:[#allocation3 + $0x128] sm:$0xff]
        %v4676 = vld [vmem:[#allocation3 + $0x130] sm:$0xff]
        %v4677 = vld [vmem:[#allocation3 + $0x138] sm:$0xff]
        %v4678 = vld [vmem:[#allocation3 + $0x140] sm:$0xff]
        %v4679 = vld [vmem:[#allocation3 + $0x148] sm:$0xff]
        %v4680 = vld [vmem:[#allocation3 + $0x150] sm:$0xff]
        %v4681 = vld [vmem:[#allocation3 + $0x158] sm:$0xff]
        %v4682 = vld [vmem:[#allocation3 + $0x160] sm:$0xff]
        %v4683 = vld [vmem:[#allocation3 + $0x168] sm:$0xff]
        %v4684 = vld [vmem:[#allocation3 + $0x170] sm:$0xff]
        %v4685 = vld [vmem:[#allocation3 + $0x178] sm:$0xff]
        %v4686 = vadd.f32 %v4638, %v4448
        %v4687 = vadd.f32 %v4639, %v4451
        %v4688 = vadd.f32 %v4640, %v4456
        %v4689 = vadd.f32 %v4641, %v4459
        %v4690 = vadd.f32 %v4642, %v4464
        %v4691 = vadd.f32 %v4643, %v4467
        %v4692 = vadd.f32 %v4644, %v4472
        %v4693 = vadd.f32 %v4645, %v4475
        %v4694 = vadd.f32 %v4646, %v4480
        %v4695 = vadd.f32 %v4647, %v4483
        %v4696 = vadd.f32 %v4648, %v4488
        %v4697 = vadd.f32 %v4649, %v4491
        %v4698 = vadd.f32 %v4650, %v4496
        %v4699 = vadd.f32 %v4651, %v4499
        %v4700 = vadd.f32 %v4652, %v4504
        %v4701 = vadd.f32 %v4653, %v4507
        %v4702 = vadd.f32 %v4654, %v4512
        %v4703 = vadd.f32 %v4655, %v4515
        %v4704 = vadd.f32 %v4656, %v4520
        %v4705 = vadd.f32 %v4657, %v4523
        %v4706 = vadd.f32 %v4658, %v4528
        %v4707 = vadd.f32 %v4659, %v4531
        %v4708 = vadd.f32 %v4660, %v4536
        %v4709 = vadd.f32 %v4661, %v4539
        %v4710 = vadd.f32 %v4662, %v4544
        %v4711 = vadd.f32 %v4663, %v4547
        %v4712 = vadd.f32 %v4664, %v4552
        %v4713 = vadd.f32 %v4665, %v4555
        %v4714 = vadd.f32 %v4666, %v4560
        %v4715 = vadd.f32 %v4667, %v4563
        %v4716 = vadd.f32 %v4668, %v4568
        %v4717 = vadd.f32 %v4669, %v4571
        %v4718 = vadd.f32 %v4670, %v4576
        %v4719 = vadd.f32 %v4671, %v4579
        %v4720 = vadd.f32 %v4672, %v4584
        %v4721 = vadd.f32 %v4673, %v4587
        %v4722 = vadd.f32 %v4674, %v4592
        %v4723 = vadd.f32 %v4675, %v4595
        %v4724 = vadd.f32 %v4676, %v4600
        %v4725 = vadd.f32 %v4677, %v4603
        %v4726 = vadd.f32 %v4678, %v4608
        %v4727 = vadd.f32 %v4679, %v4611
        %v4728 = vadd.f32 %v4680, %v4616
        %v4729 = vadd.f32 %v4681, %v4619
        %v4730 = vadd.f32 %v4682, %v4624
        %v4731 = vadd.f32 %v4683, %v4627
        %v4732 = vadd.f32 %v4684, %v4632
        %v4733 = vadd.f32 %v4685, %v4635
        %4734 = vst [vmem:[#allocation3] sm:$0xff] %v4686
        %4735 = vst [vmem:[#allocation3 + $0x8] sm:$0xff] %v4687
        %4736 = vst [vmem:[#allocation3 + $0x10] sm:$0xff] %v4688
        %4737 = vst [vmem:[#allocation3 + $0x18] sm:$0xff] %v4689
        %4738 = vst [vmem:[#allocation3 + $0x20] sm:$0xff] %v4690
        %4739 = vst [vmem:[#allocation3 + $0x28] sm:$0xff] %v4691
        %4740 = vst [vmem:[#allocation3 + $0x30] sm:$0xff] %v4692
        %4741 = vst [vmem:[#allocation3 + $0x38] sm:$0xff] %v4693
        %4742 = vst [vmem:[#allocation3 + $0x40] sm:$0xff] %v4694
        %4743 = vst [vmem:[#allocation3 + $0x48] sm:$0xff] %v4695
        %4744 = vst [vmem:[#allocation3 + $0x50] sm:$0xff] %v4696
        %4745 = vst [vmem:[#allocation3 + $0x58] sm:$0xff] %v4697
        %4746 = vst [vmem:[#allocation3 + $0x60] sm:$0xff] %v4698
        %4747 = vst [vmem:[#allocation3 + $0x68] sm:$0xff] %v4699
        %4748 = vst [vmem:[#allocation3 + $0x70] sm:$0xff] %v4700
        %4749 = vst [vmem:[#allocation3 + $0x78] sm:$0xff] %v4701
        %4750 = vst [vmem:[#allocation3 + $0x80] sm:$0xff] %v4702
        %4751 = vst [vmem:[#allocation3 + $0x88] sm:$0xff] %v4703
        %4752 = vst [vmem:[#allocation3 + $0x90] sm:$0xff] %v4704
        %4753 = vst [vmem:[#allocation3 + $0x98] sm:$0xff] %v4705
        %4754 = vst [vmem:[#allocation3 + $0xa0] sm:$0xff] %v4706
        %4755 = vst [vmem:[#allocation3 + $0xa8] sm:$0xff] %v4707
        %4756 = vst [vmem:[#allocation3 + $0xb0] sm:$0xff] %v4708
        %4757 = vst [vmem:[#allocation3 + $0xb8] sm:$0xff] %v4709
        %4758 = vst [vmem:[#allocation3 + $0xc0] sm:$0xff] %v4710
        %4759 = vst [vmem:[#allocation3 + $0xc8] sm:$0xff] %v4711
        %4760 = vst [vmem:[#allocation3 + $0xd0] sm:$0xff] %v4712
        %4761 = vst [vmem:[#allocation3 + $0xd8] sm:$0xff] %v4713
        %4762 = vst [vmem:[#allocation3 + $0xe0] sm:$0xff] %v4714
        %4763 = vst [vmem:[#allocation3 + $0xe8] sm:$0xff] %v4715
        %4764 = vst [vmem:[#allocation3 + $0xf0] sm:$0xff] %v4716
        %4765 = vst [vmem:[#allocation3 + $0xf8] sm:$0xff] %v4717
        %4766 = vst [vmem:[#allocation3 + $0x100] sm:$0xff] %v4718
        %4767 = vst [vmem:[#allocation3 + $0x108] sm:$0xff] %v4719
        %4768 = vst [vmem:[#allocation3 + $0x110] sm:$0xff] %v4720
        %4769 = vst [vmem:[#allocation3 + $0x118] sm:$0xff] %v4721
        %4770 = vst [vmem:[#allocation3 + $0x120] sm:$0xff] %v4722
        %4771 = vst [vmem:[#allocation3 + $0x128] sm:$0xff] %v4723
        %4772 = vst [vmem:[#allocation3 + $0x130] sm:$0xff] %v4724
        %4773 = vst [vmem:[#allocation3 + $0x138] sm:$0xff] %v4725
        %4774 = vst [vmem:[#allocation3 + $0x140] sm:$0xff] %v4726
        %4775 = vst [vmem:[#allocation3 + $0x148] sm:$0xff] %v4727
        %4776 = vst [vmem:[#allocation3 + $0x150] sm:$0xff] %v4728
        %4777 = vst [vmem:[#allocation3 + $0x158] sm:$0xff] %v4729
        %4778 = vst [vmem:[#allocation3 + $0x160] sm:$0xff] %v4730
        %4779 = vst [vmem:[#allocation3 + $0x168] sm:$0xff] %v4731
        %4780 = vst [vmem:[#allocation3 + $0x170] sm:$0xff] %v4732
        %4781 = vst [vmem:[#allocation3 + $0x178] sm:$0xff] %v4733
        %v4782 = vld [vmem:[#allocation2 + $0x20] sm:$0xf0]
        %v4783 = vld [vmem:[#allocation2 + $0x28] sm:$0xff]
        %v4784 = vld [vmem:[#allocation2 + $0x30] sm:$0xff]
        %v4785 = vld [vmem:[#allocation2 + $0x38] sm:$0xff]
        %v4786 = vld [vmem:[#allocation2 + $0x40] sm:$0xff]
        %v4787 = vld [vmem:[#allocation2 + $0x48] sm:$0xff]
        %v4788 = vld [vmem:[#allocation2 + $0x50] sm:$0xff]
        %v4789 = vld [vmem:[#allocation2 + $0x58] sm:$0xff]
        %v4790 = vld [vmem:[#allocation2 + $0x60] sm:$0xff]
        %v4791 = vld [vmem:[#allocation2 + $0x68] sm:$0xff]
        %v4792 = vld [vmem:[#allocation2 + $0x70] sm:$0xff]
        %v4793 = vld [vmem:[#allocation2 + $0x78] sm:$0xff]
        %v4794 = vld [vmem:[#allocation2 + $0x80] sm:$0xff]
        %v4795 = vld [vmem:[#allocation2 + $0x88] sm:$0xff]
        %v4796 = vld [vmem:[#allocation2 + $0x90] sm:$0xff]
        %v4797 = vld [vmem:[#allocation2 + $0x98] sm:$0xff]
        %v4798 = vld [vmem:[#allocation2 + $0xa0] sm:$0xff]
        %v4799 = vld [vmem:[#allocation2 + $0xa8] sm:$0xff]
        %v4800 = vld [vmem:[#allocation2 + $0xb0] sm:$0xff]
        %v4801 = vld [vmem:[#allocation2 + $0xb8] sm:$0xff]
        %v4802 = vld [vmem:[#allocation2 + $0xc0] sm:$0xff]
        %v4803 = vld [vmem:[#allocation2 + $0xc8] sm:$0xff]
        %v4804 = vld [vmem:[#allocation2 + $0xd0] sm:$0xff]
        %v4805 = vld [vmem:[#allocation2 + $0xd8] sm:$0xff]
        %v4806 = vld [vmem:[#allocation2 + $0xe0] sm:$0xf]
        %s4807 = scalar_lea.vmem %s210, 14
        %v4808 = vld [vmem:[%s4807] sm:$0x3]
        %v4834 = vrot.slane %v4782, 4
        %v4835 = vrot.slane %v4783, 4
        %v4836 = vsel %vm1091, %v4834, %v4835
        %v4837 = vrot.slane %v4784, 4
        %v4838 = vsel %vm1091, %v4835, %v4837
        %v4839 = vrot.slane %v4785, 4
        %v4840 = vsel %vm1091, %v4837, %v4839
        %v4841 = vrot.slane %v4786, 4
        %v4842 = vsel %vm1091, %v4839, %v4841
        %v4843 = vrot.slane %v4787, 4
        %v4844 = vsel %vm1091, %v4841, %v4843
        %v4845 = vrot.slane %v4788, 4
        %v4846 = vsel %vm1091, %v4843, %v4845
        %v4847 = vrot.slane %v4789, 4
        %v4848 = vsel %vm1091, %v4845, %v4847
        %v4849 = vrot.slane %v4790, 4
        %v4850 = vsel %vm1091, %v4847, %v4849
        %v4851 = vrot.slane %v4791, 4
        %v4852 = vsel %vm1091, %v4849, %v4851
        %v4853 = vrot.slane %v4792, 4
        %v4854 = vsel %vm1091, %v4851, %v4853
        %v4855 = vrot.slane %v4793, 4
        %v4856 = vsel %vm1091, %v4853, %v4855
        %v4857 = vrot.slane %v4794, 4
        %v4858 = vsel %vm1091, %v4855, %v4857
        %v4859 = vrot.slane %v4795, 4
        %v4860 = vsel %vm1091, %v4857, %v4859
        %v4861 = vrot.slane %v4796, 4
        %v4862 = vsel %vm1091, %v4859, %v4861
        %v4863 = vrot.slane %v4797, 4
        %v4864 = vsel %vm1091, %v4861, %v4863
        %v4865 = vrot.slane %v4798, 4
        %v4866 = vsel %vm1091, %v4863, %v4865
        %v4867 = vrot.slane %v4799, 4
        %v4868 = vsel %vm1091, %v4865, %v4867
        %v4869 = vrot.slane %v4800, 4
        %v4870 = vsel %vm1091, %v4867, %v4869
        %v4871 = vrot.slane %v4801, 4
        %v4872 = vsel %vm1091, %v4869, %v4871
        %v4873 = vrot.slane %v4802, 4
        %v4874 = vsel %vm1091, %v4871, %v4873
        %v4875 = vrot.slane %v4803, 4
        %v4876 = vsel %vm1091, %v4873, %v4875
        %v4877 = vrot.slane %v4804, 4
        %v4878 = vsel %vm1091, %v4875, %v4877
        %v4879 = vrot.slane %v4805, 4
        %v4880 = vsel %vm1091, %v4877, %v4879
        %v4881 = vrot.slane %v4806, 4
        %v4882 = vsel %vm1091, %v4879, %v4881
        %v4884 = vsel %vm686, %v4836, 0
        %v4887 = vsel %vm686, %v4838, 0
        %v4890 = vsel %vm686, %v4840, 0
        %v4893 = vsel %vm686, %v4842, 0
        %v4896 = vsel %vm686, %v4844, 0
        %v4899 = vsel %vm686, %v4846, 0
        %v4902 = vsel %vm686, %v4848, 0
        %v4905 = vsel %vm686, %v4850, 0
        %v4908 = vsel %vm686, %v4852, 0
        %v4911 = vsel %vm686, %v4854, 0
        %v4914 = vsel %vm686, %v4856, 0
        %v4917 = vsel %vm686, %v4858, 0
        %v4920 = vsel %vm686, %v4860, 0
        %v4923 = vsel %vm686, %v4862, 0
        %v4926 = vsel %vm686, %v4864, 0
        %v4929 = vsel %vm686, %v4866, 0
        %v4932 = vsel %vm686, %v4868, 0
        %v4935 = vsel %vm686, %v4870, 0
        %v4938 = vsel %vm686, %v4872, 0
        %v4941 = vsel %vm686, %v4874, 0
        %v4944 = vsel %vm686, %v4876, 0
        %v4947 = vsel %vm686, %v4878, 0
        %v4950 = vsel %vm686, %v4880, 0
        %v4953 = vsel %vm686, %v4882, 0
        %v4956 = vand.u32 %v4808, %v762
        %4958 = vmatprep.subr.bf16.mxu0 0
        %4959 = vmatpush1.bf16.msra.mxu0 %v4956
        %4960 = vmatprep.subr.bf16.mxu0 0
        %4961 = vmatpush1.bf16.msra.mxu0 0
        %4962 = vmatprep.subr.bf16.mxu0 0
        %4963 = vmatpush1.bf16.msra.mxu0 0
        %4964 = vmatprep.subr.bf16.mxu0 0
        %4965 = vmatpush1.bf16.msra.mxu0 0
        %4966 = vmatprep.subr.bf16.mxu0 0
        %4967 = vmatpush1.bf16.msra.mxu0 0
        %4968 = vmatprep.subr.bf16.mxu0 0
        %4969 = vmatpush1.bf16.msra.mxu0 0
        %4970 = vmatprep.subr.bf16.mxu0 0
        %4971 = vmatpush1.bf16.msra.mxu0 0
        %4972 = vmatprep.subr.bf16.mxu0 0
        %4973 = vmatpush1.bf16.msra.mxu0 0
        %4974 = vmatprep.subr.bf16.mxu0 0
        %4975 = vmatpush1.bf16.msra.mxu0 0
        %4976 = vmatprep.subr.bf16.mxu0 0
        %4977 = vmatpush1.bf16.msra.mxu0 0
        %4978 = vmatprep.subr.bf16.mxu0 0
        %4979 = vmatpush1.bf16.msra.mxu0 0
        %4980 = vmatprep.subr.bf16.mxu0 0
        %4981 = vmatpush1.bf16.msra.mxu0 0
        %4982 = vmatprep.subr.bf16.mxu0 0
        %4983 = vmatpush1.bf16.msra.mxu0 0
        %4984 = vmatprep.subr.bf16.mxu0 0
        %4985 = vmatpush1.bf16.msra.mxu0 0
        %4986 = vmatprep.subr.bf16.mxu0 0
        %4987 = vmatpush1.bf16.msra.mxu0 0
        %4988 = vmatprep.subr.bf16.mxu0 0
        %4989 = vmatpush1.bf16.msra.mxu0 0
        %4990 = vmatprep.mubr.bf16.mxu0 0
        %4991 = vmatmul.mubr.bf16.gmra.mrb[0].mxu0 %v4884
        %v4992 = vpop.f32.mrb[0].mxu0
        %v4993 = vadd.f32 0.0, %v4992
        %v4994 = vpop.f32.mrb[0].mxu0
        %v4995 = vpop.f32.mrb[0].mxu0
        %v4996 = vadd.f32 0.0, %v4995
        %v4997 = vpop.f32.mrb[0].mxu0
        %4998 = vmatprep.mubr.bf16.mxu0 0
        %4999 = vmatmul.mubr.bf16.gmra.mrb[0].mxu0 %v4887
        %v5000 = vpop.f32.mrb[0].mxu0
        %v5001 = vadd.f32 0.0, %v5000
        %v5002 = vpop.f32.mrb[0].mxu0
        %v5003 = vpop.f32.mrb[0].mxu0
        %v5004 = vadd.f32 0.0, %v5003
        %v5005 = vpop.f32.mrb[0].mxu0
        %5006 = vmatprep.mubr.bf16.mxu0 0
        %5007 = vmatmul.mubr.bf16.gmra.mrb[0].mxu0 %v4890
        %v5008 = vpop.f32.mrb[0].mxu0
        %v5009 = vadd.f32 0.0, %v5008
        %v5010 = vpop.f32.mrb[0].mxu0
        %v5011 = vpop.f32.mrb[0].mxu0
        %v5012 = vadd.f32 0.0, %v5011
        %v5013 = vpop.f32.mrb[0].mxu0
        %5014 = vmatprep.mubr.bf16.mxu0 0
        %5015 = vmatmul.mubr.bf16.gmra.mrb[0].mxu0 %v4893
        %v5016 = vpop.f32.mrb[0].mxu0
        %v5017 = vadd.f32 0.0, %v5016
        %v5018 = vpop.f32.mrb[0].mxu0
        %v5019 = vpop.f32.mrb[0].mxu0
        %v5020 = vadd.f32 0.0, %v5019
        %v5021 = vpop.f32.mrb[0].mxu0
        %5022 = vmatprep.mubr.bf16.mxu0 0
        %5023 = vmatmul.mubr.bf16.gmra.mrb[0].mxu0 %v4896
        %v5024 = vpop.f32.mrb[0].mxu0
        %v5025 = vadd.f32 0.0, %v5024
        %v5026 = vpop.f32.mrb[0].mxu0
        %v5027 = vpop.f32.mrb[0].mxu0
        %v5028 = vadd.f32 0.0, %v5027
        %v5029 = vpop.f32.mrb[0].mxu0
        %5030 = vmatprep.mubr.bf16.mxu0 0
        %5031 = vmatmul.mubr.bf16.gmra.mrb[0].mxu0 %v4899
        %v5032 = vpop.f32.mrb[0].mxu0
        %v5033 = vadd.f32 0.0, %v5032
        %v5034 = vpop.f32.mrb[0].mxu0
        %v5035 = vpop.f32.mrb[0].mxu0
        %v5036 = vadd.f32 0.0, %v5035
        %v5037 = vpop.f32.mrb[0].mxu0
        %5038 = vmatprep.mubr.bf16.mxu0 0
        %5039 = vmatmul.mubr.bf16.gmra.mrb[0].mxu0 %v4902
        %v5040 = vpop.f32.mrb[0].mxu0
        %v5041 = vadd.f32 0.0, %v5040
        %v5042 = vpop.f32.mrb[0].mxu0
        %v5043 = vpop.f32.mrb[0].mxu0
        %v5044 = vadd.f32 0.0, %v5043
        %v5045 = vpop.f32.mrb[0].mxu0
        %5046 = vmatprep.mubr.bf16.mxu0 0
        %5047 = vmatmul.mubr.bf16.gmra.mrb[0].mxu0 %v4905
        %v5048 = vpop.f32.mrb[0].mxu0
        %v5049 = vadd.f32 0.0, %v5048
        %v5050 = vpop.f32.mrb[0].mxu0
        %v5051 = vpop.f32.mrb[0].mxu0
        %v5052 = vadd.f32 0.0, %v5051
        %v5053 = vpop.f32.mrb[0].mxu0
        %5054 = vmatprep.mubr.bf16.mxu0 0
        %5055 = vmatmul.mubr.bf16.gmra.mrb[0].mxu0 %v4908
        %v5056 = vpop.f32.mrb[0].mxu0
        %v5057 = vadd.f32 0.0, %v5056
        %v5058 = vpop.f32.mrb[0].mxu0
        %v5059 = vpop.f32.mrb[0].mxu0
        %v5060 = vadd.f32 0.0, %v5059
        %v5061 = vpop.f32.mrb[0].mxu0
        %5062 = vmatprep.mubr.bf16.mxu0 0
        %5063 = vmatmul.mubr.bf16.gmra.mrb[0].mxu0 %v4911
        %v5064 = vpop.f32.mrb[0].mxu0
        %v5065 = vadd.f32 0.0, %v5064
        %v5066 = vpop.f32.mrb[0].mxu0
        %v5067 = vpop.f32.mrb[0].mxu0
        %v5068 = vadd.f32 0.0, %v5067
        %v5069 = vpop.f32.mrb[0].mxu0
        %5070 = vmatprep.mubr.bf16.mxu0 0
        %5071 = vmatmul.mubr.bf16.gmra.mrb[0].mxu0 %v4914
        %v5072 = vpop.f32.mrb[0].mxu0
        %v5073 = vadd.f32 0.0, %v5072
        %v5074 = vpop.f32.mrb[0].mxu0
        %v5075 = vpop.f32.mrb[0].mxu0
        %v5076 = vadd.f32 0.0, %v5075
        %v5077 = vpop.f32.mrb[0].mxu0
        %5078 = vmatprep.mubr.bf16.mxu0 0
        %5079 = vmatmul.mubr.bf16.gmra.mrb[0].mxu0 %v4917
        %v5080 = vpop.f32.mrb[0].mxu0
        %v5081 = vadd.f32 0.0, %v5080
        %v5082 = vpop.f32.mrb[0].mxu0
        %v5083 = vpop.f32.mrb[0].mxu0
        %v5084 = vadd.f32 0.0, %v5083
        %v5085 = vpop.f32.mrb[0].mxu0
        %5086 = vmatprep.mubr.bf16.mxu0 0
        %5087 = vmatmul.mubr.bf16.gmra.mrb[0].mxu0 %v4920
        %v5088 = vpop.f32.mrb[0].mxu0
        %v5089 = vadd.f32 0.0, %v5088
        %v5090 = vpop.f32.mrb[0].mxu0
        %v5091 = vpop.f32.mrb[0].mxu0
        %v5092 = vadd.f32 0.0, %v5091
        %v5093 = vpop.f32.mrb[0].mxu0
        %5094 = vmatprep.mubr.bf16.mxu0 0
        %5095 = vmatmul.mubr.bf16.gmra.mrb[0].mxu0 %v4923
        %v5096 = vpop.f32.mrb[0].mxu0
        %v5097 = vadd.f32 0.0, %v5096
        %v5098 = vpop.f32.mrb[0].mxu0
        %v5099 = vpop.f32.mrb[0].mxu0
        %v5100 = vadd.f32 0.0, %v5099
        %v5101 = vpop.f32.mrb[0].mxu0
        %5102 = vmatprep.mubr.bf16.mxu0 0
        %5103 = vmatmul.mubr.bf16.gmra.mrb[0].mxu0 %v4926
        %v5104 = vpop.f32.mrb[0].mxu0
        %v5105 = vadd.f32 0.0, %v5104
        %v5106 = vpop.f32.mrb[0].mxu0
        %v5107 = vpop.f32.mrb[0].mxu0
        %v5108 = vadd.f32 0.0, %v5107
        %v5109 = vpop.f32.mrb[0].mxu0
        %5110 = vmatprep.mubr.bf16.mxu0 0
        %5111 = vmatmul.mubr.bf16.gmra.mrb[0].mxu0 %v4929
        %v5112 = vpop.f32.mrb[0].mxu0
        %v5113 = vadd.f32 0.0, %v5112
        %v5114 = vpop.f32.mrb[0].mxu0
        %v5115 = vpop.f32.mrb[0].mxu0
        %v5116 = vadd.f32 0.0, %v5115
        %v5117 = vpop.f32.mrb[0].mxu0
        %5118 = vmatprep.mubr.bf16.mxu0 0
        %5119 = vmatmul.mubr.bf16.gmra.mrb[0].mxu0 %v4932
        %v5120 = vpop.f32.mrb[0].mxu0
        %v5121 = vadd.f32 0.0, %v5120
        %v5122 = vpop.f32.mrb[0].mxu0
        %v5123 = vpop.f32.mrb[0].mxu0
        %v5124 = vadd.f32 0.0, %v5123
        %v5125 = vpop.f32.mrb[0].mxu0
        %5126 = vmatprep.mubr.bf16.mxu0 0
        %5127 = vmatmul.mubr.bf16.gmra.mrb[0].mxu0 %v4935
        %v5128 = vpop.f32.mrb[0].mxu0
        %v5129 = vadd.f32 0.0, %v5128
        %v5130 = vpop.f32.mrb[0].mxu0
        %v5131 = vpop.f32.mrb[0].mxu0
        %v5132 = vadd.f32 0.0, %v5131
        %v5133 = vpop.f32.mrb[0].mxu0
        %5134 = vmatprep.mubr.bf16.mxu0 0
        %5135 = vmatmul.mubr.bf16.gmra.mrb[0].mxu0 %v4938
        %v5136 = vpop.f32.mrb[0].mxu0
        %v5137 = vadd.f32 0.0, %v5136
        %v5138 = vpop.f32.mrb[0].mxu0
        %v5139 = vpop.f32.mrb[0].mxu0
        %v5140 = vadd.f32 0.0, %v5139
        %v5141 = vpop.f32.mrb[0].mxu0
        %5142 = vmatprep.mubr.bf16.mxu0 0
        %5143 = vmatmul.mubr.bf16.gmra.mrb[0].mxu0 %v4941
        %v5144 = vpop.f32.mrb[0].mxu0
        %v5145 = vadd.f32 0.0, %v5144
        %v5146 = vpop.f32.mrb[0].mxu0
        %v5147 = vpop.f32.mrb[0].mxu0
        %v5148 = vadd.f32 0.0, %v5147
        %v5149 = vpop.f32.mrb[0].mxu0
        %5150 = vmatprep.mubr.bf16.mxu0 0
        %5151 = vmatmul.mubr.bf16.gmra.mrb[0].mxu0 %v4944
        %v5152 = vpop.f32.mrb[0].mxu0
        %v5153 = vadd.f32 0.0, %v5152
        %v5154 = vpop.f32.mrb[0].mxu0
        %v5155 = vpop.f32.mrb[0].mxu0
        %v5156 = vadd.f32 0.0, %v5155
        %v5157 = vpop.f32.mrb[0].mxu0
        %5158 = vmatprep.mubr.bf16.mxu0 0
        %5159 = vmatmul.mubr.bf16.gmra.mrb[0].mxu0 %v4947
        %v5160 = vpop.f32.mrb[0].mxu0
        %v5161 = vadd.f32 0.0, %v5160
        %v5162 = vpop.f32.mrb[0].mxu0
        %v5163 = vpop.f32.mrb[0].mxu0
        %v5164 = vadd.f32 0.0, %v5163
        %v5165 = vpop.f32.mrb[0].mxu0
        %5166 = vmatprep.mubr.bf16.mxu0 0
        %5167 = vmatmul.mubr.bf16.gmra.mrb[0].mxu0 %v4950
        %v5168 = vpop.f32.mrb[0].mxu0
        %v5169 = vadd.f32 0.0, %v5168
        %v5170 = vpop.f32.mrb[0].mxu0
        %v5171 = vpop.f32.mrb[0].mxu0
        %v5172 = vadd.f32 0.0, %v5171
        %v5173 = vpop.f32.mrb[0].mxu0
        %5174 = vmatprep.mubr.bf16.mxu0 0
        %5175 = vmatmul.mubr.bf16.gmra.mrb[0].mxu0 %v4953
        %v5176 = vpop.f32.mrb[0].mxu0
        %v5177 = vadd.f32 0.0, %v5176
        %v5178 = vpop.f32.mrb[0].mxu0
        %v5179 = vpop.f32.mrb[0].mxu0
        %v5180 = vadd.f32 0.0, %v5179
        %v5181 = vpop.f32.mrb[0].mxu0
        %5182 = vdwg.mxu0
        %v5183 = vld [vmem:[#allocation3] sm:$0xff]
        %v5184 = vld [vmem:[#allocation3 + $0x8] sm:$0xff]
        %v5185 = vld [vmem:[#allocation3 + $0x10] sm:$0xff]
        %v5186 = vld [vmem:[#allocation3 + $0x18] sm:$0xff]
        %v5187 = vld [vmem:[#allocation3 + $0x20] sm:$0xff]
        %v5188 = vld [vmem:[#allocation3 + $0x28] sm:$0xff]
        %v5189 = vld [vmem:[#allocation3 + $0x30] sm:$0xff]
        %v5190 = vld [vmem:[#allocation3 + $0x38] sm:$0xff]
        %v5191 = vld [vmem:[#allocation3 + $0x40] sm:$0xff]
        %v5192 = vld [vmem:[#allocation3 + $0x48] sm:$0xff]
        %v5193 = vld [vmem:[#allocation3 + $0x50] sm:$0xff]
        %v5194 = vld [vmem:[#allocation3 + $0x58] sm:$0xff]
        %v5195 = vld [vmem:[#allocation3 + $0x60] sm:$0xff]
        %v5196 = vld [vmem:[#allocation3 + $0x68] sm:$0xff]
        %v5197 = vld [vmem:[#allocation3 + $0x70] sm:$0xff]
        %v5198 = vld [vmem:[#allocation3 + $0x78] sm:$0xff]
        %v5199 = vld [vmem:[#allocation3 + $0x80] sm:$0xff]
        %v5200 = vld [vmem:[#allocation3 + $0x88] sm:$0xff]
        %v5201 = vld [vmem:[#allocation3 + $0x90] sm:$0xff]
        %v5202 = vld [vmem:[#allocation3 + $0x98] sm:$0xff]
        %v5203 = vld [vmem:[#allocation3 + $0xa0] sm:$0xff]
        %v5204 = vld [vmem:[#allocation3 + $0xa8] sm:$0xff]
        %v5205 = vld [vmem:[#allocation3 + $0xb0] sm:$0xff]
        %v5206 = vld [vmem:[#allocation3 + $0xb8] sm:$0xff]
        %v5207 = vld [vmem:[#allocation3 + $0xc0] sm:$0xff]
        %v5208 = vld [vmem:[#allocation3 + $0xc8] sm:$0xff]
        %v5209 = vld [vmem:[#allocation3 + $0xd0] sm:$0xff]
        %v5210 = vld [vmem:[#allocation3 + $0xd8] sm:$0xff]
        %v5211 = vld [vmem:[#allocation3 + $0xe0] sm:$0xff]
        %v5212 = vld [vmem:[#allocation3 + $0xe8] sm:$0xff]
        %v5213 = vld [vmem:[#allocation3 + $0xf0] sm:$0xff]
        %v5214 = vld [vmem:[#allocation3 + $0xf8] sm:$0xff]
        %v5215 = vld [vmem:[#allocation3 + $0x100] sm:$0xff]
        %v5216 = vld [vmem:[#allocation3 + $0x108] sm:$0xff]
        %v5217 = vld [vmem:[#allocation3 + $0x110] sm:$0xff]
        %v5218 = vld [vmem:[#allocation3 + $0x118] sm:$0xff]
        %v5219 = vld [vmem:[#allocation3 + $0x120] sm:$0xff]
        %v5220 = vld [vmem:[#allocation3 + $0x128] sm:$0xff]
        %v5221 = vld [vmem:[#allocation3 + $0x130] sm:$0xff]
        %v5222 = vld [vmem:[#allocation3 + $0x138] sm:$0xff]
        %v5223 = vld [vmem:[#allocation3 + $0x140] sm:$0xff]
        %v5224 = vld [vmem:[#allocation3 + $0x148] sm:$0xff]
        %v5225 = vld [vmem:[#allocation3 + $0x150] sm:$0xff]
        %v5226 = vld [vmem:[#allocation3 + $0x158] sm:$0xff]
        %v5227 = vld [vmem:[#allocation3 + $0x160] sm:$0xff]
        %v5228 = vld [vmem:[#allocation3 + $0x168] sm:$0xff]
        %v5229 = vld [vmem:[#allocation3 + $0x170] sm:$0xff]
        %v5230 = vld [vmem:[#allocation3 + $0x178] sm:$0xff]
        %v5231 = vadd.f32 %v5183, %v4993
        %v5232 = vadd.f32 %v5184, %v4996
        %v5233 = vadd.f32 %v5185, %v5001
        %v5234 = vadd.f32 %v5186, %v5004
        %v5235 = vadd.f32 %v5187, %v5009
        %v5236 = vadd.f32 %v5188, %v5012
        %v5237 = vadd.f32 %v5189, %v5017
        %v5238 = vadd.f32 %v5190, %v5020
        %v5239 = vadd.f32 %v5191, %v5025
        %v5240 = vadd.f32 %v5192, %v5028
        %v5241 = vadd.f32 %v5193, %v5033
        %v5242 = vadd.f32 %v5194, %v5036
        %v5243 = vadd.f32 %v5195, %v5041
        %v5244 = vadd.f32 %v5196, %v5044
        %v5245 = vadd.f32 %v5197, %v5049
        %v5246 = vadd.f32 %v5198, %v5052
        %v5247 = vadd.f32 %v5199, %v5057
        %v5248 = vadd.f32 %v5200, %v5060
        %v5249 = vadd.f32 %v5201, %v5065
        %v5250 = vadd.f32 %v5202, %v5068
        %v5251 = vadd.f32 %v5203, %v5073
        %v5252 = vadd.f32 %v5204, %v5076
        %v5253 = vadd.f32 %v5205, %v5081
        %v5254 = vadd.f32 %v5206, %v5084
        %v5255 = vadd.f32 %v5207, %v5089
        %v5256 = vadd.f32 %v5208, %v5092
        %v5257 = vadd.f32 %v5209, %v5097
        %v5258 = vadd.f32 %v5210, %v5100
        %v5259 = vadd.f32 %v5211, %v5105
        %v5260 = vadd.f32 %v5212, %v5108
        %v5261 = vadd.f32 %v5213, %v5113
        %v5262 = vadd.f32 %v5214, %v5116
        %v5263 = vadd.f32 %v5215, %v5121
        %v5264 = vadd.f32 %v5216, %v5124
        %v5265 = vadd.f32 %v5217, %v5129
        %v5266 = vadd.f32 %v5218, %v5132
        %v5267 = vadd.f32 %v5219, %v5137
        %v5268 = vadd.f32 %v5220, %v5140
        %v5269 = vadd.f32 %v5221, %v5145
        %v5270 = vadd.f32 %v5222, %v5148
        %v5271 = vadd.f32 %v5223, %v5153
        %v5272 = vadd.f32 %v5224, %v5156
        %v5273 = vadd.f32 %v5225, %v5161
        %v5274 = vadd.f32 %v5226, %v5164
        %v5275 = vadd.f32 %v5227, %v5169
        %v5276 = vadd.f32 %v5228, %v5172
        %v5277 = vadd.f32 %v5229, %v5177
        %v5278 = vadd.f32 %v5230, %v5180
        %5279 = vst [vmem:[#allocation3] sm:$0xff] %v5231
        %5280 = vst [vmem:[#allocation3 + $0x8] sm:$0xff] %v5232
        %5281 = vst [vmem:[#allocation3 + $0x10] sm:$0xff] %v5233
        %5282 = vst [vmem:[#allocation3 + $0x18] sm:$0xff] %v5234
        %5283 = vst [vmem:[#allocation3 + $0x20] sm:$0xff] %v5235
        %5284 = vst [vmem:[#allocation3 + $0x28] sm:$0xff] %v5236
        %5285 = vst [vmem:[#allocation3 + $0x30] sm:$0xff] %v5237
        %5286 = vst [vmem:[#allocation3 + $0x38] sm:$0xff] %v5238
        %5287 = vst [vmem:[#allocation3 + $0x40] sm:$0xff] %v5239
        %5288 = vst [vmem:[#allocation3 + $0x48] sm:$0xff] %v5240
        %5289 = vst [vmem:[#allocation3 + $0x50] sm:$0xff] %v5241
        %5290 = vst [vmem:[#allocation3 + $0x58] sm:$0xff] %v5242
        %5291 = vst [vmem:[#allocation3 + $0x60] sm:$0xff] %v5243
        %5292 = vst [vmem:[#allocation3 + $0x68] sm:$0xff] %v5244
        %5293 = vst [vmem:[#allocation3 + $0x70] sm:$0xff] %v5245
        %5294 = vst [vmem:[#allocation3 + $0x78] sm:$0xff] %v5246
        %5295 = vst [vmem:[#allocation3 + $0x80] sm:$0xff] %v5247
        %5296 = vst [vmem:[#allocation3 + $0x88] sm:$0xff] %v5248
        %5297 = vst [vmem:[#allocation3 + $0x90] sm:$0xff] %v5249
        %5298 = vst [vmem:[#allocation3 + $0x98] sm:$0xff] %v5250
        %5299 = vst [vmem:[#allocation3 + $0xa0] sm:$0xff] %v5251
        %5300 = vst [vmem:[#allocation3 + $0xa8] sm:$0xff] %v5252
        %5301 = vst [vmem:[#allocation3 + $0xb0] sm:$0xff] %v5253
        %5302 = vst [vmem:[#allocation3 + $0xb8] sm:$0xff] %v5254
        %5303 = vst [vmem:[#allocation3 + $0xc0] sm:$0xff] %v5255
        %5304 = vst [vmem:[#allocation3 + $0xc8] sm:$0xff] %v5256
        %5305 = vst [vmem:[#allocation3 + $0xd0] sm:$0xff] %v5257
        %5306 = vst [vmem:[#allocation3 + $0xd8] sm:$0xff] %v5258
        %5307 = vst [vmem:[#allocation3 + $0xe0] sm:$0xff] %v5259
        %5308 = vst [vmem:[#allocation3 + $0xe8] sm:$0xff] %v5260
        %5309 = vst [vmem:[#allocation3 + $0xf0] sm:$0xff] %v5261
        %5310 = vst [vmem:[#allocation3 + $0xf8] sm:$0xff] %v5262
        %5311 = vst [vmem:[#allocation3 + $0x100] sm:$0xff] %v5263
        %5312 = vst [vmem:[#allocation3 + $0x108] sm:$0xff] %v5264
        %5313 = vst [vmem:[#allocation3 + $0x110] sm:$0xff] %v5265
        %5314 = vst [vmem:[#allocation3 + $0x118] sm:$0xff] %v5266
        %5315 = vst [vmem:[#allocation3 + $0x120] sm:$0xff] %v5267
        %5316 = vst [vmem:[#allocation3 + $0x128] sm:$0xff] %v5268
        %5317 = vst [vmem:[#allocation3 + $0x130] sm:$0xff] %v5269
        %5318 = vst [vmem:[#allocation3 + $0x138] sm:$0xff] %v5270
        %5319 = vst [vmem:[#allocation3 + $0x140] sm:$0xff] %v5271
        %5320 = vst [vmem:[#allocation3 + $0x148] sm:$0xff] %v5272
        %5321 = vst [vmem:[#allocation3 + $0x150] sm:$0xff] %v5273
        %5322 = vst [vmem:[#allocation3 + $0x158] sm:$0xff] %v5274
        %5323 = vst [vmem:[#allocation3 + $0x160] sm:$0xff] %v5275
        %5324 = vst [vmem:[#allocation3 + $0x168] sm:$0xff] %v5276
        %5325 = vst [vmem:[#allocation3 + $0x170] sm:$0xff] %v5277
        %5326 = vst [vmem:[#allocation3 + $0x178] sm:$0xff] %v5278
        %v5327 = vld [vmem:[#allocation2 + $0x20] sm:$0xf0]
        %v5328 = vld [vmem:[#allocation2 + $0x28] sm:$0xff]
        %v5329 = vld [vmem:[#allocation2 + $0x30] sm:$0xff]
        %v5330 = vld [vmem:[#allocation2 + $0x38] sm:$0xff]
        %v5331 = vld [vmem:[#allocation2 + $0x40] sm:$0xff]
        %v5332 = vld [vmem:[#allocation2 + $0x48] sm:$0xff]
        %v5333 = vld [vmem:[#allocation2 + $0x50] sm:$0xff]
        %v5334 = vld [vmem:[#allocation2 + $0x58] sm:$0xff]
        %v5335 = vld [vmem:[#allocation2 + $0x60] sm:$0xff]
        %v5336 = vld [vmem:[#allocation2 + $0x68] sm:$0xff]
        %v5337 = vld [vmem:[#allocation2 + $0x70] sm:$0xff]
        %v5338 = vld [vmem:[#allocation2 + $0x78] sm:$0xff]
        %v5339 = vld [vmem:[#allocation2 + $0x80] sm:$0xff]
        %v5340 = vld [vmem:[#allocation2 + $0x88] sm:$0xff]
        %v5341 = vld [vmem:[#allocation2 + $0x90] sm:$0xff]
        %v5342 = vld [vmem:[#allocation2 + $0x98] sm:$0xff]
        %v5343 = vld [vmem:[#allocation2 + $0xa0] sm:$0xff]
        %v5344 = vld [vmem:[#allocation2 + $0xa8] sm:$0xff]
        %v5345 = vld [vmem:[#allocation2 + $0xb0] sm:$0xff]
        %v5346 = vld [vmem:[#allocation2 + $0xb8] sm:$0xff]
        %v5347 = vld [vmem:[#allocation2 + $0xc0] sm:$0xff]
        %v5348 = vld [vmem:[#allocation2 + $0xc8] sm:$0xff]
        %v5349 = vld [vmem:[#allocation2 + $0xd0] sm:$0xff]
        %v5350 = vld [vmem:[#allocation2 + $0xd8] sm:$0xff]
        %v5351 = vld [vmem:[#allocation2 + $0xe0] sm:$0x1f]
        %s5352 = scalar_lea.vmem %s210, 16
        %v5353 = vld [vmem:[%s5352] sm:$0x3]
        %v5355 = vshrl.u32 %v5327, 16
        %v5357 = vrot.slane %v5355, 4
        %v5358 = vshll.u32 %v5327, 16
        %v5360 = vrot.slane %v5358, 5
        %v5361 = vor.u32 %v5357, %v5360
        %v5363 = vshrl.u32 %v5328, 16
        %v5365 = vrot.slane %v5363, 4
        %v5366 = vshll.u32 %v5328, 16
        %v5368 = vrot.slane %v5366, 5
        %v5369 = vor.u32 %v5365, %v5368
        %v5370 = vsel %vm1612, %v5361, %v5369
        %v5372 = vshrl.u32 %v5329, 16
        %v5374 = vrot.slane %v5372, 4
        %v5375 = vshll.u32 %v5329, 16
        %v5377 = vrot.slane %v5375, 5
        %v5378 = vor.u32 %v5374, %v5377
        %v5379 = vsel %vm1612, %v5369, %v5378
        %v5381 = vshrl.u32 %v5330, 16
        %v5383 = vrot.slane %v5381, 4
        %v5384 = vshll.u32 %v5330, 16
        %v5386 = vrot.slane %v5384, 5
        %v5387 = vor.u32 %v5383, %v5386
        %v5388 = vsel %vm1612, %v5378, %v5387
        %v5390 = vshrl.u32 %v5331, 16
        %v5392 = vrot.slane %v5390, 4
        %v5393 = vshll.u32 %v5331, 16
        %v5395 = vrot.slane %v5393, 5
        %v5396 = vor.u32 %v5392, %v5395
        %v5397 = vsel %vm1612, %v5387, %v5396
        %v5399 = vshrl.u32 %v5332, 16
        %v5401 = vrot.slane %v5399, 4
        %v5402 = vshll.u32 %v5332, 16
        %v5404 = vrot.slane %v5402, 5
        %v5405 = vor.u32 %v5401, %v5404
        %v5406 = vsel %vm1612, %v5396, %v5405
        %v5408 = vshrl.u32 %v5333, 16
        %v5410 = vrot.slane %v5408, 4
        %v5411 = vshll.u32 %v5333, 16
        %v5413 = vrot.slane %v5411, 5
        %v5414 = vor.u32 %v5410, %v5413
        %v5415 = vsel %vm1612, %v5405, %v5414
        %v5417 = vshrl.u32 %v5334, 16
        %v5419 = vrot.slane %v5417, 4
        %v5420 = vshll.u32 %v5334, 16
        %v5422 = vrot.slane %v5420, 5
        %v5423 = vor.u32 %v5419, %v5422
        %v5424 = vsel %vm1612, %v5414, %v5423
        %v5426 = vshrl.u32 %v5335, 16
        %v5428 = vrot.slane %v5426, 4
        %v5429 = vshll.u32 %v5335, 16
        %v5431 = vrot.slane %v5429, 5
        %v5432 = vor.u32 %v5428, %v5431
        %v5433 = vsel %vm1612, %v5423, %v5432
        %v5435 = vshrl.u32 %v5336, 16
        %v5437 = vrot.slane %v5435, 4
        %v5438 = vshll.u32 %v5336, 16
        %v5440 = vrot.slane %v5438, 5
        %v5441 = vor.u32 %v5437, %v5440
        %v5442 = vsel %vm1612, %v5432, %v5441
        %v5444 = vshrl.u32 %v5337, 16
        %v5446 = vrot.slane %v5444, 4
        %v5447 = vshll.u32 %v5337, 16
        %v5449 = vrot.slane %v5447, 5
        %v5450 = vor.u32 %v5446, %v5449
        %v5451 = vsel %vm1612, %v5441, %v5450
        %v5453 = vshrl.u32 %v5338, 16
        %v5455 = vrot.slane %v5453, 4
        %v5456 = vshll.u32 %v5338, 16
        %v5458 = vrot.slane %v5456, 5
        %v5459 = vor.u32 %v5455, %v5458
        %v5460 = vsel %vm1612, %v5450, %v5459
        %v5462 = vshrl.u32 %v5339, 16
        %v5464 = vrot.slane %v5462, 4
        %v5465 = vshll.u32 %v5339, 16
        %v5467 = vrot.slane %v5465, 5
        %v5468 = vor.u32 %v5464, %v5467
        %v5469 = vsel %vm1612, %v5459, %v5468
        %v5471 = vshrl.u32 %v5340, 16
        %v5473 = vrot.slane %v5471, 4
        %v5474 = vshll.u32 %v5340, 16
        %v5476 = vrot.slane %v5474, 5
        %v5477 = vor.u32 %v5473, %v5476
        %v5478 = vsel %vm1612, %v5468, %v5477
        %v5480 = vshrl.u32 %v5341, 16
        %v5482 = vrot.slane %v5480, 4
        %v5483 = vshll.u32 %v5341, 16
        %v5485 = vrot.slane %v5483, 5
        %v5486 = vor.u32 %v5482, %v5485
        %v5487 = vsel %vm1612, %v5477, %v5486
        %v5489 = vshrl.u32 %v5342, 16
        %v5491 = vrot.slane %v5489, 4
        %v5492 = vshll.u32 %v5342, 16
        %v5494 = vrot.slane %v5492, 5
        %v5495 = vor.u32 %v5491, %v5494
        %v5496 = vsel %vm1612, %v5486, %v5495
        %v5498 = vshrl.u32 %v5343, 16
        %v5500 = vrot.slane %v5498, 4
        %v5501 = vshll.u32 %v5343, 16
        %v5503 = vrot.slane %v5501, 5
        %v5504 = vor.u32 %v5500, %v5503
        %v5505 = vsel %vm1612, %v5495, %v5504
        %v5507 = vshrl.u32 %v5344, 16
        %v5509 = vrot.slane %v5507, 4
        %v5510 = vshll.u32 %v5344, 16
        %v5512 = vrot.slane %v5510, 5
        %v5513 = vor.u32 %v5509, %v5512
        %v5514 = vsel %vm1612, %v5504, %v5513
        %v5516 = vshrl.u32 %v5345, 16
        %v5518 = vrot.slane %v5516, 4
        %v5519 = vshll.u32 %v5345, 16
        %v5521 = vrot.slane %v5519, 5
        %v5522 = vor.u32 %v5518, %v5521
        %v5523 = vsel %vm1612, %v5513, %v5522
        %v5525 = vshrl.u32 %v5346, 16
        %v5527 = vrot.slane %v5525, 4
        %v5528 = vshll.u32 %v5346, 16
        %v5530 = vrot.slane %v5528, 5
        %v5531 = vor.u32 %v5527, %v5530
        %v5532 = vsel %vm1612, %v5522, %v5531
        %v5534 = vshrl.u32 %v5347, 16
        %v5536 = vrot.slane %v5534, 4
        %v5537 = vshll.u32 %v5347, 16
        %v5539 = vrot.slane %v5537, 5
        %v5540 = vor.u32 %v5536, %v5539
        %v5541 = vsel %vm1612, %v5531, %v5540
        %v5543 = vshrl.u32 %v5348, 16
        %v5545 = vrot.slane %v5543, 4
        %v5546 = vshll.u32 %v5348, 16
        %v5548 = vrot.slane %v5546, 5
        %v5549 = vor.u32 %v5545, %v5548
        %v5550 = vsel %vm1612, %v5540, %v5549
        %v5552 = vshrl.u32 %v5349, 16
        %v5554 = vrot.slane %v5552, 4
        %v5555 = vshll.u32 %v5349, 16
        %v5557 = vrot.slane %v5555, 5
        %v5558 = vor.u32 %v5554, %v5557
        %v5559 = vsel %vm1612, %v5549, %v5558
        %v5561 = vshrl.u32 %v5350, 16
        %v5563 = vrot.slane %v5561, 4
        %v5564 = vshll.u32 %v5350, 16
        %v5566 = vrot.slane %v5564, 5
        %v5567 = vor.u32 %v5563, %v5566
        %v5568 = vsel %vm1612, %v5558, %v5567
        %v5570 = vshrl.u32 %v5351, 16
        %v5572 = vrot.slane %v5570, 4
        %v5573 = vshll.u32 %v5351, 16
        %v5575 = vrot.slane %v5573, 5
        %v5576 = vor.u32 %v5572, %v5575
        %v5577 = vsel %vm1612, %v5567, %v5576
        %v5579 = vsel %vm686, %v5370, 0
        %v5582 = vsel %vm686, %v5379, 0
        %v5585 = vsel %vm686, %v5388, 0
        %v5588 = vsel %vm686, %v5397, 0
        %v5591 = vsel %vm686, %v5406, 0
        %v5594 = vsel %vm686, %v5415, 0
        %v5597 = vsel %vm686, %v5424, 0
        %v5600 = vsel %vm686, %v5433, 0
        %v5603 = vsel %vm686, %v5442, 0
        %v5606 = vsel %vm686, %v5451, 0
        %v5609 = vsel %vm686, %v5460, 0
        %v5612 = vsel %vm686, %v5469, 0
        %v5615 = vsel %vm686, %v5478, 0
        %v5618 = vsel %vm686, %v5487, 0
        %v5621 = vsel %vm686, %v5496, 0
        %v5624 = vsel %vm686, %v5505, 0
        %v5627 = vsel %vm686, %v5514, 0
        %v5630 = vsel %vm686, %v5523, 0
        %v5633 = vsel %vm686, %v5532, 0
        %v5636 = vsel %vm686, %v5541, 0
        %v5639 = vsel %vm686, %v5550, 0
        %v5642 = vsel %vm686, %v5559, 0
        %v5645 = vsel %vm686, %v5568, 0
        %v5648 = vsel %vm686, %v5577, 0
        %v5651 = vand.u32 %v5353, %v762
        %5653 = vmatprep.subr.bf16.mxu0 0
        %5654 = vmatpush1.bf16.msra.mxu0 %v5651
        %5655 = vmatprep.subr.bf16.mxu0 0
        %5656 = vmatpush1.bf16.msra.mxu0 0
        %5657 = vmatprep.subr.bf16.mxu0 0
        %5658 = vmatpush1.bf16.msra.mxu0 0
        %5659 = vmatprep.subr.bf16.mxu0 0
        %5660 = vmatpush1.bf16.msra.mxu0 0
        %5661 = vmatprep.subr.bf16.mxu0 0
        %5662 = vmatpush1.bf16.msra.mxu0 0
        %5663 = vmatprep.subr.bf16.mxu0 0
        %5664 = vmatpush1.bf16.msra.mxu0 0
        %5665 = vmatprep.subr.bf16.mxu0 0
        %5666 = vmatpush1.bf16.msra.mxu0 0
        %5667 = vmatprep.subr.bf16.mxu0 0
        %5668 = vmatpush1.bf16.msra.mxu0 0
        %5669 = vmatprep.subr.bf16.mxu0 0
        %5670 = vmatpush1.bf16.msra.mxu0 0
        %5671 = vmatprep.subr.bf16.mxu0 0
        %5672 = vmatpush1.bf16.msra.mxu0 0
        %5673 = vmatprep.subr.bf16.mxu0 0
        %5674 = vmatpush1.bf16.msra.mxu0 0
        %5675 = vmatprep.subr.bf16.mxu0 0
        %5676 = vmatpush1.bf16.msra.mxu0 0
        %5677 = vmatprep.subr.bf16.mxu0 0
        %5678 = vmatpush1.bf16.msra.mxu0 0
        %5679 = vmatprep.subr.bf16.mxu0 0
        %5680 = vmatpush1.bf16.msra.mxu0 0
        %5681 = vmatprep.subr.bf16.mxu0 0
        %5682 = vmatpush1.bf16.msra.mxu0 0
        %5683 = vmatprep.subr.bf16.mxu0 0
        %5684 = vmatpush1.bf16.msra.mxu0 0
        %5685 = vmatprep.mubr.bf16.mxu0 0
        %5686 = vmatmul.mubr.bf16.gmra.mrb[0].mxu0 %v5579
        %v5687 = vpop.f32.mrb[0].mxu0
        %v5688 = vadd.f32 0.0, %v5687
        %v5689 = vpop.f32.mrb[0].mxu0
        %v5690 = vpop.f32.mrb[0].mxu0
        %v5691 = vadd.f32 0.0, %v5690
        %v5692 = vpop.f32.mrb[0].mxu0
        %5693 = vmatprep.mubr.bf16.mxu0 0
        %5694 = vmatmul.mubr.bf16.gmra.mrb[0].mxu0 %v5582
        %v5695 = vpop.f32.mrb[0].mxu0
        %v5696 = vadd.f32 0.0, %v5695
        %v5697 = vpop.f32.mrb[0].mxu0
        %v5698 = vpop.f32.mrb[0].mxu0
        %v5699 = vadd.f32 0.0, %v5698
        %v5700 = vpop.f32.mrb[0].mxu0
        %5701 = vmatprep.mubr.bf16.mxu0 0
        %5702 = vmatmul.mubr.bf16.gmra.mrb[0].mxu0 %v5585
        %v5703 = vpop.f32.mrb[0].mxu0
        %v5704 = vadd.f32 0.0, %v5703
        %v5705 = vpop.f32.mrb[0].mxu0
        %v5706 = vpop.f32.mrb[0].mxu0
        %v5707 = vadd.f32 0.0, %v5706
        %v5708 = vpop.f32.mrb[0].mxu0
        %5709 = vmatprep.mubr.bf16.mxu0 0
        %5710 = vmatmul.mubr.bf16.gmra.mrb[0].mxu0 %v5588
        %v5711 = vpop.f32.mrb[0].mxu0
        %v5712 = vadd.f32 0.0, %v5711
        %v5713 = vpop.f32.mrb[0].mxu0
        %v5714 = vpop.f32.mrb[0].mxu0
        %v5715 = vadd.f32 0.0, %v5714
        %v5716 = vpop.f32.mrb[0].mxu0
        %5717 = vmatprep.mubr.bf16.mxu0 0
        %5718 = vmatmul.mubr.bf16.gmra.mrb[0].mxu0 %v5591
        %v5719 = vpop.f32.mrb[0].mxu0
        %v5720 = vadd.f32 0.0, %v5719
        %v5721 = vpop.f32.mrb[0].mxu0
        %v5722 = vpop.f32.mrb[0].mxu0
        %v5723 = vadd.f32 0.0, %v5722
        %v5724 = vpop.f32.mrb[0].mxu0
        %5725 = vmatprep.mubr.bf16.mxu0 0
        %5726 = vmatmul.mubr.bf16.gmra.mrb[0].mxu0 %v5594
        %v5727 = vpop.f32.mrb[0].mxu0
        %v5728 = vadd.f32 0.0, %v5727
        %v5729 = vpop.f32.mrb[0].mxu0
        %v5730 = vpop.f32.mrb[0].mxu0
        %v5731 = vadd.f32 0.0, %v5730
        %v5732 = vpop.f32.mrb[0].mxu0
        %5733 = vmatprep.mubr.bf16.mxu0 0
        %5734 = vmatmul.mubr.bf16.gmra.mrb[0].mxu0 %v5597
        %v5735 = vpop.f32.mrb[0].mxu0
        %v5736 = vadd.f32 0.0, %v5735
        %v5737 = vpop.f32.mrb[0].mxu0
        %v5738 = vpop.f32.mrb[0].mxu0
        %v5739 = vadd.f32 0.0, %v5738
        %v5740 = vpop.f32.mrb[0].mxu0
        %5741 = vmatprep.mubr.bf16.mxu0 0
        %5742 = vmatmul.mubr.bf16.gmra.mrb[0].mxu0 %v5600
        %v5743 = vpop.f32.mrb[0].mxu0
        %v5744 = vadd.f32 0.0, %v5743
        %v5745 = vpop.f32.mrb[0].mxu0
        %v5746 = vpop.f32.mrb[0].mxu0
        %v5747 = vadd.f32 0.0, %v5746
        %v5748 = vpop.f32.mrb[0].mxu0
        %5749 = vmatprep.mubr.bf16.mxu0 0
        %5750 = vmatmul.mubr.bf16.gmra.mrb[0].mxu0 %v5603
        %v5751 = vpop.f32.mrb[0].mxu0
        %v5752 = vadd.f32 0.0, %v5751
        %v5753 = vpop.f32.mrb[0].mxu0
        %v5754 = vpop.f32.mrb[0].mxu0
        %v5755 = vadd.f32 0.0, %v5754
        %v5756 = vpop.f32.mrb[0].mxu0
        %5757 = vmatprep.mubr.bf16.mxu0 0
        %5758 = vmatmul.mubr.bf16.gmra.mrb[0].mxu0 %v5606
        %v5759 = vpop.f32.mrb[0].mxu0
        %v5760 = vadd.f32 0.0, %v5759
        %v5761 = vpop.f32.mrb[0].mxu0
        %v5762 = vpop.f32.mrb[0].mxu0
        %v5763 = vadd.f32 0.0, %v5762
        %v5764 = vpop.f32.mrb[0].mxu0
        %5765 = vmatprep.mubr.bf16.mxu0 0
        %5766 = vmatmul.mubr.bf16.gmra.mrb[0].mxu0 %v5609
        %v5767 = vpop.f32.mrb[0].mxu0
        %v5768 = vadd.f32 0.0, %v5767
        %v5769 = vpop.f32.mrb[0].mxu0
        %v5770 = vpop.f32.mrb[0].mxu0
        %v5771 = vadd.f32 0.0, %v5770
        %v5772 = vpop.f32.mrb[0].mxu0
        %5773 = vmatprep.mubr.bf16.mxu0 0
        %5774 = vmatmul.mubr.bf16.gmra.mrb[0].mxu0 %v5612
        %v5775 = vpop.f32.mrb[0].mxu0
        %v5776 = vadd.f32 0.0, %v5775
        %v5777 = vpop.f32.mrb[0].mxu0
        %v5778 = vpop.f32.mrb[0].mxu0
        %v5779 = vadd.f32 0.0, %v5778
        %v5780 = vpop.f32.mrb[0].mxu0
        %5781 = vmatprep.mubr.bf16.mxu0 0
        %5782 = vmatmul.mubr.bf16.gmra.mrb[0].mxu0 %v5615
        %v5783 = vpop.f32.mrb[0].mxu0
        %v5784 = vadd.f32 0.0, %v5783
        %v5785 = vpop.f32.mrb[0].mxu0
        %v5786 = vpop.f32.mrb[0].mxu0
        %v5787 = vadd.f32 0.0, %v5786
        %v5788 = vpop.f32.mrb[0].mxu0
        %5789 = vmatprep.mubr.bf16.mxu0 0
        %5790 = vmatmul.mubr.bf16.gmra.mrb[0].mxu0 %v5618
        %v5791 = vpop.f32.mrb[0].mxu0
        %v5792 = vadd.f32 0.0, %v5791
        %v5793 = vpop.f32.mrb[0].mxu0
        %v5794 = vpop.f32.mrb[0].mxu0
        %v5795 = vadd.f32 0.0, %v5794
        %v5796 = vpop.f32.mrb[0].mxu0
        %5797 = vmatprep.mubr.bf16.mxu0 0
        %5798 = vmatmul.mubr.bf16.gmra.mrb[0].mxu0 %v5621
        %v5799 = vpop.f32.mrb[0].mxu0
        %v5800 = vadd.f32 0.0, %v5799
        %v5801 = vpop.f32.mrb[0].mxu0
        %v5802 = vpop.f32.mrb[0].mxu0
        %v5803 = vadd.f32 0.0, %v5802
        %v5804 = vpop.f32.mrb[0].mxu0
        %5805 = vmatprep.mubr.bf16.mxu0 0
        %5806 = vmatmul.mubr.bf16.gmra.mrb[0].mxu0 %v5624
        %v5807 = vpop.f32.mrb[0].mxu0
        %v5808 = vadd.f32 0.0, %v5807
        %v5809 = vpop.f32.mrb[0].mxu0
        %v5810 = vpop.f32.mrb[0].mxu0
        %v5811 = vadd.f32 0.0, %v5810
        %v5812 = vpop.f32.mrb[0].mxu0
        %5813 = vmatprep.mubr.bf16.mxu0 0
        %5814 = vmatmul.mubr.bf16.gmra.mrb[0].mxu0 %v5627
        %v5815 = vpop.f32.mrb[0].mxu0
        %v5816 = vadd.f32 0.0, %v5815
        %v5817 = vpop.f32.mrb[0].mxu0
        %v5818 = vpop.f32.mrb[0].mxu0
        %v5819 = vadd.f32 0.0, %v5818
        %v5820 = vpop.f32.mrb[0].mxu0
        %5821 = vmatprep.mubr.bf16.mxu0 0
        %5822 = vmatmul.mubr.bf16.gmra.mrb[0].mxu0 %v5630
        %v5823 = vpop.f32.mrb[0].mxu0
        %v5824 = vadd.f32 0.0, %v5823
        %v5825 = vpop.f32.mrb[0].mxu0
        %v5826 = vpop.f32.mrb[0].mxu0
        %v5827 = vadd.f32 0.0, %v5826
        %v5828 = vpop.f32.mrb[0].mxu0
        %5829 = vmatprep.mubr.bf16.mxu0 0
        %5830 = vmatmul.mubr.bf16.gmra.mrb[0].mxu0 %v5633
        %v5831 = vpop.f32.mrb[0].mxu0
        %v5832 = vadd.f32 0.0, %v5831
        %v5833 = vpop.f32.mrb[0].mxu0
        %v5834 = vpop.f32.mrb[0].mxu0
        %v5835 = vadd.f32 0.0, %v5834
        %v5836 = vpop.f32.mrb[0].mxu0
        %5837 = vmatprep.mubr.bf16.mxu0 0
        %5838 = vmatmul.mubr.bf16.gmra.mrb[0].mxu0 %v5636
        %v5839 = vpop.f32.mrb[0].mxu0
        %v5840 = vadd.f32 0.0, %v5839
        %v5841 = vpop.f32.mrb[0].mxu0
        %v5842 = vpop.f32.mrb[0].mxu0
        %v5843 = vadd.f32 0.0, %v5842
        %v5844 = vpop.f32.mrb[0].mxu0
        %5845 = vmatprep.mubr.bf16.mxu0 0
        %5846 = vmatmul.mubr.bf16.gmra.mrb[0].mxu0 %v5639
        %v5847 = vpop.f32.mrb[0].mxu0
        %v5848 = vadd.f32 0.0, %v5847
        %v5849 = vpop.f32.mrb[0].mxu0
        %v5850 = vpop.f32.mrb[0].mxu0
        %v5851 = vadd.f32 0.0, %v5850
        %v5852 = vpop.f32.mrb[0].mxu0
        %5853 = vmatprep.mubr.bf16.mxu0 0
        %5854 = vmatmul.mubr.bf16.gmra.mrb[0].mxu0 %v5642
        %v5855 = vpop.f32.mrb[0].mxu0
        %v5856 = vadd.f32 0.0, %v5855
        %v5857 = vpop.f32.mrb[0].mxu0
        %v5858 = vpop.f32.mrb[0].mxu0
        %v5859 = vadd.f32 0.0, %v5858
        %v5860 = vpop.f32.mrb[0].mxu0
        %5861 = vmatprep.mubr.bf16.mxu0 0
        %5862 = vmatmul.mubr.bf16.gmra.mrb[0].mxu0 %v5645
        %v5863 = vpop.f32.mrb[0].mxu0
        %v5864 = vadd.f32 0.0, %v5863
        %v5865 = vpop.f32.mrb[0].mxu0
        %v5866 = vpop.f32.mrb[0].mxu0
        %v5867 = vadd.f32 0.0, %v5866
        %v5868 = vpop.f32.mrb[0].mxu0
        %5869 = vmatprep.mubr.bf16.mxu0 0
        %5870 = vmatmul.mubr.bf16.gmra.mrb[0].mxu0 %v5648
        %v5871 = vpop.f32.mrb[0].mxu0
        %v5872 = vadd.f32 0.0, %v5871
        %v5873 = vpop.f32.mrb[0].mxu0
        %v5874 = vpop.f32.mrb[0].mxu0
        %v5875 = vadd.f32 0.0, %v5874
        %v5876 = vpop.f32.mrb[0].mxu0
        %5877 = vdwg.mxu0
        %v5878 = vld [vmem:[#allocation3] sm:$0xff]
        %v5879 = vld [vmem:[#allocation3 + $0x8] sm:$0xff]
        %v5880 = vld [vmem:[#allocation3 + $0x10] sm:$0xff]
        %v5881 = vld [vmem:[#allocation3 + $0x18] sm:$0xff]
        %v5882 = vld [vmem:[#allocation3 + $0x20] sm:$0xff]
        %v5883 = vld [vmem:[#allocation3 + $0x28] sm:$0xff]
        %v5884 = vld [vmem:[#allocation3 + $0x30] sm:$0xff]
        %v5885 = vld [vmem:[#allocation3 + $0x38] sm:$0xff]
        %v5886 = vld [vmem:[#allocation3 + $0x40] sm:$0xff]
        %v5887 = vld [vmem:[#allocation3 + $0x48] sm:$0xff]
        %v5888 = vld [vmem:[#allocation3 + $0x50] sm:$0xff]
        %v5889 = vld [vmem:[#allocation3 + $0x58] sm:$0xff]
        %v5890 = vld [vmem:[#allocation3 + $0x60] sm:$0xff]
        %v5891 = vld [vmem:[#allocation3 + $0x68] sm:$0xff]
        %v5892 = vld [vmem:[#allocation3 + $0x70] sm:$0xff]
        %v5893 = vld [vmem:[#allocation3 + $0x78] sm:$0xff]
        %v5894 = vld [vmem:[#allocation3 + $0x80] sm:$0xff]
        %v5895 = vld [vmem:[#allocation3 + $0x88] sm:$0xff]
        %v5896 = vld [vmem:[#allocation3 + $0x90] sm:$0xff]
        %v5897 = vld [vmem:[#allocation3 + $0x98] sm:$0xff]
        %v5898 = vld [vmem:[#allocation3 + $0xa0] sm:$0xff]
        %v5899 = vld [vmem:[#allocation3 + $0xa8] sm:$0xff]
        %v5900 = vld [vmem:[#allocation3 + $0xb0] sm:$0xff]
        %v5901 = vld [vmem:[#allocation3 + $0xb8] sm:$0xff]
        %v5902 = vld [vmem:[#allocation3 + $0xc0] sm:$0xff]
        %v5903 = vld [vmem:[#allocation3 + $0xc8] sm:$0xff]
        %v5904 = vld [vmem:[#allocation3 + $0xd0] sm:$0xff]
        %v5905 = vld [vmem:[#allocation3 + $0xd8] sm:$0xff]
        %v5906 = vld [vmem:[#allocation3 + $0xe0] sm:$0xff]
        %v5907 = vld [vmem:[#allocation3 + $0xe8] sm:$0xff]
        %v5908 = vld [vmem:[#allocation3 + $0xf0] sm:$0xff]
        %v5909 = vld [vmem:[#allocation3 + $0xf8] sm:$0xff]
        %v5910 = vld [vmem:[#allocation3 + $0x100] sm:$0xff]
        %v5911 = vld [vmem:[#allocation3 + $0x108] sm:$0xff]
        %v5912 = vld [vmem:[#allocation3 + $0x110] sm:$0xff]
        %v5913 = vld [vmem:[#allocation3 + $0x118] sm:$0xff]
        %v5914 = vld [vmem:[#allocation3 + $0x120] sm:$0xff]
        %v5915 = vld [vmem:[#allocation3 + $0x128] sm:$0xff]
        %v5916 = vld [vmem:[#allocation3 + $0x130] sm:$0xff]
        %v5917 = vld [vmem:[#allocation3 + $0x138] sm:$0xff]
        %v5918 = vld [vmem:[#allocation3 + $0x140] sm:$0xff]
        %v5919 = vld [vmem:[#allocation3 + $0x148] sm:$0xff]
        %v5920 = vld [vmem:[#allocation3 + $0x150] sm:$0xff]
        %v5921 = vld [vmem:[#allocation3 + $0x158] sm:$0xff]
        %v5922 = vld [vmem:[#allocation3 + $0x160] sm:$0xff]
        %v5923 = vld [vmem:[#allocation3 + $0x168] sm:$0xff]
        %v5924 = vld [vmem:[#allocation3 + $0x170] sm:$0xff]
        %v5925 = vld [vmem:[#allocation3 + $0x178] sm:$0xff]
        %v5926 = vadd.f32 %v5878, %v5688
        %v5927 = vadd.f32 %v5879, %v5691
        %v5928 = vadd.f32 %v5880, %v5696
        %v5929 = vadd.f32 %v5881, %v5699
        %v5930 = vadd.f32 %v5882, %v5704
        %v5931 = vadd.f32 %v5883, %v5707
        %v5932 = vadd.f32 %v5884, %v5712
        %v5933 = vadd.f32 %v5885, %v5715
        %v5934 = vadd.f32 %v5886, %v5720
        %v5935 = vadd.f32 %v5887, %v5723
        %v5936 = vadd.f32 %v5888, %v5728
        %v5937 = vadd.f32 %v5889, %v5731
        %v5938 = vadd.f32 %v5890, %v5736
        %v5939 = vadd.f32 %v5891, %v5739
        %v5940 = vadd.f32 %v5892, %v5744
        %v5941 = vadd.f32 %v5893, %v5747
        %v5942 = vadd.f32 %v5894, %v5752
        %v5943 = vadd.f32 %v5895, %v5755
        %v5944 = vadd.f32 %v5896, %v5760
        %v5945 = vadd.f32 %v5897, %v5763
        %v5946 = vadd.f32 %v5898, %v5768
        %v5947 = vadd.f32 %v5899, %v5771
        %v5948 = vadd.f32 %v5900, %v5776
        %v5949 = vadd.f32 %v5901, %v5779
        %v5950 = vadd.f32 %v5902, %v5784
        %v5951 = vadd.f32 %v5903, %v5787
        %v5952 = vadd.f32 %v5904, %v5792
        %v5953 = vadd.f32 %v5905, %v5795
        %v5954 = vadd.f32 %v5906, %v5800
        %v5955 = vadd.f32 %v5907, %v5803
        %v5956 = vadd.f32 %v5908, %v5808
        %v5957 = vadd.f32 %v5909, %v5811
        %v5958 = vadd.f32 %v5910, %v5816
        %v5959 = vadd.f32 %v5911, %v5819
        %v5960 = vadd.f32 %v5912, %v5824
        %v5961 = vadd.f32 %v5913, %v5827
        %v5962 = vadd.f32 %v5914, %v5832
        %v5963 = vadd.f32 %v5915, %v5835
        %v5964 = vadd.f32 %v5916, %v5840
        %v5965 = vadd.f32 %v5917, %v5843
        %v5966 = vadd.f32 %v5918, %v5848
        %v5967 = vadd.f32 %v5919, %v5851
        %v5968 = vadd.f32 %v5920, %v5856
        %v5969 = vadd.f32 %v5921, %v5859
        %v5970 = vadd.f32 %v5922, %v5864
        %v5971 = vadd.f32 %v5923, %v5867
        %v5972 = vadd.f32 %v5924, %v5872
        %v5973 = vadd.f32 %v5925, %v5875
        %5974 = vst [vmem:[#allocation3] sm:$0xff] %v5926
        %5975 = vst [vmem:[#allocation3 + $0x8] sm:$0xff] %v5927
        %5976 = vst [vmem:[#allocation3 + $0x10] sm:$0xff] %v5928
        %5977 = vst [vmem:[#allocation3 + $0x18] sm:$0xff] %v5929
        %5978 = vst [vmem:[#allocation3 + $0x20] sm:$0xff] %v5930
        %5979 = vst [vmem:[#allocation3 + $0x28] sm:$0xff] %v5931
        %5980 = vst [vmem:[#allocation3 + $0x30] sm:$0xff] %v5932
        %5981 = vst [vmem:[#allocation3 + $0x38] sm:$0xff] %v5933
        %5982 = vst [vmem:[#allocation3 + $0x40] sm:$0xff] %v5934
        %5983 = vst [vmem:[#allocation3 + $0x48] sm:$0xff] %v5935
        %5984 = vst [vmem:[#allocation3 + $0x50] sm:$0xff] %v5936
        %5985 = vst [vmem:[#allocation3 + $0x58] sm:$0xff] %v5937
        %5986 = vst [vmem:[#allocation3 + $0x60] sm:$0xff] %v5938
        %5987 = vst [vmem:[#allocation3 + $0x68] sm:$0xff] %v5939
        %5988 = vst [vmem:[#allocation3 + $0x70] sm:$0xff] %v5940
        %5989 = vst [vmem:[#allocation3 + $0x78] sm:$0xff] %v5941
        %5990 = vst [vmem:[#allocation3 + $0x80] sm:$0xff] %v5942
        %5991 = vst [vmem:[#allocation3 + $0x88] sm:$0xff] %v5943
        %5992 = vst [vmem:[#allocation3 + $0x90] sm:$0xff] %v5944
        %5993 = vst [vmem:[#allocation3 + $0x98] sm:$0xff] %v5945
        %5994 = vst [vmem:[#allocation3 + $0xa0] sm:$0xff] %v5946
        %5995 = vst [vmem:[#allocation3 + $0xa8] sm:$0xff] %v5947
        %5996 = vst [vmem:[#allocation3 + $0xb0] sm:$0xff] %v5948
        %5997 = vst [vmem:[#allocation3 + $0xb8] sm:$0xff] %v5949
        %5998 = vst [vmem:[#allocation3 + $0xc0] sm:$0xff] %v5950
        %5999 = vst [vmem:[#allocation3 + $0xc8] sm:$0xff] %v5951
        %6000 = vst [vmem:[#allocation3 + $0xd0] sm:$0xff] %v5952
        %6001 = vst [vmem:[#allocation3 + $0xd8] sm:$0xff] %v5953
        %6002 = vst [vmem:[#allocation3 + $0xe0] sm:$0xff] %v5954
        %6003 = vst [vmem:[#allocation3 + $0xe8] sm:$0xff] %v5955
        %6004 = vst [vmem:[#allocation3 + $0xf0] sm:$0xff] %v5956
        %6005 = vst [vmem:[#allocation3 + $0xf8] sm:$0xff] %v5957
        %6006 = vst [vmem:[#allocation3 + $0x100] sm:$0xff] %v5958
        %6007 = vst [vmem:[#allocation3 + $0x108] sm:$0xff] %v5959
        %6008 = vst [vmem:[#allocation3 + $0x110] sm:$0xff] %v5960
        %6009 = vst [vmem:[#allocation3 + $0x118] sm:$0xff] %v5961
        %6010 = vst [vmem:[#allocation3 + $0x120] sm:$0xff] %v5962
        %6011 = vst [vmem:[#allocation3 + $0x128] sm:$0xff] %v5963
        %6012 = vst [vmem:[#allocation3 + $0x130] sm:$0xff] %v5964
        %6013 = vst [vmem:[#allocation3 + $0x138] sm:$0xff] %v5965
        %6014 = vst [vmem:[#allocation3 + $0x140] sm:$0xff] %v5966
        %6015 = vst [vmem:[#allocation3 + $0x148] sm:$0xff] %v5967
        %6016 = vst [vmem:[#allocation3 + $0x150] sm:$0xff] %v5968
        %6017 = vst [vmem:[#allocation3 + $0x158] sm:$0xff] %v5969
        %6018 = vst [vmem:[#allocation3 + $0x160] sm:$0xff] %v5970
        %6019 = vst [vmem:[#allocation3 + $0x168] sm:$0xff] %v5971
        %6020 = vst [vmem:[#allocation3 + $0x170] sm:$0xff] %v5972
        %6021 = vst [vmem:[#allocation3 + $0x178] sm:$0xff] %v5973
        %v6022 = vld [vmem:[#allocation3] sm:$0xff]
        %v6023 = vld [vmem:[#allocation3 + $0x8] sm:$0xff]
        %v6024 = vld [vmem:[#allocation3 + $0x18] sm:$0xff]
        %v6025 = vld [vmem:[#allocation3 + $0x20] sm:$0xff]
        %v6026 = vld [vmem:[#allocation3 + $0x30] sm:$0xff]
        %v6027 = vld [vmem:[#allocation3 + $0x38] sm:$0xff]
        %v6028 = vld [vmem:[#allocation3 + $0x48] sm:$0xff]
        %v6029 = vld [vmem:[#allocation3 + $0x50] sm:$0xff]
        %v6030 = vld [vmem:[#allocation3 + $0x60] sm:$0xff]
        %v6031 = vld [vmem:[#allocation3 + $0x68] sm:$0xff]
        %v6032 = vld [vmem:[#allocation3 + $0x78] sm:$0xff]
        %v6033 = vld [vmem:[#allocation3 + $0x80] sm:$0xff]
        %v6034 = vld [vmem:[#allocation3 + $0x90] sm:$0xff]
        %v6035 = vld [vmem:[#allocation3 + $0x98] sm:$0xff]
        %v6036 = vld [vmem:[#allocation3 + $0xa8] sm:$0xff]
        %v6037 = vld [vmem:[#allocation3 + $0xb0] sm:$0xff]
        %v6038 = vld [vmem:[#allocation3 + $0xc0] sm:$0xff]
        %v6039 = vld [vmem:[#allocation3 + $0xc8] sm:$0xff]
        %v6040 = vld [vmem:[#allocation3 + $0xd8] sm:$0xff]
        %v6041 = vld [vmem:[#allocation3 + $0xe0] sm:$0xff]
        %v6042 = vld [vmem:[#allocation3 + $0xf0] sm:$0xff]
        %v6043 = vld [vmem:[#allocation3 + $0xf8] sm:$0xff]
        %v6044 = vld [vmem:[#allocation3 + $0x108] sm:$0xff]
        %v6045 = vld [vmem:[#allocation3 + $0x110] sm:$0xff]
        %v6046 = vld [vmem:[#allocation3 + $0x120] sm:$0xff]
        %v6047 = vld [vmem:[#allocation3 + $0x128] sm:$0xff]
        %v6048 = vld [vmem:[#allocation3 + $0x138] sm:$0xff]
        %v6049 = vld [vmem:[#allocation3 + $0x140] sm:$0xff]
        %v6050 = vld [vmem:[#allocation3 + $0x150] sm:$0xff]
        %v6051 = vld [vmem:[#allocation3 + $0x158] sm:$0xff]
        %v6052 = vld [vmem:[#allocation3 + $0x168] sm:$0xff]
        %v6053 = vld [vmem:[#allocation3 + $0x170] sm:$0xff]
        %v6054 = vld [vmem:[%s213] sm:$0x1]
        %v6056 = vlaneseq
        %v6057 = vshrl.u32 %v6056, 7
        %v6058 = vsub.s32 0, %v6057
        %v6059 = vrot.slane %v6054, %v6058
        %v6061 = vadd.f32 %v6022, %v6059
        %v6062 = vadd.f32 %v6023, %v6059
        %v6063 = vadd.f32 %v6024, %v6059
        %v6064 = vadd.f32 %v6025, %v6059
        %v6065 = vadd.f32 %v6026, %v6059
        %v6066 = vadd.f32 %v6027, %v6059
        %v6067 = vadd.f32 %v6028, %v6059
        %v6068 = vadd.f32 %v6029, %v6059
        %v6069 = vadd.f32 %v6030, %v6059
        %v6070 = vadd.f32 %v6031, %v6059
        %v6071 = vadd.f32 %v6032, %v6059
        %v6072 = vadd.f32 %v6033, %v6059
        %v6073 = vadd.f32 %v6034, %v6059
        %v6074 = vadd.f32 %v6035, %v6059
        %v6075 = vadd.f32 %v6036, %v6059
        %v6076 = vadd.f32 %v6037, %v6059
        %v6077 = vadd.f32 %v6038, %v6059
        %v6078 = vadd.f32 %v6039, %v6059
        %v6079 = vadd.f32 %v6040, %v6059
        %v6080 = vadd.f32 %v6041, %v6059
        %v6081 = vadd.f32 %v6042, %v6059
        %v6082 = vadd.f32 %v6043, %v6059
        %v6083 = vadd.f32 %v6044, %v6059
        %v6084 = vadd.f32 %v6045, %v6059
        %v6085 = vadd.f32 %v6046, %v6059
        %v6086 = vadd.f32 %v6047, %v6059
        %v6087 = vadd.f32 %v6048, %v6059
        %v6088 = vadd.f32 %v6049, %v6059
        %v6089 = vadd.f32 %v6050, %v6059
        %v6090 = vadd.f32 %v6051, %v6059
        %v6091 = vadd.f32 %v6052, %v6059
        %v6092 = vadd.f32 %v6053, %v6059
        %v6093 = vmax.f32 %v6061, 0.0
        %v6094 = vmax.f32 %v6062, 0.0
        %v6095 = vmax.f32 %v6063, 0.0
        %v6096 = vmax.f32 %v6064, 0.0
        %v6097 = vmax.f32 %v6065, 0.0
        %v6098 = vmax.f32 %v6066, 0.0
        %v6099 = vmax.f32 %v6067, 0.0
        %v6100 = vmax.f32 %v6068, 0.0
        %v6101 = vmax.f32 %v6069, 0.0
        %v6102 = vmax.f32 %v6070, 0.0
        %v6103 = vmax.f32 %v6071, 0.0
        %v6104 = vmax.f32 %v6072, 0.0
        %v6105 = vmax.f32 %v6073, 0.0
        %v6106 = vmax.f32 %v6074, 0.0
        %v6107 = vmax.f32 %v6075, 0.0
        %v6108 = vmax.f32 %v6076, 0.0
        %v6109 = vmax.f32 %v6077, 0.0
        %v6110 = vmax.f32 %v6078, 0.0
        %v6111 = vmax.f32 %v6079, 0.0
        %v6112 = vmax.f32 %v6080, 0.0
        %v6113 = vmax.f32 %v6081, 0.0
        %v6114 = vmax.f32 %v6082, 0.0
        %v6115 = vmax.f32 %v6083, 0.0
        %v6116 = vmax.f32 %v6084, 0.0
        %v6117 = vmax.f32 %v6085, 0.0
        %v6118 = vmax.f32 %v6086, 0.0
        %v6119 = vmax.f32 %v6087, 0.0
        %v6120 = vmax.f32 %v6088, 0.0
        %v6121 = vmax.f32 %v6089, 0.0
        %v6122 = vmax.f32 %v6090, 0.0
        %v6123 = vmax.f32 %v6091, 0.0
        %v6124 = vmax.f32 %v6092, 0.0
        %v6125 = vpack.c.bf16 %v6094, %v6093
        %v6126 = vpack.c.bf16 %v6096, %v6095
        %v6127 = vpack.c.bf16 %v6098, %v6097
        %v6128 = vpack.c.bf16 %v6100, %v6099
        %v6129 = vpack.c.bf16 %v6102, %v6101
        %v6130 = vpack.c.bf16 %v6104, %v6103
        %v6131 = vpack.c.bf16 %v6106, %v6105
        %v6132 = vpack.c.bf16 %v6108, %v6107
        %v6133 = vpack.c.bf16 %v6110, %v6109
        %v6134 = vpack.c.bf16 %v6112, %v6111
        %v6135 = vpack.c.bf16 %v6114, %v6113
        %v6136 = vpack.c.bf16 %v6116, %v6115
        %v6137 = vpack.c.bf16 %v6118, %v6117
        %v6138 = vpack.c.bf16 %v6120, %v6119
        %v6139 = vpack.c.bf16 %v6122, %v6121
        %v6140 = vpack.c.bf16 %v6124, %v6123
        %v6157 = vunpack.c.l.b16 %v6125
        %v6158 = vunpack.c.h.b16 %v6125
        %v6159 = vunpack.c.l.b16 %v6126
        %v6160 = vunpack.c.h.b16 %v6126
        %v6161 = vunpack.c.l.b16 %v6127
        %v6162 = vunpack.c.h.b16 %v6127
        %v6163 = vunpack.c.l.b16 %v6128
        %v6164 = vunpack.c.h.b16 %v6128
        %v6165 = vunpack.c.l.b16 %v6129
        %v6166 = vunpack.c.h.b16 %v6129
        %v6167 = vunpack.c.l.b16 %v6130
        %v6168 = vunpack.c.h.b16 %v6130
        %v6169 = vunpack.c.l.b16 %v6131
        %v6170 = vunpack.c.h.b16 %v6131
        %v6171 = vunpack.c.l.b16 %v6132
        %v6172 = vunpack.c.h.b16 %v6132
        %v6173 = vunpack.c.l.b16 %v6133
        %v6174 = vunpack.c.h.b16 %v6133
        %v6175 = vunpack.c.l.b16 %v6134
        %v6176 = vunpack.c.h.b16 %v6134
        %v6177 = vunpack.c.l.b16 %v6135
        %v6178 = vunpack.c.h.b16 %v6135
        %v6179 = vunpack.c.l.b16 %v6136
        %v6180 = vunpack.c.h.b16 %v6136
        %v6181 = vunpack.c.l.b16 %v6137
        %v6182 = vunpack.c.h.b16 %v6137
        %v6183 = vunpack.c.l.b16 %v6138
        %v6184 = vunpack.c.h.b16 %v6138
        %v6185 = vunpack.c.l.b16 %v6139
        %v6186 = vunpack.c.h.b16 %v6139
        %v6187 = vunpack.c.l.b16 %v6140
        %v6188 = vunpack.c.h.b16 %v6140
        %v6189 = vpack.c.b16 %v6157, %v6157
        %v6190 = vpack.c.b16 %v6158, %v6158
        %v6191 = vpack.c.b16 %v6159, %v6159
        %v6192 = vpack.c.b16 %v6160, %v6160
        %v6193 = vpack.c.b16 %v6161, %v6161
        %v6194 = vpack.c.b16 %v6162, %v6162
        %v6195 = vpack.c.b16 %v6163, %v6163
        %v6196 = vpack.c.b16 %v6164, %v6164
        %v6197 = vpack.c.b16 %v6165, %v6165
        %v6198 = vpack.c.b16 %v6166, %v6166
        %v6199 = vpack.c.b16 %v6167, %v6167
        %v6200 = vpack.c.b16 %v6168, %v6168
        %v6201 = vpack.c.b16 %v6169, %v6169
        %v6202 = vpack.c.b16 %v6170, %v6170
        %v6203 = vpack.c.b16 %v6171, %v6171
        %v6204 = vpack.c.b16 %v6172, %v6172
        %v6205 = vpack.c.b16 %v6173, %v6173
        %v6206 = vpack.c.b16 %v6174, %v6174
        %v6207 = vpack.c.b16 %v6175, %v6175
        %v6208 = vpack.c.b16 %v6176, %v6176
        %v6209 = vpack.c.b16 %v6177, %v6177
        %v6210 = vpack.c.b16 %v6178, %v6178
        %v6211 = vpack.c.b16 %v6179, %v6179
        %v6212 = vpack.c.b16 %v6180, %v6180
        %v6213 = vpack.c.b16 %v6181, %v6181
        %v6214 = vpack.c.b16 %v6182, %v6182
        %v6215 = vpack.c.b16 %v6183, %v6183
        %v6216 = vpack.c.b16 %v6184, %v6184
        %v6217 = vpack.c.b16 %v6185, %v6185
        %v6218 = vpack.c.b16 %v6186, %v6186
        %v6219 = vpack.c.b16 %v6187, %v6187
        %v6220 = vpack.c.b16 %v6188, %v6188
        %6253 = vst [vmem:[%s201] sm:$0xf] %v6189
        %6254 = vst [vmem:[%s201 + $0x4] sm:$0xf] %v6190
        %6255 = vst [vmem:[%s201 + $0x8] sm:$0xf] %v6191
        %6256 = vst [vmem:[%s201 + $0xc] sm:$0xf] %v6192
        %6257 = vst [vmem:[%s201 + $0x10] sm:$0xf] %v6193
        %6258 = vst [vmem:[%s201 + $0x14] sm:$0xf] %v6194
        %6259 = vst [vmem:[%s201 + $0x18] sm:$0xf] %v6195
        %6260 = vst [vmem:[%s201 + $0x1c] sm:$0xf] %v6196
        %6261 = vst [vmem:[%s201 + $0x20] sm:$0xf] %v6197
        %6262 = vst [vmem:[%s201 + $0x24] sm:$0xf] %v6198
        %6263 = vst [vmem:[%s201 + $0x28] sm:$0xf] %v6199
        %6264 = vst [vmem:[%s201 + $0x2c] sm:$0xf] %v6200
        %6265 = vst [vmem:[%s201 + $0x30] sm:$0xf] %v6201
        %6266 = vst [vmem:[%s201 + $0x34] sm:$0xf] %v6202
        %6267 = vst [vmem:[%s201 + $0x38] sm:$0xf] %v6203
        %6268 = vst [vmem:[%s201 + $0x3c] sm:$0xf] %v6204
        %6269 = vst [vmem:[%s201 + $0x40] sm:$0xf] %v6205
        %6270 = vst [vmem:[%s201 + $0x44] sm:$0xf] %v6206
        %6271 = vst [vmem:[%s201 + $0x48] sm:$0xf] %v6207
        %6272 = vst [vmem:[%s201 + $0x4c] sm:$0xf] %v6208
        %6273 = vst [vmem:[%s201 + $0x50] sm:$0xf] %v6209
        %6274 = vst [vmem:[%s201 + $0x54] sm:$0xf] %v6210
        %6275 = vst [vmem:[%s201 + $0x58] sm:$0xf] %v6211
        %6276 = vst [vmem:[%s201 + $0x5c] sm:$0xf] %v6212
        %6277 = vst [vmem:[%s201 + $0x60] sm:$0xf] %v6213
        %6278 = vst [vmem:[%s201 + $0x64] sm:$0xf] %v6214
        %6279 = vst [vmem:[%s201 + $0x68] sm:$0xf] %v6215
        %6280 = vst [vmem:[%s201 + $0x6c] sm:$0xf] %v6216
        %6281 = vst [vmem:[%s201 + $0x70] sm:$0xf] %v6217
        %6282 = vst [vmem:[%s201 + $0x74] sm:$0xf] %v6218
        %6283 = vst [vmem:[%s201 + $0x78] sm:$0xf] %v6219
        %6284 = vst [vmem:[%s201 + $0x7c] sm:$0xf] %v6220
        %s6285 = sand.u32 %s117, 1
        %s6286 = scalar_lea.sflag [#allocation5], %s6285
        %s6287 = sand.u32 %s117, 1
        %s6288 = smul.addr %s6287, 128
        %s6289 = scalar_lea.vmem [#allocation4], %s6288
        // Predicated region
        $region37: #{tpu_custom_call.1} parent=31 // pred_check
          %p6290 = pneg %p127
        $region38: #{tpu_custom_call.1} parent=31 // pred_check_branch
          %6292 = sbr.rel (%p6290) target = $region40
        $region39: #{tpu_custom_call.1} parent=31 // pred_region
          %s6294 = ssub.s32 2048, 2048
          %6295 = vsyncadd %s6286, %s6294
          %s6296 = smul.addr %s21, 32
          %s6297 = sadd.s32 %s22, %s6296
          %s6298 = smul.addr %s6297, 64
          %s6299 = scalar_lea.hbm %s3, %s6298
          %s6300 = sshll.u32 %s6289, 4
          %s6301 = int_to_ptr.vmem [resolvable:$true] %s6300
          %6306 = dma.vmem_to_hbm [thread:$0]  %s6301, 2048, %s6299, %s6286, 64, 64, 4
        $region40: #{tpu_custom_call.1} parent=31 // pred_fallthru
          _
      $region32: #{tpu_custom_call.1} parent=5 // pred_fallthru
        _
      %p6307 = scmp.le.s32.totalorder 2, %s12
      // Predicated region
      $region41: #{tpu_custom_call.1} parent=5 // pred_check
        %p6308 = pneg %p6307
      $region42: #{tpu_custom_call.1} parent=5 // pred_check_branch
        %6310 = sbr.rel (%p6308) target = $region44
      $region43: #{tpu_custom_call.1} parent=5 // pred_region
        %s6311 = ssub.s32 %s12, 2
        // Predicated region
        $region45: #{tpu_custom_call.1} parent=43 // pred_check
          %p6312 = pneg %p133
        $region46: #{tpu_custom_call.1} parent=43 // pred_check_branch
          %6314 = sbr.rel (%p6312) target = $region48
        $region47: #{tpu_custom_call.1} parent=43 // pred_region
          %s6315 = sand.u32 %s118, 1
          %s6316 = scalar_lea.sflag [#allocation5], %s6315
          %s6317 = sand.u32 %s118, 1
          %s6318 = smul.addr %s6317, 128
          %s6319 = scalar_lea.vmem [#allocation4], %s6318
          %6320 = dma.done %s6316, 2048
        $region48: #{tpu_custom_call.1} parent=43 // pred_fallthru
          _
      $region44: #{tpu_custom_call.1} parent=5 // pred_fallthru
        _
    $region6: #{tpu_custom_call.1} parent=1 // loop_footer
      %s16 = sadd.s32 1, %s12
    $region7: #{tpu_custom_call.1} parent=1 // loop_footer_branch
      %11 = sbr.rel target = $region3
    $region8: #{tpu_custom_call.1} parent=1 // loop_exit
      _
    %6321 = vsyncpa [#allocation5], 1
    %s6322 = scalar_lea.sflag [#allocation5], 1
    %6323 = vsyncpa %s6322, 1

</llo_original>
